<compile_context>
chip_gen: v6e
topology: v6e:2x2x1
jax: 0.10.0
libtpu: 0.0.40
codegen_flags: <defaults>
</compile_context>

<pallas_src>
import functools

import jax
import jax.numpy as jnp
from jax import lax
from jax.experimental import pallas as pl
from jax.experimental.pallas import tpu as pltpu


# ----------------------------------------------------------------------------
# Small planning helpers
# ----------------------------------------------------------------------------
def _round_up(x, m):
    return ((x + m - 1) // m) * m


def _plan_m(M, target=256, quantum=16):
    """Padded M and row-tile tm.  Never falls back to a huge full-M block:
    pad M up to a multiple of `target` (or, for small M, of `quantum`)."""
    if M >= target:
        Mp = _round_up(M, target)
        return Mp, target
    Mp = _round_up(M, quantum)
    return Mp, Mp


def _pick_tile_n(N, preferred=512):
    """Largest lane tile <= preferred dividing N, preferring multiples of 256
    (v6e/v7x MXU column width), then 128."""
    for q in (256, 128):
        t = min(preferred, N)
        t = (t // q) * q
        while t >= q:
            if N % t == 0:
                return t
            t -= q
    return N


@functools.lru_cache(maxsize=None)
def _vmem_limit_bytes():
    """~half of physical VMEM: 32 MiB on v7x (64 MiB), 64 MiB on v5e/v6e."""
    try:
        cap = pltpu.get_tpu_info().vmem_capacity_bytes
    except Exception:
        cap = 64 * 1024 * 1024  # conservative fallback (v7x-sized)
    return int(min(max(cap // 2, 32 * 1024 * 1024), 64 * 1024 * 1024))


# ----------------------------------------------------------------------------
# Fused (LayerNorm?) -> matmul -> bias -> (QuickGELU?) -> (+residual?) kernel
#
# When LN is fused, the normalized x tile is cached in VMEM scratch under
# pl.when(j == 0) and re-used for every N-tile (j axis is "arbitrary").
# ----------------------------------------------------------------------------
def _fused_matmul_kernel(x_ref, *rest, apply_ln, activation, add_residual, ln_eps):
    idx = 0
    if apply_ln:
        g_ref, bln_ref = rest[0], rest[1]
        idx = 2
    w_ref, bias_ref = rest[idx], rest[idx + 1]
    idx += 2
    if add_residual:
        res_ref = rest[idx]
        idx += 1
    o_ref = rest[idx]
    idx += 1

    if apply_ln:
        xn_ref = rest[idx]                       # VMEM scratch (tm, K) bf16

        @pl.when(pl.program_id(1) == 0)          # LN once per M-tile
        def _():
            xf = x_ref[...].astype(jnp.float32)
            mean = jnp.mean(xf, axis=-1, keepdims=True)
            var = jnp.mean(jnp.square(xf - mean), axis=-1, keepdims=True)
            xn = (xf - mean) * lax.rsqrt(var + ln_eps)
            xn = xn * g_ref[...].astype(jnp.float32) + bln_ref[...].astype(jnp.float32)
            xn_ref[...] = xn.astype(xn_ref.dtype)

        x = xn_ref[...]                          # bf16 into the MXU
    else:
        x = x_ref[...]

    y = jnp.dot(x, w_ref[...], preferred_element_type=jnp.float32)
    y = y + bias_ref[...].astype(jnp.float32)
    if activation == "quick_gelu":
        # CLIP's QuickGELU: x * sigmoid(1.702 * x)   (EUP transcendental)
        y = y * jax.nn.sigmoid(1.702 * y)
    if add_residual:
        y = y + res_ref[...].astype(jnp.float32)
    o_ref[...] = y.astype(o_ref.dtype)


def fused_matmul(x, w, bias, *, gamma=None, beta=None, residual=None,
                 activation=None, out_dtype=jnp.bfloat16, ln_eps=1e-5):
    """out = [LN(x)] @ w + bias, optional QuickGELU, optional residual add.

    x: [M, K]   w: [K, N]   bias: [N]   residual: [M, N]
    Tiled over (M, N) with padded M; full-K blocks (LN needs the full row and
    K <= 4*width always fits VMEM).
    """
    M, K = x.shape
    K2, N = w.shape
    assert K == K2
    apply_ln = gamma is not None
    add_residual = residual is not None

    Mp, tm = _plan_m(M)
    tn = _pick_tile_n(N)

    if Mp != M:                                  # keep tiles small & pipelined
        x = jnp.pad(x, ((0, Mp - M), (0, 0)))
        if add_residual:
            residual = jnp.pad(residual, ((0, Mp - M), (0, 0)))

    in_specs = [pl.BlockSpec((tm, K), lambda i, j: (i, 0))]
    args = [x]
    if apply_ln:
        in_specs += [pl.BlockSpec((1, K), lambda i, j: (0, 0)),
                     pl.BlockSpec((1, K), lambda i, j: (0, 0))]
        args += [gamma.reshape(1, K), beta.reshape(1, K)]
    in_specs += [pl.BlockSpec((K, tn), lambda i, j: (0, j)),
                 pl.BlockSpec((1, tn), lambda i, j: (0, j))]
    args += [w, bias.reshape(1, N)]
    if add_residual:
        in_specs.append(pl.BlockSpec((tm, tn), lambda i, j: (i, j)))
        args.append(residual)

    scratch = []
    if apply_ln:
        scratch.append(pltpu.VMEM((tm, K), jnp.bfloat16))

    kern = functools.partial(_fused_matmul_kernel, apply_ln=apply_ln,
                             activation=activation, add_residual=add_residual,
                             ln_eps=ln_eps)

    # j (N) must be "arbitrary" when LN is cached under pl.when(j == 0).
    dims = ("parallel", "arbitrary") if apply_ln else ("parallel", "parallel")

    cost = pl.CostEstimate(
        flops=int(2 * Mp * K * N),
        transcendentals=int(Mp * N) if activation else 0,
        bytes_accessed=int(x.size * x.dtype.itemsize + w.size * w.dtype.itemsize
                           + Mp * N * jnp.dtype(out_dtype).itemsize))

    out = pl.pallas_call(
        kern,
        out_shape=jax.ShapeDtypeStruct((Mp, N), out_dtype),
        grid=(Mp // tm, N // tn),
        in_specs=in_specs,
        out_specs=pl.BlockSpec((tm, tn), lambda i, j: (i, j)),
        scratch_shapes=tuple(scratch),
        compiler_params=pltpu.CompilerParams(
            dimension_semantics=dims,
            vmem_limit_bytes=_vmem_limit_bytes()),
        cost_estimate=cost,
    )(*args)
    return out[:M] if Mp != M else out


# ----------------------------------------------------------------------------
# Fused (cls concat + positional embedding + ln_pre) kernel, grid over batch
# ----------------------------------------------------------------------------
def _embed_ln_pre_kernel(xp_ref, cls_ref, pos_ref, g_ref, b_ref, o_ref, *, eps):
    cls_row = cls_ref[0, :, :].astype(jnp.float32) + pos_ref[0, 0:1, :].astype(jnp.float32)
    patches = xp_ref[0, :, :].astype(jnp.float32) + pos_ref[0, 1:, :].astype(jnp.float32)
    x = jnp.concatenate([cls_row, patches], axis=0)          # [N, width] f32
    mean = jnp.mean(x, axis=-1, keepdims=True)
    var = jnp.mean(jnp.square(x - mean), axis=-1, keepdims=True)
    xn = (x - mean) * lax.rsqrt(var + eps)
    o_ref[0, :, :] = (xn * g_ref[...] + b_ref[...]).astype(o_ref.dtype)


def pallas_embed_ln_pre(x_patch, cls_tok, pos, gamma, beta, *, eps=1e-5,
                        out_dtype=jnp.bfloat16):
    B, Np, width = x_patch.shape
    N = Np + 1
    return pl.pallas_call(
        functools.partial(_embed_ln_pre_kernel, eps=eps),
        out_shape=jax.ShapeDtypeStruct((B, N, width), out_dtype),
        grid=(B,),
        in_specs=[pl.BlockSpec((1, Np, width), lambda b: (b, 0, 0)),
                  pl.BlockSpec((1, 1, width), lambda b: (0, 0, 0)),
                  pl.BlockSpec((1, N, width), lambda b: (0, 0, 0)),
                  pl.BlockSpec((1, width), lambda b: (0, 0)),
                  pl.BlockSpec((1, width), lambda b: (0, 0))],
        out_specs=pl.BlockSpec((1, N, width), lambda b: (b, 0, 0)),
        compiler_params=pltpu.CompilerParams(dimension_semantics=("parallel",)),
    )(x_patch, cls_tok.reshape(1, 1, width), pos.reshape(1, N, width),
      gamma.reshape(1, width), beta.reshape(1, width))


# ----------------------------------------------------------------------------
# Standalone LayerNorm (ln_post), tiled along padded M
# ----------------------------------------------------------------------------
def _layernorm_kernel(x_ref, g_ref, b_ref, o_ref, *, eps):
    x = x_ref[...].astype(jnp.float32)
    mean = jnp.mean(x, axis=-1, keepdims=True)
    var = jnp.mean(jnp.square(x - mean), axis=-1, keepdims=True)
    xn = (x - mean) * lax.rsqrt(var + eps)
    o_ref[...] = (xn * g_ref[...] + b_ref[...]).astype(o_ref.dtype)


def pallas_layernorm(x, gamma, beta, *, eps=1e-5, out_dtype=None):
    M, D = x.shape
    out_dtype = out_dtype or x.dtype
    Mp, tm = _plan_m(M)
    if Mp != M:
        x = jnp.pad(x, ((0, Mp - M), (0, 0)))
    out = pl.pallas_call(
        functools.partial(_layernorm_kernel, eps=eps),
        out_shape=jax.ShapeDtypeStruct((Mp, D), out_dtype),
        grid=(Mp // tm,),
        in_specs=[pl.BlockSpec((tm, D), lambda i: (i, 0)),
                  pl.BlockSpec((1, D), lambda i: (0, 0)),
                  pl.BlockSpec((1, D), lambda i: (0, 0))],
        out_specs=pl.BlockSpec((tm, D), lambda i: (i, 0)),
        compiler_params=pltpu.CompilerParams(dimension_semantics=("parallel",)),
    )(x, gamma.reshape(1, D), beta.reshape(1, D))
    return out[:M] if Mp != M else out


# ----------------------------------------------------------------------------
# Attention: one grid step per batch element, single fused-QKV input block,
# static unroll over heads, single lane-dense output store.
# ----------------------------------------------------------------------------
def _attention_kernel(qkv_ref, o_ref, *, heads, dh, width, scale):
    outs = []
    for h in range(heads):                                   # static unroll
        q = qkv_ref[0, :, h * dh:(h + 1) * dh]               # [N, dh] bf16
        k = qkv_ref[0, :, width + h * dh:width + (h + 1) * dh]
        v = qkv_ref[0, :, 2 * width + h * dh:2 * width + (h + 1) * dh]
        # Fold softmax scale into q (N*dh multiplies instead of N*N).
        qs = (q.astype(jnp.float32) * scale).astype(qkv_ref.dtype)
        # q @ k^T without an explicit transpose (contract the dh axes).
        s = lax.dot_general(qs, k, (((1,), (1,)), ((), ())),
                            preferred_element_type=jnp.float32)
        s = s - jnp.max(s, axis=-1, keepdims=True)
        p = jnp.exp(s)
        p = p * pl.reciprocal(jnp.sum(p, axis=-1, keepdims=True), approx=True)
        outs.append(jnp.dot(p.astype(v.dtype), v,
                            preferred_element_type=jnp.float32))
    # One lane-dense (N, width) store (width is a multiple of 128).
    o_ref[0, :, :] = jnp.concatenate(outs, axis=-1).astype(o_ref.dtype)


def pallas_attention(qkv, *, B, N, width, heads, out_dtype=jnp.bfloat16):
    """qkv: [B, N, 3*width] (columns = [q | k | v], heads contiguous).
    Returns [B, N, width] with the standard head-concatenated layout so the
    following output projection needs only a reshape, no transpose."""
    dh = width // heads
    assert width % 128 == 0, "width must be a multiple of 128 for lane-dense stores"
    scale = 1.0 / (dh ** 0.5)

    cost = pl.CostEstimate(
        flops=int(4 * B * heads * N * N * dh),
        transcendentals=int(B * heads * N * N),
        bytes_accessed=int(qkv.size * qkv.dtype.itemsize
                           + B * N * width * jnp.dtype(out_dtype).itemsize))

    return pl.pallas_call(
        functools.partial(_attention_kernel, heads=heads, dh=dh,
                          width=width, scale=scale),
        out_shape=jax.ShapeDtypeStruct((B, N, width), out_dtype),
        grid=(B,),
        in_specs=[pl.BlockSpec((1, N, 3 * width), lambda b: (b, 0, 0))],
        out_specs=pl.BlockSpec((1, N, width), lambda b: (b, 0, 0)),
        compiler_params=pltpu.CompilerParams(
            dimension_semantics=("parallel",),
            vmem_limit_bytes=_vmem_limit_bytes()),
        cost_estimate=cost,
    )(qkv)


# ----------------------------------------------------------------------------
# Parameters (weights in bf16, LN params / biases in f32, hoisted reshapes)
# ----------------------------------------------------------------------------
def init_params(key, *, in_ch, patch, width, layers, n_tokens):
    ks = jax.random.split(key, 4 + layers)
    std = 0.02
    P = in_ch * patch * patch
    wdt = jnp.bfloat16
    params = {
        # conv1 (stride == kernel, bias-free like CLIP) folded into a matmul
        # weight [C*kh*kw, width], pre-reshaped ONCE here, flattening (c,kh,kw).
        "conv_w_flat": (std * jax.random.normal(ks[0], (P, width), jnp.float32)).astype(wdt),
        "conv_b": jnp.zeros((width,), jnp.float32),
        "cls": (std * jax.random.normal(ks[1], (width,), jnp.float32)).astype(wdt),
        "pos": (std * jax.random.normal(ks[2], (n_tokens, width), jnp.float32)).astype(wdt),
        "ln_pre_g": jnp.ones((width,), jnp.float32),
        "ln_pre_b": jnp.zeros((width,), jnp.float32),
        "ln_post_g": jnp.ones((width,), jnp.float32),
        "ln_post_b": jnp.zeros((width,), jnp.float32),
        "blocks": [],
    }
    for l in range(layers):
        bk = jax.random.split(ks[4 + l], 4)
        params["blocks"].append({
            "ln1_g": jnp.ones((width,), jnp.float32),
            "ln1_b": jnp.zeros((width,), jnp.float32),
            "w_qkv": (std * jax.random.normal(bk[0], (width, 3 * width), jnp.float32)).astype(wdt),
            "b_qkv": jnp.zeros((3 * width,), jnp.float32),
            "w_out": (std * jax.random.normal(bk[1], (width, width), jnp.float32)).astype(wdt),
            "b_out": jnp.zeros((width,), jnp.float32),
            "ln2_g": jnp.ones((width,), jnp.float32),
            "ln2_b": jnp.zeros((width,), jnp.float32),
            "w_fc1": (std * jax.random.normal(bk[2], (width, 4 * width), jnp.float32)).astype(wdt),
            "b_fc1": jnp.zeros((4 * width,), jnp.float32),
            "w_fc2": (std * jax.random.normal(bk[3], (4 * width, width), jnp.float32)).astype(wdt),
            "b_fc2": jnp.zeros((width,), jnp.float32),
        })
    return params


def _extract_patches(img, patch):
    # img: [B, C, H, W] (NCHW) -> [B, gh*gw, C*patch*patch], flattened (c, kh, kw)
    B, C, H, W = img.shape
    gh, gw = H // patch, W // patch
    x = img.reshape(B, C, gh, patch, gw, patch)
    x = x.transpose(0, 2, 4, 1, 3, 5)
    return x.reshape(B, gh * gw, C * patch * patch), gh, gw


# ----------------------------------------------------------------------------
# Forward pass
# ----------------------------------------------------------------------------
def clip_featurizer_forward(params, img, include_cls, *, patch, width, heads):
    B = img.shape[0]
    patches, gh, gw = _extract_patches(img.astype(jnp.bfloat16), patch)   # [B, Np, P]
    Np, P = patches.shape[1], patches.shape[2]

    # --- conv1 as matmul (stride == kernel) ----------------------------------
    x = fused_matmul(patches.reshape(B * Np, P), params["conv_w_flat"],
                     params["conv_b"])                                    # bf16 [B*Np, width]
    x = x.reshape(B, Np, width)

    # --- cls concat + positional embedding + ln_pre fused in ONE kernel ------
    x = pallas_embed_ln_pre(x, params["cls"], params["pos"],
                            params["ln_pre_g"], params["ln_pre_b"])       # bf16 [B, N, width]
    N = Np + 1
    x_flat = x.reshape(B * N, width)

    # --- residual attention blocks (4 fused matmul calls + 1 attention call) --
    for blk in params["blocks"]:
        # ln1 + QKV projection fused (LN cached across N-tiles)
        qkv = fused_matmul(x_flat, blk["w_qkv"], blk["b_qkv"],
                           gamma=blk["ln1_g"], beta=blk["ln1_b"])         # [B*N, 3*width]
        # multi-head attention; one coarse grid step per batch element
        attn = pallas_attention(qkv.reshape(B, N, 3 * width),
                                B=B, N=N, width=width, heads=heads)       # [B, N, width]
        # output projection + residual add fused
        x_flat = fused_matmul(attn.reshape(B * N, width), blk["w_out"], blk["b_out"],
                              residual=x_flat)
        # ln2 + fc1 + QuickGELU fused
        h = fused_matmul(x_flat, blk["w_fc1"], blk["b_fc1"],
                         gamma=blk["ln2_g"], beta=blk["ln2_b"],
                         activation="quick_gelu")
        # fc2 + residual add fused
        x_flat = fused_matmul(h, blk["w_fc2"], blk["b_fc2"], residual=x_flat)

    # --- ln_post on all tokens (f32 output, as the reference casts to float32)
    x_out = pallas_layernorm(x_flat, params["ln_post_g"], params["ln_post_b"],
                             out_dtype=jnp.float32).reshape(B, N, width)

    # TODO(synk): CLIP's final `@ self.proj` (512-d image embedding) is only used
    #             by get_cls_token, not by the dense features returned here.

    cls_token = x_out[:, 0, :]                                            # [B, width] f32
    spatial = x_out[:, 1:, :].reshape(B, gh, gw, width).transpose(0, 3, 1, 2)
    spatial = spatial.astype(jnp.float32)                                 # [B, width, gh, gw]

    if include_cls:
        return [spatial, cls_token]
    return [spatial, None]


# ----------------------------------------------------------------------------
if __name__ == "__main__":
    # Small shapes consistent with the module: patch=16 on a 2x3x64x64 image
    # -> 4x4 grid of patches (+ cls), width=128 (2 heads of 64), 2 layers.
    B, C, H, W = 2, 3, 64, 64
    PATCH, WIDTH, HEADS, LAYERS = 16, 128, 2, 2
    GH, GW = H // PATCH, W // PATCH
    N_TOKENS = GH * GW + 1

    key = jax.random.PRNGKey(0)
    k_img, k_par = jax.random.split(key)
    img = jax.random.normal(k_img, (B, C, H, W), jnp.float32)
    params = init_params(k_par, in_ch=C, patch=PATCH, width=WIDTH,
                         layers=LAYERS, n_tokens=N_TOKENS)

    fwd = jax.jit(functools.partial(clip_featurizer_forward, include_cls=True,
                                    patch=PATCH, width=WIDTH, heads=HEADS))
    spatial, cls_tok = fwd(params, img)
    jax.block_until_ready(spatial)
    jax.block_until_ready(cls_tok)

    assert spatial.shape == (B, WIDTH, GH, GW) and spatial.dtype == jnp.float32
    assert cls_tok.shape == (B, WIDTH) and cls_tok.dtype == jnp.float32
    assert bool(jnp.all(jnp.isfinite(spatial))) and bool(jnp.all(jnp.isfinite(cls_tok)))
    print("KERNEL_OK")
</pallas_src>

<mosaic_0001>
module attributes {stable_mosaic.version = 11 : i64} {
  func.func @_fused_matmul_kernel(%arg0: i32, %arg1: i32, %arg2: memref<32x768xbf16, #tpu.memory_space<vmem>>, %arg3: memref<768x128xbf16, #tpu.memory_space<vmem>>, %arg4: memref<1x128xf32, #tpu.memory_space<vmem>>, %arg5: memref<32x128xbf16, #tpu.memory_space<vmem>>) attributes {dimension_semantics = [#tpu.dimension_semantics<parallel>, #tpu.dimension_semantics<parallel>], iteration_bounds = array<i64: 1, 1>, scalar_prefetch = 0 : i64, scratch_operands = 0 : i64, tpu.core_type = #tpu.core_type<tc>, window_params = [{transform_indices = @transform_0, window_bounds = array<i64: 32, 768>}, {transform_indices = @transform_1, window_bounds = array<i64: 768, 128>}, {transform_indices = @transform_2, window_bounds = array<i64: 1, 128>}, {transform_indices = @transform_3, window_bounds = array<i64: 32, 128>}]} {
    %c0 = arith.constant 0 : index
    %c0_0 = arith.constant 0 : index
    %0 = vector.load %arg2[%c0, %c0_0] : memref<32x768xbf16, #tpu.memory_space<vmem>>, vector<32x768xbf16>
    %c0_1 = arith.constant 0 : index
    %c0_2 = arith.constant 0 : index
    %1 = vector.load %arg3[%c0_1, %c0_2] : memref<768x128xbf16, #tpu.memory_space<vmem>>, vector<768x128xbf16>
    %cst = arith.constant dense<0.000000e+00> : vector<32x128xf32>
    %2 = tpu.matmul %0, %1, %cst {dimension_numbers = #tpu.dot_dimension_numbers<[1], [0], [0], [1], [0, 0, 1, 1], [], []>} : vector<32x768xbf16>, vector<768x128xbf16>, vector<32x128xf32> -> vector<32x128xf32>
    %c0_3 = arith.constant 0 : index
    %c0_4 = arith.constant 0 : index
    %3 = vector.load %arg4[%c0_3, %c0_4] : memref<1x128xf32, #tpu.memory_space<vmem>>, vector<1x128xf32>
    %4 = vector.broadcast %3 : vector<1x128xf32> to vector<32x128xf32>
    %5 = arith.addf %2, %4 : vector<32x128xf32>
    %6 = arith.truncf %5 : vector<32x128xf32> to vector<32x128xbf16>
    %c0_5 = arith.constant 0 : index
    %c0_6 = arith.constant 0 : index
    %7 = vector.load %arg5[%c0_5, %c0_6] : memref<32x128xbf16, #tpu.memory_space<vmem>>, vector<32x128xbf16>
    tpu.vector_store %arg5[%c0_5, %c0_6], %6 {strides = array<i32>} : memref<32x128xbf16, #tpu.memory_space<vmem>>, vector<32x128xbf16>,
    return
  }
  func.func @transform_0(%arg0: i32, %arg1: i32) -> (i32, i32) {
    %c0_i32 = arith.constant 0 : i32
    %c0_i32_0 = arith.constant 0 : i32
    return %arg0, %c0_i32 : i32, i32
  }
  func.func @transform_1(%arg0: i32, %arg1: i32) -> (i32, i32) {
    %c0_i32 = arith.constant 0 : i32
    %c0_i32_0 = arith.constant 0 : i32
    return %c0_i32, %arg1 : i32, i32
  }
  func.func @transform_2(%arg0: i32, %arg1: i32) -> (i32, i32) {
    %c0_i32 = arith.constant 0 : i32
    %c0_i32_0 = arith.constant 0 : i32
    return %c0_i32, %arg1 : i32, i32
  }
  func.func @transform_3(%arg0: i32, %arg1: i32) -> (i32, i32) {
    %c0_i32 = arith.constant 0 : i32
    return %arg0, %arg1 : i32, i32
  }
}

module attributes {stable_mosaic.version = 11 : i64} {
  func.func @_embed_ln_pre_kernel(%arg0: i32, %arg1: memref<1x16x128xbf16, #tpu.memory_space<vmem>>, %arg2: memref<1x1x128xbf16, #tpu.memory_space<vmem>>, %arg3: memref<1x17x128xbf16, #tpu.memory_space<vmem>>, %arg4: memref<1x128xf32, #tpu.memory_space<vmem>>, %arg5: memref<1x128xf32, #tpu.memory_space<vmem>>, %arg6: memref<1x17x128xbf16, #tpu.memory_space<vmem>>) attributes {dimension_semantics = [#tpu.dimension_semantics<parallel>], iteration_bounds = array<i64: 2>, scalar_prefetch = 0 : i64, scratch_operands = 0 : i64, tpu.core_type = #tpu.core_type<tc>, window_params = [{transform_indices = @transform_0, window_bounds = array<i64: 1, 16, 128>}, {pipeline_mode = #tpu.pipeline_mode<synchronous>, transform_indices = @transform_1, window_bounds = array<i64: 1, 1, 128>}, {pipeline_mode = #tpu.pipeline_mode<synchronous>, transform_indices = @transform_2, window_bounds = array<i64: 1, 17, 128>}, {pipeline_mode = #tpu.pipeline_mode<synchronous>, transform_indices = @transform_3, window_bounds = array<i64: 1, 128>}, {pipeline_mode = #tpu.pipeline_mode<synchronous>, transform_indices = @transform_4, window_bounds = array<i64: 1, 128>}, {transform_indices = @transform_5, window_bounds = array<i64: 1, 17, 128>}]} {
    %c0 = arith.constant 0 : index
    %c0_0 = arith.constant 0 : index
    %c0_1 = arith.constant 0 : index
    %0 = vector.load %arg2[%c0, %c0_0, %c0_1] : memref<1x1x128xbf16, #tpu.memory_space<vmem>>, vector<1x1x128xbf16>
    %1 = vector.shape_cast %0 : vector<1x1x128xbf16> to vector<1x128xbf16>
    %2 = arith.extf %1 : vector<1x128xbf16> to vector<1x128xf32>
    %c0_2 = arith.constant 0 : index
    %c0_3 = arith.constant 0 : index
    %c0_4 = arith.constant 0 : index
    %3 = vector.load %arg3[%c0_2, %c0_3, %c0_4] : memref<1x17x128xbf16, #tpu.memory_space<vmem>>, vector<1x1x128xbf16>
    %4 = vector.shape_cast %3 : vector<1x1x128xbf16> to vector<1x128xbf16>
    %5 = arith.extf %4 : vector<1x128xbf16> to vector<1x128xf32>
    %6 = arith.addf %2, %5 : vector<1x128xf32>
    %c0_5 = arith.constant 0 : index
    %c0_6 = arith.constant 0 : index
    %c0_7 = arith.constant 0 : index
    %7 = vector.load %arg1[%c0_5, %c0_6, %c0_7] : memref<1x16x128xbf16, #tpu.memory_space<vmem>>, vector<1x16x128xbf16>
    %8 = vector.shape_cast %7 : vector<1x16x128xbf16> to vector<16x128xbf16>
    %9 = arith.extf %8 : vector<16x128xbf16> to vector<16x128xf32>
    %c0_8 = arith.constant 0 : index
    %c1 = arith.constant 1 : index
    %c0_9 = arith.constant 0 : index
    %10 = vector.load %arg3[%c0_8, %c1, %c0_9] : memref<1x17x128xbf16, #tpu.memory_space<vmem>>, vector<1x16x128xbf16>
    %11 = vector.shape_cast %10 : vector<1x16x128xbf16> to vector<16x128xbf16>
    %12 = arith.extf %11 : vector<16x128xbf16> to vector<16x128xf32>
    %13 = arith.addf %9, %12 : vector<16x128xf32>
    %14 = tpu.concatenate %6, %13 in 0 : vector<1x128xf32>, vector<16x128xf32> -> vector<17x128xf32>
    %cst = arith.constant dense<0.000000e+00> : vector<17xf32>
    %15 = vector.multi_reduction <add>, %14, %cst [1] : vector<17x128xf32> to vector<17xf32>
    %16 = vector.shape_cast %15 : vector<17xf32> to vector<17x1xf32>
    %cst_10 = arith.constant 1.280000e+02 : f32
    %17 = vector.broadcast %cst_10 : f32 to vector<17x1xf32>
    %18 = arith.divf %16, %17 : vector<17x1xf32>
    %19 = vector.broadcast %18 : vector<17x1xf32> to vector<17x128xf32>
    %20 = arith.subf %14, %19 : vector<17x128xf32>
    %21 = arith.mulf %20, %20 : vector<17x128xf32>
    %cst_11 = arith.constant dense<0.000000e+00> : vector<17xf32>
    %22 = vector.multi_reduction <add>, %21, %cst_11 [1] : vector<17x128xf32> to vector<17xf32>
    %23 = vector.shape_cast %22 : vector<17xf32> to vector<17x1xf32>
    %cst_12 = arith.constant 1.280000e+02 : f32
    %24 = vector.broadcast %cst_12 : f32 to vector<17x1xf32>
    %25 = arith.divf %23, %24 : vector<17x1xf32>
    %26 = vector.broadcast %18 : vector<17x1xf32> to vector<17x128xf32>
    %27 = arith.subf %14, %26 : vector<17x128xf32>
    %cst_13 = arith.constant 9.99999974E-6 : f32
    %28 = vector.broadcast %cst_13 : f32 to vector<17x1xf32>
    %29 = arith.addf %25, %28 : vector<17x1xf32>
    %30 = math.rsqrt %29 : vector<17x1xf32>
    %31 = vector.broadcast %30 : vector<17x1xf32> to vector<17x128xf32>
    %32 = arith.mulf %27, %31 : vector<17x128xf32>
    %c0_14 = arith.constant 0 : index
    %c0_15 = arith.constant 0 : index
    %33 = vector.load %arg4[%c0_14, %c0_15] : memref<1x128xf32, #tpu.memory_space<vmem>>, vector<1x128xf32>
    %34 = vector.broadcast %33 : vector<1x128xf32> to vector<17x128xf32>
    %35 = arith.mulf %32, %34 : vector<17x128xf32>
    %c0_16 = arith.constant 0 : index
    %c0_17 = arith.constant 0 : index
    %36 = vector.load %arg5[%c0_16, %c0_17] : memref<1x128xf32, #tpu.memory_space<vmem>>, vector<1x128xf32>
    %37 = vector.broadcast %36 : vector<1x128xf32> to vector<17x128xf32>
    %38 = arith.addf %35, %37 : vector<17x128xf32>
    %39 = arith.truncf %38 : vector<17x128xf32> to vector<17x128xbf16>
    %c0_18 = arith.constant 0 : index
    %c0_19 = arith.constant 0 : index
    %c0_20 = arith.constant 0 : index
    %40 = vector.load %arg6[%c0_18, %c0_19, %c0_20] : memref<1x17x128xbf16, #tpu.memory_space<vmem>>, vector<1x17x128xbf16>
    %41 = vector.shape_cast %40 : vector<1x17x128xbf16> to vector<17x128xbf16>
    %42 = vector.shape_cast %39 : vector<17x128xbf16> to vector<1x17x128xbf16>
    tpu.vector_store %arg6[%c0_18, %c0_19, %c0_20], %42 {strides = array<i32>} : memref<1x17x128xbf16, #tpu.memory_space<vmem>>, vector<1x17x128xbf16>,
    return
  }
  func.func @transform_0(%arg0: i32) -> (i32, i32, i32) {
    %c0_i32 = arith.constant 0 : i32
    %c0_i32_0 = arith.constant 0 : i32
    %c0_i32_1 = arith.constant 0 : i32
    return %arg0, %c0_i32, %c0_i32_0 : i32, i32, i32
  }
  func.func @transform_1(%arg0: i32) -> (i32, i32, i32) {
    %c0_i32 = arith.constant 0 : i32
    %c0_i32_0 = arith.constant 0 : i32
    %c0_i32_1 = arith.constant 0 : i32
    %c0_i32_2 = arith.constant 0 : i32
    return %c0_i32, %c0_i32_0, %c0_i32_1 : i32, i32, i32
  }
  func.func @transform_2(%arg0: i32) -> (i32, i32, i32) {
    %c0_i32 = arith.constant 0 : i32
    %c0_i32_0 = arith.constant 0 : i32
    %c0_i32_1 = arith.constant 0 : i32
    %c0_i32_2 = arith.constant 0 : i32
    return %c0_i32, %c0_i32_0, %c0_i32_1 : i32, i32, i32
  }
  func.func @transform_3(%arg0: i32) -> (i32, i32) {
    %c0_i32 = arith.constant 0 : i32
    %c0_i32_0 = arith.constant 0 : i32
    %c0_i32_1 = arith.constant 0 : i32
    return %c0_i32, %c0_i32_0 : i32, i32
  }
  func.func @transform_4(%arg0: i32) -> (i32, i32) {
    %c0_i32 = arith.constant 0 : i32
    %c0_i32_0 = arith.constant 0 : i32
    %c0_i32_1 = arith.constant 0 : i32
    return %c0_i32, %c0_i32_0 : i32, i32
  }
  func.func @transform_5(%arg0: i32) -> (i32, i32, i32) {
    %c0_i32 = arith.constant 0 : i32
    %c0_i32_0 = arith.constant 0 : i32
    %c0_i32_1 = arith.constant 0 : i32
    return %arg0, %c0_i32, %c0_i32_0 : i32, i32, i32
  }
}

module attributes {stable_mosaic.version = 11 : i64} {
  func.func @_fused_matmul_kernel(%arg0: i32, %arg1: i32, %arg2: memref<48x128xbf16, #tpu.memory_space<vmem>>, %arg3: memref<1x128xf32, #tpu.memory_space<vmem>>, %arg4: memref<1x128xf32, #tpu.memory_space<vmem>>, %arg5: memref<128x384xbf16, #tpu.memory_space<vmem>>, %arg6: memref<1x384xf32, #tpu.memory_space<vmem>>, %arg7: memref<48x384xbf16, #tpu.memory_space<vmem>>, %arg8: memref<48x128xbf16, #tpu.memory_space<vmem>>) attributes {dimension_semantics = [#tpu.dimension_semantics<parallel>, #tpu.dimension_semantics<arbitrary>], iteration_bounds = array<i64: 1, 1>, scalar_prefetch = 0 : i64, scratch_operands = 1 : i64, tpu.core_type = #tpu.core_type<tc>, window_params = [{transform_indices = @transform_0, window_bounds = array<i64: 48, 128>}, {pipeline_mode = #tpu.pipeline_mode<synchronous>, transform_indices = @transform_1, window_bounds = array<i64: 1, 128>}, {pipeline_mode = #tpu.pipeline_mode<synchronous>, transform_indices = @transform_2, window_bounds = array<i64: 1, 128>}, {transform_indices = @transform_3, window_bounds = array<i64: 128, 384>}, {transform_indices = @transform_4, window_bounds = array<i64: 1, 384>}, {transform_indices = @transform_5, window_bounds = array<i64: 48, 384>}]} {
    %c0_i32 = arith.constant 0 : i32
    %0 = arith.cmpi eq, %arg1, %c0_i32 : i32
    %1 = arith.extui %0 : i1 to i32
    %c0_i32_0 = arith.constant 0 : i32
    %2 = arith.cmpi ne, %1, %c0_i32_0 : i32
    scf.if %2 {
      %c0_8 = arith.constant 0 : index
      %c0_9 = arith.constant 0 : index
      %11 = vector.load %arg2[%c0_8, %c0_9] : memref<48x128xbf16, #tpu.memory_space<vmem>>, vector<48x128xbf16>
      %12 = arith.extf %11 : vector<48x128xbf16> to vector<48x128xf32>
      %cst_10 = arith.constant dense<0.000000e+00> : vector<48xf32>
      %13 = vector.multi_reduction <add>, %12, %cst_10 [1] : vector<48x128xf32> to vector<48xf32>
      %14 = vector.shape_cast %13 : vector<48xf32> to vector<48x1xf32>
      %cst_11 = arith.constant 1.280000e+02 : f32
      %15 = vector.broadcast %cst_11 : f32 to vector<48x1xf32>
      %16 = arith.divf %14, %15 : vector<48x1xf32>
      %17 = vector.broadcast %16 : vector<48x1xf32> to vector<48x128xf32>
      %18 = arith.subf %12, %17 : vector<48x128xf32>
      %19 = arith.mulf %18, %18 : vector<48x128xf32>
      %cst_12 = arith.constant dense<0.000000e+00> : vector<48xf32>
      %20 = vector.multi_reduction <add>, %19, %cst_12 [1] : vector<48x128xf32> to vector<48xf32>
      %21 = vector.shape_cast %20 : vector<48xf32> to vector<48x1xf32>
      %cst_13 = arith.constant 1.280000e+02 : f32
      %22 = vector.broadcast %cst_13 : f32 to vector<48x1xf32>
      %23 = arith.divf %21, %22 : vector<48x1xf32>
      %24 = vector.broadcast %16 : vector<48x1xf32> to vector<48x128xf32>
      %25 = arith.subf %12, %24 : vector<48x128xf32>
      %cst_14 = arith.constant 9.99999974E-6 : f32
      %26 = vector.broadcast %cst_14 : f32 to vector<48x1xf32>
      %27 = arith.addf %23, %26 : vector<48x1xf32>
      %28 = math.rsqrt %27 : vector<48x1xf32>
      %29 = vector.broadcast %28 : vector<48x1xf32> to vector<48x128xf32>
      %30 = arith.mulf %25, %29 : vector<48x128xf32>
      %c0_15 = arith.constant 0 : index
      %c0_16 = arith.constant 0 : index
      %31 = vector.load %arg3[%c0_15, %c0_16] : memref<1x128xf32, #tpu.memory_space<vmem>>, vector<1x128xf32>
      %32 = vector.broadcast %31 : vector<1x128xf32> to vector<48x128xf32>
      %33 = arith.mulf %30, %32 : vector<48x128xf32>
      %c0_17 = arith.constant 0 : index
      %c0_18 = arith.constant 0 : index
      %34 = vector.load %arg4[%c0_17, %c0_18] : memref<1x128xf32, #tpu.memory_space<vmem>>, vector<1x128xf32>
      %35 = vector.broadcast %34 : vector<1x128xf32> to vector<48x128xf32>
      %36 = arith.addf %33, %35 : vector<48x128xf32>
      %37 = arith.truncf %36 : vector<48x128xf32> to vector<48x128xbf16>
      %c0_19 = arith.constant 0 : index
      %c0_20 = arith.constant 0 : index
      %38 = vector.load %arg8[%c0_19, %c0_20] : memref<48x128xbf16, #tpu.memory_space<vmem>>, vector<48x128xbf16>
      tpu.vector_store %arg8[%c0_19, %c0_20], %37 {strides = array<i32>} : memref<48x128xbf16, #tpu.memory_space<vmem>>, vector<48x128xbf16>,
    } else {
    }
    %c0 = arith.constant 0 : index
    %c0_1 = arith.constant 0 : index
    %3 = vector.load %arg8[%c0, %c0_1] : memref<48x128xbf16, #tpu.memory_space<vmem>>, vector<48x128xbf16>
    %c0_2 = arith.constant 0 : index
    %c0_3 = arith.constant 0 : index
    %4 = vector.load %arg5[%c0_2, %c0_3] : memref<128x384xbf16, #tpu.memory_space<vmem>>, vector<128x384xbf16>
    %cst = arith.constant dense<0.000000e+00> : vector<48x384xf32>
    %5 = tpu.matmul %3, %4, %cst {dimension_numbers = #tpu.dot_dimension_numbers<[1], [0], [0], [1], [0, 0, 1, 1], [], []>} : vector<48x128xbf16>, vector<128x384xbf16>, vector<48x384xf32> -> vector<48x384xf32>
    %c0_4 = arith.constant 0 : index
    %c0_5 = arith.constant 0 : index
    %6 = vector.load %arg6[%c0_4, %c0_5] : memref<1x384xf32, #tpu.memory_space<vmem>>, vector<1x384xf32>
    %7 = vector.broadcast %6 : vector<1x384xf32> to vector<48x384xf32>
    %8 = arith.addf %5, %7 : vector<48x384xf32>
    %9 = arith.truncf %8 : vector<48x384xf32> to vector<48x384xbf16>
    %c0_6 = arith.constant 0 : index
    %c0_7 = arith.constant 0 : index
    %10 = vector.load %arg7[%c0_6, %c0_7] : memref<48x384xbf16, #tpu.memory_space<vmem>>, vector<48x384xbf16>
    tpu.vector_store %arg7[%c0_6, %c0_7], %9 {strides = array<i32>} : memref<48x384xbf16, #tpu.memory_space<vmem>>, vector<48x384xbf16>,
    return
  }
  func.func @transform_0(%arg0: i32, %arg1: i32) -> (i32, i32) {
    %c0_i32 = arith.constant 0 : i32
    %c0_i32_0 = arith.constant 0 : i32
    return %arg0, %c0_i32 : i32, i32
  }
  func.func @transform_1(%arg0: i32, %arg1: i32) -> (i32, i32) {
    %c0_i32 = arith.constant 0 : i32
    %c0_i32_0 = arith.constant 0 : i32
    %c0_i32_1 = arith.constant 0 : i32
    return %c0_i32, %c0_i32_0 : i32, i32
  }
  func.func @transform_2(%arg0: i32, %arg1: i32) -> (i32, i32) {
    %c0_i32 = arith.constant 0 : i32
    %c0_i32_0 = arith.constant 0 : i32
    %c0_i32_1 = arith.constant 0 : i32
    return %c0_i32, %c0_i32_0 : i32, i32
  }
  func.func @transform_3(%arg0: i32, %arg1: i32) -> (i32, i32) {
    %c0_i32 = arith.constant 0 : i32
    %c0_i32_0 = arith.constant 0 : i32
    return %c0_i32, %arg1 : i32, i32
  }
  func.func @transform_4(%arg0: i32, %arg1: i32) -> (i32, i32) {
    %c0_i32 = arith.constant 0 : i32
    %c0_i32_0 = arith.constant 0 : i32
    return %c0_i32, %arg1 : i32, i32
  }
  func.func @transform_5(%arg0: i32, %arg1: i32) -> (i32, i32) {
    %c0_i32 = arith.constant 0 : i32
    return %arg0, %arg1 : i32, i32
  }
}

module attributes {stable_mosaic.version = 11 : i64} {
  func.func @_fused_matmul_kernel(%arg0: i32, %arg1: i32, %arg2: memref<48x128xbf16, #tpu.memory_space<vmem>>, %arg3: memref<128x128xbf16, #tpu.memory_space<vmem>>, %arg4: memref<1x128xf32, #tpu.memory_space<vmem>>, %arg5: memref<48x128xbf16, #tpu.memory_space<vmem>>, %arg6: memref<48x128xbf16, #tpu.memory_space<vmem>>) attributes {dimension_semantics = [#tpu.dimension_semantics<parallel>, #tpu.dimension_semantics<parallel>], iteration_bounds = array<i64: 1, 1>, scalar_prefetch = 0 : i64, scratch_operands = 0 : i64, tpu.core_type = #tpu.core_type<tc>, window_params = [{transform_indices = @transform_0, window_bounds = array<i64: 48, 128>}, {transform_indices = @transform_1, window_bounds = array<i64: 128, 128>}, {transform_indices = @transform_2, window_bounds = array<i64: 1, 128>}, {transform_indices = @transform_3, window_bounds = array<i64: 48, 128>}, {transform_indices = @transform_4, window_bounds = array<i64: 48, 128>}]} {
    %c0 = arith.constant 0 : index
    %c0_0 = arith.constant 0 : index
    %0 = vector.load %arg2[%c0, %c0_0] : memref<48x128xbf16, #tpu.memory_space<vmem>>, vector<48x128xbf16>
    %c0_1 = arith.constant 0 : index
    %c0_2 = arith.constant 0 : index
    %1 = vector.load %arg3[%c0_1, %c0_2] : memref<128x128xbf16, #tpu.memory_space<vmem>>, vector<128x128xbf16>
    %cst = arith.constant dense<0.000000e+00> : vector<48x128xf32>
    %2 = tpu.matmul %0, %1, %cst {dimension_numbers = #tpu.dot_dimension_numbers<[1], [0], [0], [1], [0, 0, 1, 1], [], []>} : vector<48x128xbf16>, vector<128x128xbf16>, vector<48x128xf32> -> vector<48x128xf32>
    %c0_3 = arith.constant 0 : index
    %c0_4 = arith.constant 0 : index
    %3 = vector.load %arg4[%c0_3, %c0_4] : memref<1x128xf32, #tpu.memory_space<vmem>>, vector<1x128xf32>
    %4 = vector.broadcast %3 : vector<1x128xf32> to vector<48x128xf32>
    %5 = arith.addf %2, %4 : vector<48x128xf32>
    %c0_5 = arith.constant 0 : index
    %c0_6 = arith.constant 0 : index
    %6 = vector.load %arg5[%c0_5, %c0_6] : memref<48x128xbf16, #tpu.memory_space<vmem>>, vector<48x128xbf16>
    %7 = arith.extf %6 : vector<48x128xbf16> to vector<48x128xf32>
    %8 = arith.addf %5, %7 : vector<48x128xf32>
    %9 = arith.truncf %8 : vector<48x128xf32> to vector<48x128xbf16>
    %c0_7 = arith.constant 0 : index
    %c0_8 = arith.constant 0 : index
    %10 = vector.load %arg6[%c0_7, %c0_8] : memref<48x128xbf16, #tpu.memory_space<vmem>>, vector<48x128xbf16>
    tpu.vector_store %arg6[%c0_7, %c0_8], %9 {strides = array<i32>} : memref<48x128xbf16, #tpu.memory_space<vmem>>, vector<48x128xbf16>,
    return
  }
  func.func @transform_0(%arg0: i32, %arg1: i32) -> (i32, i32) {
    %c0_i32 = arith.constant 0 : i32
    %c0_i32_0 = arith.constant 0 : i32
    return %arg0, %c0_i32 : i32, i32
  }
  func.func @transform_1(%arg0: i32, %arg1: i32) -> (i32, i32) {
    %c0_i32 = arith.constant 0 : i32
    %c0_i32_0 = arith.constant 0 : i32
    return %c0_i32, %arg1 : i32, i32
  }
  func.func @transform_2(%arg0: i32, %arg1: i32) -> (i32, i32) {
    %c0_i32 = arith.constant 0 : i32
    %c0_i32_0 = arith.constant 0 : i32
    return %c0_i32, %arg1 : i32, i32
  }
  func.func @transform_3(%arg0: i32, %arg1: i32) -> (i32, i32) {
    %c0_i32 = arith.constant 0 : i32
    return %arg0, %arg1 : i32, i32
  }
  func.func @transform_4(%arg0: i32, %arg1: i32) -> (i32, i32) {
    %c0_i32 = arith.constant 0 : i32
    return %arg0, %arg1 : i32, i32
  }
}

module attributes {stable_mosaic.version = 11 : i64} {
  func.func @_attention_kernel(%arg0: i32, %arg1: memref<1x17x384xbf16, #tpu.memory_space<vmem>>, %arg2: memref<1x17x128xbf16, #tpu.memory_space<vmem>>) attributes {dimension_semantics = [#tpu.dimension_semantics<parallel>], iteration_bounds = array<i64: 2>, scalar_prefetch = 0 : i64, scratch_operands = 0 : i64, tpu.core_type = #tpu.core_type<tc>, window_params = [{transform_indices = @transform_0, window_bounds = array<i64: 1, 17, 384>}, {transform_indices = @transform_1, window_bounds = array<i64: 1, 17, 128>}]} {
    %c0 = arith.constant 0 : index
    %c0_0 = arith.constant 0 : index
    %c0_1 = arith.constant 0 : index
    %0 = vector.load %arg1[%c0, %c0_0, %c0_1] : memref<1x17x384xbf16, #tpu.memory_space<vmem>>, vector<1x17x64xbf16>
    %1 = vector.shape_cast %0 : vector<1x17x64xbf16> to vector<17x64xbf16>
    %c0_2 = arith.constant 0 : index
    %c0_3 = arith.constant 0 : index
    %c128 = arith.constant 128 : index
    %2 = vector.load %arg1[%c0_2, %c0_3, %c128] : memref<1x17x384xbf16, #tpu.memory_space<vmem>>, vector<1x17x64xbf16>
    %3 = vector.shape_cast %2 : vector<1x17x64xbf16> to vector<17x64xbf16>
    %c0_4 = arith.constant 0 : index
    %c0_5 = arith.constant 0 : index
    %c256 = arith.constant 256 : index
    %4 = vector.load %arg1[%c0_4, %c0_5, %c256] : memref<1x17x384xbf16, #tpu.memory_space<vmem>>, vector<1x17x64xbf16>
    %5 = vector.shape_cast %4 : vector<1x17x64xbf16> to vector<17x64xbf16>
    %6 = arith.extf %1 : vector<17x64xbf16> to vector<17x64xf32>
    %cst = arith.constant 1.250000e-01 : f32
    %7 = vector.broadcast %cst : f32 to vector<17x64xf32>
    %8 = arith.mulf %6, %7 : vector<17x64xf32>
    %9 = arith.truncf %8 : vector<17x64xf32> to vector<17x64xbf16>
    %cst_6 = arith.constant dense<0.000000e+00> : vector<17x17xf32>
    %10 = tpu.matmul %9, %3, %cst_6 {dimension_numbers = #tpu.dot_dimension_numbers<[1], [1], [0], [0], [0, 0, 1, 0], [], []>} : vector<17x64xbf16>, vector<17x64xbf16>, vector<17x17xf32> -> vector<17x17xf32>
    %cst_7 = arith.constant dense<0xFF800000> : vector<17xf32>
    %11 = vector.multi_reduction <maximumf>, %10, %cst_7 [1] : vector<17x17xf32> to vector<17xf32>
    %12 = vector.shape_cast %11 : vector<17xf32> to vector<17x1xf32>
    %13 = vector.broadcast %12 : vector<17x1xf32> to vector<17x17xf32>
    %14 = arith.subf %10, %13 : vector<17x17xf32>
    %15 = math.exp %14 : vector<17x17xf32>
    %cst_8 = arith.constant dense<0.000000e+00> : vector<17xf32>
    %16 = vector.multi_reduction <add>, %15, %cst_8 [1] : vector<17x17xf32> to vector<17xf32>
    %17 = vector.shape_cast %16 : vector<17xf32> to vector<17x1xf32>
    %18 = tpu.reciprocal %17 {approx = true} : vector<17x1xf32> -> vector<17x1xf32>
    %19 = vector.broadcast %18 : vector<17x1xf32> to vector<17x17xf32>
    %20 = arith.mulf %15, %19 : vector<17x17xf32>
    %21 = arith.truncf %20 : vector<17x17xf32> to vector<17x17xbf16>
    %cst_9 = arith.constant dense<0.000000e+00> : vector<17x64xf32>
    %22 = tpu.matmul %21, %5, %cst_9 {dimension_numbers = #tpu.dot_dimension_numbers<[1], [0], [0], [1], [0, 0, 1, 1], [], []>} : vector<17x17xbf16>, vector<17x64xbf16>, vector<17x64xf32> -> vector<17x64xf32>
    %c0_10 = arith.constant 0 : index
    %c0_11 = arith.constant 0 : index
    %c64 = arith.constant 64 : index
    %23 = vector.load %arg1[%c0_10, %c0_11, %c64] : memref<1x17x384xbf16, #tpu.memory_space<vmem>>, vector<1x17x64xbf16>
    %24 = vector.shape_cast %23 : vector<1x17x64xbf16> to vector<17x64xbf16>
    %c0_12 = arith.constant 0 : index
    %c0_13 = arith.constant 0 : index
    %c192 = arith.constant 192 : index
    %25 = vector.load %arg1[%c0_12, %c0_13, %c192] : memref<1x17x384xbf16, #tpu.memory_space<vmem>>, vector<1x17x64xbf16>
    %26 = vector.shape_cast %25 : vector<1x17x64xbf16> to vector<17x64xbf16>
    %c0_14 = arith.constant 0 : index
    %c0_15 = arith.constant 0 : index
    %c320 = arith.constant 320 : index
    %27 = vector.load %arg1[%c0_14, %c0_15, %c320] : memref<1x17x384xbf16, #tpu.memory_space<vmem>>, vector<1x17x64xbf16>
    %28 = vector.shape_cast %27 : vector<1x17x64xbf16> to vector<17x64xbf16>
    %29 = arith.extf %24 : vector<17x64xbf16> to vector<17x64xf32>
    %cst_16 = arith.constant 1.250000e-01 : f32
    %30 = vector.broadcast %cst_16 : f32 to vector<17x64xf32>
    %31 = arith.mulf %29, %30 : vector<17x64xf32>
    %32 = arith.truncf %31 : vector<17x64xf32> to vector<17x64xbf16>
    %cst_17 = arith.constant dense<0.000000e+00> : vector<17x17xf32>
    %33 = tpu.matmul %32, %26, %cst_17 {dimension_numbers = #tpu.dot_dimension_numbers<[1], [1], [0], [0], [0, 0, 1, 0], [], []>} : vector<17x64xbf16>, vector<17x64xbf16>, vector<17x17xf32> -> vector<17x17xf32>
    %cst_18 = arith.constant dense<0xFF800000> : vector<17xf32>
    %34 = vector.multi_reduction <maximumf>, %33, %cst_18 [1] : vector<17x17xf32> to vector<17xf32>
    %35 = vector.shape_cast %34 : vector<17xf32> to vector<17x1xf32>
    %36 = vector.broadcast %35 : vector<17x1xf32> to vector<17x17xf32>
    %37 = arith.subf %33, %36 : vector<17x17xf32>
    %38 = math.exp %37 : vector<17x17xf32>
    %cst_19 = arith.constant dense<0.000000e+00> : vector<17xf32>
    %39 = vector.multi_reduction <add>, %38, %cst_19 [1] : vector<17x17xf32> to vector<17xf32>
    %40 = vector.shape_cast %39 : vector<17xf32> to vector<17x1xf32>
    %41 = tpu.reciprocal %40 {approx = true} : vector<17x1xf32> -> vector<17x1xf32>
    %42 = vector.broadcast %41 : vector<17x1xf32> to vector<17x17xf32>
    %43 = arith.mulf %38, %42 : vector<17x17xf32>
    %44 = arith.truncf %43 : vector<17x17xf32> to vector<17x17xbf16>
    %cst_20 = arith.constant dense<0.000000e+00> : vector<17x64xf32>
    %45 = tpu.matmul %44, %28, %cst_20 {dimension_numbers = #tpu.dot_dimension_numbers<[1], [0], [0], [1], [0, 0, 1, 1], [], []>} : vector<17x17xbf16>, vector<17x64xbf16>, vector<17x64xf32> -> vector<17x64xf32>
    %46 = tpu.concatenate %22, %45 in 1 : vector<17x64xf32>, vector<17x64xf32> -> vector<17x128xf32>
    %47 = arith.truncf %46 : vector<17x128xf32> to vector<17x128xbf16>
    %c0_21 = arith.constant 0 : index
    %c0_22 = arith.constant 0 : index
    %c0_23 = arith.constant 0 : index
    %48 = vector.load %arg2[%c0_21, %c0_22, %c0_23] : memref<1x17x128xbf16, #tpu.memory_space<vmem>>, vector<1x17x128xbf16>
    %49 = vector.shape_cast %48 : vector<1x17x128xbf16> to vector<17x128xbf16>
    %50 = vector.shape_cast %47 : vector<17x128xbf16> to vector<1x17x128xbf16>
    tpu.vector_store %arg2[%c0_21, %c0_22, %c0_23], %50 {strides = array<i32>} : memref<1x17x128xbf16, #tpu.memory_space<vmem>>, vector<1x17x128xbf16>,
    return
  }
  func.func @transform_0(%arg0: i32) -> (i32, i32, i32) {
    %c0_i32 = arith.constant 0 : i32
    %c0_i32_0 = arith.constant 0 : i32
    %c0_i32_1 = arith.constant 0 : i32
    return %arg0, %c0_i32, %c0_i32_0 : i32, i32, i32
  }
  func.func @transform_1(%arg0: i32) -> (i32, i32, i32) {
    %c0_i32 = arith.constant 0 : i32
    %c0_i32_0 = arith.constant 0 : i32
    %c0_i32_1 = arith.constant 0 : i32
    return %arg0, %c0_i32, %c0_i32_0 : i32, i32, i32
  }
}

module attributes {stable_mosaic.version = 11 : i64} {
  func.func @_fused_matmul_kernel(%arg0: i32, %arg1: i32, %arg2: memref<48x128xbf16, #tpu.memory_space<vmem>>, %arg3: memref<1x128xf32, #tpu.memory_space<vmem>>, %arg4: memref<1x128xf32, #tpu.memory_space<vmem>>, %arg5: memref<128x512xbf16, #tpu.memory_space<vmem>>, %arg6: memref<1x512xf32, #tpu.memory_space<vmem>>, %arg7: memref<48x512xbf16, #tpu.memory_space<vmem>>, %arg8: memref<48x128xbf16, #tpu.memory_space<vmem>>) attributes {dimension_semantics = [#tpu.dimension_semantics<parallel>, #tpu.dimension_semantics<arbitrary>], iteration_bounds = array<i64: 1, 1>, scalar_prefetch = 0 : i64, scratch_operands = 1 : i64, tpu.core_type = #tpu.core_type<tc>, window_params = [{transform_indices = @transform_0, window_bounds = array<i64: 48, 128>}, {pipeline_mode = #tpu.pipeline_mode<synchronous>, transform_indices = @transform_1, window_bounds = array<i64: 1, 128>}, {pipeline_mode = #tpu.pipeline_mode<synchronous>, transform_indices = @transform_2, window_bounds = array<i64: 1, 128>}, {transform_indices = @transform_3, window_bounds = array<i64: 128, 512>}, {transform_indices = @transform_4, window_bounds = array<i64: 1, 512>}, {transform_indices = @transform_5, window_bounds = array<i64: 48, 512>}]} {
    %c0_i32 = arith.constant 0 : i32
    %0 = arith.cmpi eq, %arg1, %c0_i32 : i32
    %1 = arith.extui %0 : i1 to i32
    %c0_i32_0 = arith.constant 0 : i32
    %2 = arith.cmpi ne, %1, %c0_i32_0 : i32
    scf.if %2 {
      %c0_10 = arith.constant 0 : index
      %c0_11 = arith.constant 0 : index
      %19 = vector.load %arg2[%c0_10, %c0_11] : memref<48x128xbf16, #tpu.memory_space<vmem>>, vector<48x128xbf16>
      %20 = arith.extf %19 : vector<48x128xbf16> to vector<48x128xf32>
      %cst_12 = arith.constant dense<0.000000e+00> : vector<48xf32>
      %21 = vector.multi_reduction <add>, %20, %cst_12 [1] : vector<48x128xf32> to vector<48xf32>
      %22 = vector.shape_cast %21 : vector<48xf32> to vector<48x1xf32>
      %cst_13 = arith.constant 1.280000e+02 : f32
      %23 = vector.broadcast %cst_13 : f32 to vector<48x1xf32>
      %24 = arith.divf %22, %23 : vector<48x1xf32>
      %25 = vector.broadcast %24 : vector<48x1xf32> to vector<48x128xf32>
      %26 = arith.subf %20, %25 : vector<48x128xf32>
      %27 = arith.mulf %26, %26 : vector<48x128xf32>
      %cst_14 = arith.constant dense<0.000000e+00> : vector<48xf32>
      %28 = vector.multi_reduction <add>, %27, %cst_14 [1] : vector<48x128xf32> to vector<48xf32>
      %29 = vector.shape_cast %28 : vector<48xf32> to vector<48x1xf32>
      %cst_15 = arith.constant 1.280000e+02 : f32
      %30 = vector.broadcast %cst_15 : f32 to vector<48x1xf32>
      %31 = arith.divf %29, %30 : vector<48x1xf32>
      %32 = vector.broadcast %24 : vector<48x1xf32> to vector<48x128xf32>
      %33 = arith.subf %20, %32 : vector<48x128xf32>
      %cst_16 = arith.constant 9.99999974E-6 : f32
      %34 = vector.broadcast %cst_16 : f32 to vector<48x1xf32>
      %35 = arith.addf %31, %34 : vector<48x1xf32>
      %36 = math.rsqrt %35 : vector<48x1xf32>
      %37 = vector.broadcast %36 : vector<48x1xf32> to vector<48x128xf32>
      %38 = arith.mulf %33, %37 : vector<48x128xf32>
      %c0_17 = arith.constant 0 : index
      %c0_18 = arith.constant 0 : index
      %39 = vector.load %arg3[%c0_17, %c0_18] : memref<1x128xf32, #tpu.memory_space<vmem>>, vector<1x128xf32>
      %40 = vector.broadcast %39 : vector<1x128xf32> to vector<48x128xf32>
      %41 = arith.mulf %38, %40 : vector<48x128xf32>
      %c0_19 = arith.constant 0 : index
      %c0_20 = arith.constant 0 : index
      %42 = vector.load %arg4[%c0_19, %c0_20] : memref<1x128xf32, #tpu.memory_space<vmem>>, vector<1x128xf32>
      %43 = vector.broadcast %42 : vector<1x128xf32> to vector<48x128xf32>
      %44 = arith.addf %41, %43 : vector<48x128xf32>
      %45 = arith.truncf %44 : vector<48x128xf32> to vector<48x128xbf16>
      %c0_21 = arith.constant 0 : index
      %c0_22 = arith.constant 0 : index
      %46 = vector.load %arg8[%c0_21, %c0_22] : memref<48x128xbf16, #tpu.memory_space<vmem>>, vector<48x128xbf16>
      tpu.vector_store %arg8[%c0_21, %c0_22], %45 {strides = array<i32>} : memref<48x128xbf16, #tpu.memory_space<vmem>>, vector<48x128xbf16>,
    } else {
    }
    %c0 = arith.constant 0 : index
    %c0_1 = arith.constant 0 : index
    %3 = vector.load %arg8[%c0, %c0_1] : memref<48x128xbf16, #tpu.memory_space<vmem>>, vector<48x128xbf16>
    %c0_2 = arith.constant 0 : index
    %c0_3 = arith.constant 0 : index
    %4 = vector.load %arg5[%c0_2, %c0_3] : memref<128x512xbf16, #tpu.memory_space<vmem>>, vector<128x512xbf16>
    %cst = arith.constant dense<0.000000e+00> : vector<48x512xf32>
    %5 = tpu.matmul %3, %4, %cst {dimension_numbers = #tpu.dot_dimension_numbers<[1], [0], [0], [1], [0, 0, 1, 1], [], []>} : vector<48x128xbf16>, vector<128x512xbf16>, vector<48x512xf32> -> vector<48x512xf32>
    %c0_4 = arith.constant 0 : index
    %c0_5 = arith.constant 0 : index
    %6 = vector.load %arg6[%c0_4, %c0_5] : memref<1x512xf32, #tpu.memory_space<vmem>>, vector<1x512xf32>
    %7 = vector.broadcast %6 : vector<1x512xf32> to vector<48x512xf32>
    %8 = arith.addf %5, %7 : vector<48x512xf32>
    %cst_6 = arith.constant 1.702000e+00 : f32
    %9 = vector.broadcast %cst_6 : f32 to vector<48x512xf32>
    %10 = arith.mulf %9, %8 : vector<48x512xf32>
    %11 = arith.negf %10 : vector<48x512xf32>
    %12 = math.exp %11 : vector<48x512xf32>
    %cst_7 = arith.constant 1.000000e+00 : f32
    %13 = vector.broadcast %cst_7 : f32 to vector<48x512xf32>
    %14 = arith.addf %13, %12 : vector<48x512xf32>
    %15 = arith.divf %13, %14 : vector<48x512xf32>
    %16 = arith.mulf %8, %15 : vector<48x512xf32>
    %17 = arith.truncf %16 : vector<48x512xf32> to vector<48x512xbf16>
    %c0_8 = arith.constant 0 : index
    %c0_9 = arith.constant 0 : index
    %18 = vector.load %arg7[%c0_8, %c0_9] : memref<48x512xbf16, #tpu.memory_space<vmem>>, vector<48x512xbf16>
    tpu.vector_store %arg7[%c0_8, %c0_9], %17 {strides = array<i32>} : memref<48x512xbf16, #tpu.memory_space<vmem>>, vector<48x512xbf16>,
    return
  }
  func.func @transform_0(%arg0: i32, %arg1: i32) -> (i32, i32) {
    %c0_i32 = arith.constant 0 : i32
    %c0_i32_0 = arith.constant 0 : i32
    return %arg0, %c0_i32 : i32, i32
  }
  func.func @transform_1(%arg0: i32, %arg1: i32) -> (i32, i32) {
    %c0_i32 = arith.constant 0 : i32
    %c0_i32_0 = arith.constant 0 : i32
    %c0_i32_1 = arith.constant 0 : i32
    return %c0_i32, %c0_i32_0 : i32, i32
  }
  func.func @transform_2(%arg0: i32, %arg1: i32) -> (i32, i32) {
    %c0_i32 = arith.constant 0 : i32
    %c0_i32_0 = arith.constant 0 : i32
    %c0_i32_1 = arith.constant 0 : i32
    return %c0_i32, %c0_i32_0 : i32, i32
  }
  func.func @transform_3(%arg0: i32, %arg1: i32) -> (i32, i32) {
    %c0_i32 = arith.constant 0 : i32
    %c0_i32_0 = arith.constant 0 : i32
    return %c0_i32, %arg1 : i32, i32
  }
  func.func @transform_4(%arg0: i32, %arg1: i32) -> (i32, i32) {
    %c0_i32 = arith.constant 0 : i32
    %c0_i32_0 = arith.constant 0 : i32
    return %c0_i32, %arg1 : i32, i32
  }
  func.func @transform_5(%arg0: i32, %arg1: i32) -> (i32, i32) {
    %c0_i32 = arith.constant 0 : i32
    return %arg0, %arg1 : i32, i32
  }
}

module attributes {stable_mosaic.version = 11 : i64} {
  func.func @_layernorm_kernel(%arg0: i32, %arg1: memref<48x128xbf16, #tpu.memory_space<vmem>>, %arg2: memref<1x128xf32, #tpu.memory_space<vmem>>, %arg3: memref<1x128xf32, #tpu.memory_space<vmem>>, %arg4: memref<48x128xf32, #tpu.memory_space<vmem>>) attributes {dimension_semantics = [#tpu.dimension_semantics<parallel>], iteration_bounds = array<i64: 1>, scalar_prefetch = 0 : i64, scratch_operands = 0 : i64, tpu.core_type = #tpu.core_type<tc>, window_params = [{transform_indices = @transform_0, window_bounds = array<i64: 48, 128>}, {pipeline_mode = #tpu.pipeline_mode<synchronous>, transform_indices = @transform_1, window_bounds = array<i64: 1, 128>}, {pipeline_mode = #tpu.pipeline_mode<synchronous>, transform_indices = @transform_2, window_bounds = array<i64: 1, 128>}, {transform_indices = @transform_3, window_bounds = array<i64: 48, 128>}]} {
    %c0 = arith.constant 0 : index
    %c0_0 = arith.constant 0 : index
    %0 = vector.load %arg1[%c0, %c0_0] : memref<48x128xbf16, #tpu.memory_space<vmem>>, vector<48x128xbf16>
    %1 = arith.extf %0 : vector<48x128xbf16> to vector<48x128xf32>
    %cst = arith.constant dense<0.000000e+00> : vector<48xf32>
    %2 = vector.multi_reduction <add>, %1, %cst [1] : vector<48x128xf32> to vector<48xf32>
    %3 = vector.shape_cast %2 : vector<48xf32> to vector<48x1xf32>
    %cst_1 = arith.constant 1.280000e+02 : f32
    %4 = vector.broadcast %cst_1 : f32 to vector<48x1xf32>
    %5 = arith.divf %3, %4 : vector<48x1xf32>
    %6 = vector.broadcast %5 : vector<48x1xf32> to vector<48x128xf32>
    %7 = arith.subf %1, %6 : vector<48x128xf32>
    %8 = arith.mulf %7, %7 : vector<48x128xf32>
    %cst_2 = arith.constant dense<0.000000e+00> : vector<48xf32>
    %9 = vector.multi_reduction <add>, %8, %cst_2 [1] : vector<48x128xf32> to vector<48xf32>
    %10 = vector.shape_cast %9 : vector<48xf32> to vector<48x1xf32>
    %cst_3 = arith.constant 1.280000e+02 : f32
    %11 = vector.broadcast %cst_3 : f32 to vector<48x1xf32>
    %12 = arith.divf %10, %11 : vector<48x1xf32>
    %13 = vector.broadcast %5 : vector<48x1xf32> to vector<48x128xf32>
    %14 = arith.subf %1, %13 : vector<48x128xf32>
    %cst_4 = arith.constant 9.99999974E-6 : f32
    %15 = vector.broadcast %cst_4 : f32 to vector<48x1xf32>
    %16 = arith.addf %12, %15 : vector<48x1xf32>
    %17 = math.rsqrt %16 : vector<48x1xf32>
    %18 = vector.broadcast %17 : vector<48x1xf32> to vector<48x128xf32>
    %19 = arith.mulf %14, %18 : vector<48x128xf32>
    %c0_5 = arith.constant 0 : index
    %c0_6 = arith.constant 0 : index
    %20 = vector.load %arg2[%c0_5, %c0_6] : memref<1x128xf32, #tpu.memory_space<vmem>>, vector<1x128xf32>
    %21 = vector.broadcast %20 : vector<1x128xf32> to vector<48x128xf32>
    %22 = arith.mulf %19, %21 : vector<48x128xf32>
    %c0_7 = arith.constant 0 : index
    %c0_8 = arith.constant 0 : index
    %23 = vector.load %arg3[%c0_7, %c0_8] : memref<1x128xf32, #tpu.memory_space<vmem>>, vector<1x128xf32>
    %24 = vector.broadcast %23 : vector<1x128xf32> to vector<48x128xf32>
    %25 = arith.addf %22, %24 : vector<48x128xf32>
    %c0_9 = arith.constant 0 : index
    %c0_10 = arith.constant 0 : index
    %26 = vector.load %arg4[%c0_9, %c0_10] : memref<48x128xf32, #tpu.memory_space<vmem>>, vector<48x128xf32>
    tpu.vector_store %arg4[%c0_9, %c0_10], %25 {strides = array<i32>} : memref<48x128xf32, #tpu.memory_space<vmem>>, vector<48x128xf32>,
    return
  }
  func.func @transform_0(%arg0: i32) -> (i32, i32) {
    %c0_i32 = arith.constant 0 : i32
    %c0_i32_0 = arith.constant 0 : i32
    return %arg0, %c0_i32 : i32, i32
  }
  func.func @transform_1(%arg0: i32) -> (i32, i32) {
    %c0_i32 = arith.constant 0 : i32
    %c0_i32_0 = arith.constant 0 : i32
    %c0_i32_1 = arith.constant 0 : i32
    return %c0_i32, %c0_i32_0 : i32, i32
  }
  func.func @transform_2(%arg0: i32) -> (i32, i32) {
    %c0_i32 = arith.constant 0 : i32
    %c0_i32_0 = arith.constant 0 : i32
    %c0_i32_1 = arith.constant 0 : i32
    return %c0_i32, %c0_i32_0 : i32, i32
  }
  func.func @transform_3(%arg0: i32) -> (i32, i32) {
    %c0_i32 = arith.constant 0 : i32
    %c0_i32_0 = arith.constant 0 : i32
    return %arg0, %c0_i32 : i32, i32
  }
}

module attributes {stable_mosaic.version = 11 : i64} {
  func.func @_fused_matmul_kernel(%arg0: i32, %arg1: i32, %arg2: memref<48x512xbf16, #tpu.memory_space<vmem>>, %arg3: memref<512x128xbf16, #tpu.memory_space<vmem>>, %arg4: memref<1x128xf32, #tpu.memory_space<vmem>>, %arg5: memref<48x128xbf16, #tpu.memory_space<vmem>>, %arg6: memref<48x128xbf16, #tpu.memory_space<vmem>>) attributes {dimension_semantics = [#tpu.dimension_semantics<parallel>, #tpu.dimension_semantics<parallel>], iteration_bounds = array<i64: 1, 1>, scalar_prefetch = 0 : i64, scratch_operands = 0 : i64, tpu.core_type = #tpu.core_type<tc>, window_params = [{transform_indices = @transform_0, window_bounds = array<i64: 48, 512>}, {transform_indices = @transform_1, window_bounds = array<i64: 512, 128>}, {transform_indices = @transform_2, window_bounds = array<i64: 1, 128>}, {transform_indices = @transform_3, window_bounds = array<i64: 48, 128>}, {transform_indices = @transform_4, window_bounds = array<i64: 48, 128>}]} {
    %c0 = arith.constant 0 : index
    %c0_0 = arith.constant 0 : index
    %0 = vector.load %arg2[%c0, %c0_0] : memref<48x512xbf16, #tpu.memory_space<vmem>>, vector<48x512xbf16>
    %c0_1 = arith.constant 0 : index
    %c0_2 = arith.constant 0 : index
    %1 = vector.load %arg3[%c0_1, %c0_2] : memref<512x128xbf16, #tpu.memory_space<vmem>>, vector<512x128xbf16>
    %cst = arith.constant dense<0.000000e+00> : vector<48x128xf32>
    %2 = tpu.matmul %0, %1, %cst {dimension_numbers = #tpu.dot_dimension_numbers<[1], [0], [0], [1], [0, 0, 1, 1], [], []>} : vector<48x512xbf16>, vector<512x128xbf16>, vector<48x128xf32> -> vector<48x128xf32>
    %c0_3 = arith.constant 0 : index
    %c0_4 = arith.constant 0 : index
    %3 = vector.load %arg4[%c0_3, %c0_4] : memref<1x128xf32, #tpu.memory_space<vmem>>, vector<1x128xf32>
    %4 = vector.broadcast %3 : vector<1x128xf32> to vector<48x128xf32>
    %5 = arith.addf %2, %4 : vector<48x128xf32>
    %c0_5 = arith.constant 0 : index
    %c0_6 = arith.constant 0 : index
    %6 = vector.load %arg5[%c0_5, %c0_6] : memref<48x128xbf16, #tpu.memory_space<vmem>>, vector<48x128xbf16>
    %7 = arith.extf %6 : vector<48x128xbf16> to vector<48x128xf32>
    %8 = arith.addf %5, %7 : vector<48x128xf32>
    %9 = arith.truncf %8 : vector<48x128xf32> to vector<48x128xbf16>
    %c0_7 = arith.constant 0 : index
    %c0_8 = arith.constant 0 : index
    %10 = vector.load %arg6[%c0_7, %c0_8] : memref<48x128xbf16, #tpu.memory_space<vmem>>, vector<48x128xbf16>
    tpu.vector_store %arg6[%c0_7, %c0_8], %9 {strides = array<i32>} : memref<48x128xbf16, #tpu.memory_space<vmem>>, vector<48x128xbf16>,
    return
  }
  func.func @transform_0(%arg0: i32, %arg1: i32) -> (i32, i32) {
    %c0_i32 = arith.constant 0 : i32
    %c0_i32_0 = arith.constant 0 : i32
    return %arg0, %c0_i32 : i32, i32
  }
  func.func @transform_1(%arg0: i32, %arg1: i32) -> (i32, i32) {
    %c0_i32 = arith.constant 0 : i32
    %c0_i32_0 = arith.constant 0 : i32
    return %c0_i32, %arg1 : i32, i32
  }
  func.func @transform_2(%arg0: i32, %arg1: i32) -> (i32, i32) {
    %c0_i32 = arith.constant 0 : i32
    %c0_i32_0 = arith.constant 0 : i32
    return %c0_i32, %arg1 : i32, i32
  }
  func.func @transform_3(%arg0: i32, %arg1: i32) -> (i32, i32) {
    %c0_i32 = arith.constant 0 : i32
    return %arg0, %arg1 : i32, i32
  }
  func.func @transform_4(%arg0: i32, %arg1: i32) -> (i32, i32) {
    %c0_i32 = arith.constant 0 : i32
    return %arg0, %arg1 : i32, i32
  }
}

</mosaic_0001>

<llo_original>
// kernel: clip_featurizer_forward.14
$region0: #{clip_featurizer_forward.14}
  #allocation0 [shape = 'u32[]', space=smem, size = 0x4, offset = 0x4, fixed_abs, tag = 'smem constant byte address 0x4 - core index']
  #allocation1 [shape = 'u32[144,128]{1,0:T(1,128)}', space=vmem, size = 0x12000, scoped, tag = 'internal scratch']
  %s0 = inlined_call_operand.vmem [shape: bf16[2,16,128], index: 0, kind: input, shape index: {}]
  %s1 = inlined_call_operand.vmem [shape: bf16[1,1,128], index: 1, kind: input, shape index: {}]
  %s2 = inlined_call_operand.vmem [shape: bf16[1,17,128], index: 2, kind: input, shape index: {}]
  %s3 = inlined_call_operand.vmem [shape: f32[1,128], index: 3, kind: input, shape index: {}]
  %s4 = inlined_call_operand.vmem [shape: f32[1,128], index: 4, kind: input, shape index: {}]
  %s5 = inlined_call_operand.vmem [shape: bf16[2,17,128], index: 5, kind: output, shape index: {}]
  %s6 = sld [smem:[#allocation0]]
  $region53: #{clip_featurizer_forward.14} parent=0
    _
  %s8 = ssub.s32 1, %s6
  %s9 = scalar_select 0, %s8, %s6
  loop: start=0, step=1, limit=4
  $region2: #{clip_featurizer_forward.14} parent=0 // loop_pre_header
    _
  $region3: #{clip_featurizer_forward.14} parent=0 // loop_header
    %s11 = sphi 0, %s15
    %p12 = scmp.ge.s32.totalorder %s11, 4
    %s21 = sphi 0, %s23
    %s24 = sphi 0, %s21
    %s25 = sphi 0, %s24
    %s41 = sphi 0, %s25
    %s45 = sphi 0, %s45
    %s47 = sphi 0, %s45
    %s48 = sphi 0, %s47
    %s62 = sphi 0, %s48
    %s66 = sphi 0, %s66
    %s68 = sphi 0, %s66
    %s69 = sphi 0, %s68
    %s83 = sphi 0, %s69
    %s87 = sphi 0, %s87
    %s89 = sphi 0, %s87
    %s90 = sphi 0, %s89
    %s104 = sphi 0, %s90
    %s108 = sphi 0, %s108
    %s110 = sphi 0, %s108
    %s111 = sphi 0, %s110
    %s125 = sphi 0, %s111
    %s131 = sphi 0, %s133
    %s134 = sphi 0, %s131
    %s135 = sphi 0, %s134
    %s151 = sphi 0, %s135
  $region4: #{clip_featurizer_forward.14} parent=0 // loop_header_branch
    %14 = sbr.rel (%p12) target = $region8
  $region5: #{clip_featurizer_forward.14} parent=0 // loop_body
    %s16 = ssub.s32 %s11, 1
    %s17 = ssub.s32 %s11, 2
    %s18 = sadd.s32 %s11, 1
    %s19 = ssub.s32 %s11, %s18
    %p20 = scmp.eq.s32.totalorder %s19, 0
    %s22 = sadd.s32 %s21, 1
    %s23 = scalar_select %p20, %s21, %s22
    %p26 = pneg %p20
    %p27 = scmp.eq.s32.totalorder %s11, 1
    %p28 = por %p26, %p27
    %p29 = scmp.ne.s32.totalorder %s21, %s24
    %p30 = scmp.eq.s32.totalorder %s11, 0
    %p31 = por %p29, %p30
    %p32 = scmp.ne.s32.totalorder %s21, %s24
    %p33 = scmp.eq.s32.totalorder %s16, 1
    %p34 = por %p32, %p33
    %p35 = scmp.ne.s32.totalorder %s24, %s25
    %p36 = scmp.eq.s32.totalorder %s16, 0
    %p37 = por %p35, %p36
    %p38 = scmp.ne.s32.totalorder %s24, %s25
    %p39 = scmp.eq.s32.totalorder %s17, 1
    %p40 = por %p38, %p39
    %p42 = scmp.ne.s32.totalorder %s25, %s41
    %p43 = scmp.eq.s32.totalorder %s17, 0
    %p44 = por %p42, %p43
    %s46 = sadd.s32 %s45, 1
    %p49 = scmp.eq.s32.totalorder %s11, 1
    %p50 = scmp.ne.s32.totalorder %s45, %s47
    %p51 = scmp.eq.s32.totalorder %s11, 0
    %p52 = por %p50, %p51
    %p53 = scmp.ne.s32.totalorder %s45, %s47
    %p54 = scmp.eq.s32.totalorder %s16, 1
    %p55 = por %p53, %p54
    %p56 = scmp.ne.s32.totalorder %s47, %s48
    %p57 = scmp.eq.s32.totalorder %s16, 0
    %p58 = por %p56, %p57
    %p59 = scmp.ne.s32.totalorder %s47, %s48
    %p60 = scmp.eq.s32.totalorder %s17, 1
    %p61 = por %p59, %p60
    %p63 = scmp.ne.s32.totalorder %s48, %s62
    %p64 = scmp.eq.s32.totalorder %s17, 0
    %p65 = por %p63, %p64
    %s67 = sadd.s32 %s66, 1
    %p70 = scmp.eq.s32.totalorder %s11, 1
    %p71 = scmp.ne.s32.totalorder %s66, %s68
    %p72 = scmp.eq.s32.totalorder %s11, 0
    %p73 = por %p71, %p72
    %p74 = scmp.ne.s32.totalorder %s66, %s68
    %p75 = scmp.eq.s32.totalorder %s16, 1
    %p76 = por %p74, %p75
    %p77 = scmp.ne.s32.totalorder %s68, %s69
    %p78 = scmp.eq.s32.totalorder %s16, 0
    %p79 = por %p77, %p78
    %p80 = scmp.ne.s32.totalorder %s68, %s69
    %p81 = scmp.eq.s32.totalorder %s17, 1
    %p82 = por %p80, %p81
    %p84 = scmp.ne.s32.totalorder %s69, %s83
    %p85 = scmp.eq.s32.totalorder %s17, 0
    %p86 = por %p84, %p85
    %s88 = sadd.s32 %s87, 1
    %p91 = scmp.eq.s32.totalorder %s11, 1
    %p92 = scmp.ne.s32.totalorder %s87, %s89
    %p93 = scmp.eq.s32.totalorder %s11, 0
    %p94 = por %p92, %p93
    %p95 = scmp.ne.s32.totalorder %s87, %s89
    %p96 = scmp.eq.s32.totalorder %s16, 1
    %p97 = por %p95, %p96
    %p98 = scmp.ne.s32.totalorder %s89, %s90
    %p99 = scmp.eq.s32.totalorder %s16, 0
    %p100 = por %p98, %p99
    %p101 = scmp.ne.s32.totalorder %s89, %s90
    %p102 = scmp.eq.s32.totalorder %s17, 1
    %p103 = por %p101, %p102
    %p105 = scmp.ne.s32.totalorder %s90, %s104
    %p106 = scmp.eq.s32.totalorder %s17, 0
    %p107 = por %p105, %p106
    %s109 = sadd.s32 %s108, 1
    %p112 = scmp.eq.s32.totalorder %s11, 1
    %p113 = scmp.ne.s32.totalorder %s108, %s110
    %p114 = scmp.eq.s32.totalorder %s11, 0
    %p115 = por %p113, %p114
    %p116 = scmp.ne.s32.totalorder %s108, %s110
    %p117 = scmp.eq.s32.totalorder %s16, 1
    %p118 = por %p116, %p117
    %p119 = scmp.ne.s32.totalorder %s110, %s111
    %p120 = scmp.eq.s32.totalorder %s16, 0
    %p121 = por %p119, %p120
    %p122 = scmp.ne.s32.totalorder %s110, %s111
    %p123 = scmp.eq.s32.totalorder %s17, 1
    %p124 = por %p122, %p123
    %p126 = scmp.ne.s32.totalorder %s111, %s125
    %p127 = scmp.eq.s32.totalorder %s17, 0
    %p128 = por %p126, %p127
    %s129 = ssub.s32 %s11, %s18
    %p130 = scmp.eq.s32.totalorder %s129, 0
    %s132 = sadd.s32 %s131, 1
    %s133 = scalar_select %p130, %s131, %s132
    %p136 = pneg %p130
    %p137 = scmp.eq.s32.totalorder %s11, 1
    %p138 = por %p136, %p137
    %p139 = scmp.ne.s32.totalorder %s131, %s134
    %p140 = scmp.eq.s32.totalorder %s11, 0
    %p141 = por %p139, %p140
    %p142 = scmp.ne.s32.totalorder %s131, %s134
    %p143 = scmp.eq.s32.totalorder %s16, 1
    %p144 = por %p142, %p143
    %p145 = scmp.ne.s32.totalorder %s134, %s135
    %p146 = scmp.eq.s32.totalorder %s16, 0
    %p147 = por %p145, %p146
    %p148 = scmp.ne.s32.totalorder %s134, %s135
    %p149 = scmp.eq.s32.totalorder %s17, 1
    %p150 = por %p148, %p149
    %p152 = scmp.ne.s32.totalorder %s135, %s151
    %p153 = scmp.eq.s32.totalorder %s17, 0
    %p154 = por %p152, %p153
    %p155 = scmp.le.s32.totalorder 1, %s11
    %p156 = scmp.lt.s32.totalorder %s11, 3
    %p157 = pnand %p155, %p156
    %p158 = pneg %p157
    // Predicated region
    $region9: #{clip_featurizer_forward.14} parent=5 // pred_check
      _
    $region10: #{clip_featurizer_forward.14} parent=5 // pred_check_branch
      %160 = sbr.rel (%p157) target = $region12
    $region11: #{clip_featurizer_forward.14} parent=5 // pred_region
      %s161 = ssub.s32 %s11, 1
      // Predicated region
      $region13: #{clip_featurizer_forward.14} parent=11 // pred_check
        %p162 = pneg %p58
      $region14: #{clip_featurizer_forward.14} parent=11 // pred_check_branch
        %164 = sbr.rel (%p162) target = $region16
      $region15: #{clip_featurizer_forward.14} parent=11 // pred_region
        _
      $region16: #{clip_featurizer_forward.14} parent=11 // pred_fallthru
        _
      // Predicated region
      $region17: #{clip_featurizer_forward.14} parent=11 // pred_check
        %p165 = pneg %p79
      $region18: #{clip_featurizer_forward.14} parent=11 // pred_check_branch
        %167 = sbr.rel (%p165) target = $region20
      $region19: #{clip_featurizer_forward.14} parent=11 // pred_region
        _
      $region20: #{clip_featurizer_forward.14} parent=11 // pred_fallthru
        _
      // Predicated region
      $region21: #{clip_featurizer_forward.14} parent=11 // pred_check
        %p168 = pneg %p100
      $region22: #{clip_featurizer_forward.14} parent=11 // pred_check_branch
        %170 = sbr.rel (%p168) target = $region24
      $region23: #{clip_featurizer_forward.14} parent=11 // pred_region
        _
      $region24: #{clip_featurizer_forward.14} parent=11 // pred_fallthru
        _
      // Predicated region
      $region25: #{clip_featurizer_forward.14} parent=11 // pred_check
        %p171 = pneg %p121
      $region26: #{clip_featurizer_forward.14} parent=11 // pred_check_branch
        %173 = sbr.rel (%p171) target = $region28
      $region27: #{clip_featurizer_forward.14} parent=11 // pred_region
        _
      $region28: #{clip_featurizer_forward.14} parent=11 // pred_fallthru
        _
    $region12: #{clip_featurizer_forward.14} parent=5 // pred_fallthru
      _
    %p174 = scmp.lt.s32.totalorder %s11, 2
    // Predicated region
    $region29: #{clip_featurizer_forward.14} parent=5 // pred_check
      %p175 = pneg %p174
    $region30: #{clip_featurizer_forward.14} parent=5 // pred_check_branch
      %177 = sbr.rel (%p175) target = $region32
    $region31: #{clip_featurizer_forward.14} parent=5 // pred_region
      // Predicated region
      $region33: #{clip_featurizer_forward.14} parent=31 // pred_check
        %p178 = pneg %p31
      $region34: #{clip_featurizer_forward.14} parent=31 // pred_check_branch
        %180 = sbr.rel (%p178) target = $region36
      $region35: #{clip_featurizer_forward.14} parent=31 // pred_region
        %p181 = scmp.lt.s32.totalorder %s11, 1
        %s182 = scalar_select %p181, %s11, 1
        %s183 = smul.addr %s182, 2
        %s184 = smul.addr %s183, 4
        %s185 = scalar_lea.vmem %s0, %s184
      $region36: #{clip_featurizer_forward.14} parent=31 // pred_fallthru
        _
    $region32: #{clip_featurizer_forward.14} parent=5 // pred_fallthru
      _
    %p186 = scmp.le.s32.totalorder 1, %s11
    %p187 = scmp.lt.s32.totalorder %s11, 3
    %p188 = pnand %p186, %p187
    %p189 = pneg %p188
    // Predicated region
    $region37: #{clip_featurizer_forward.14} parent=5 // pred_check
      _
    $region38: #{clip_featurizer_forward.14} parent=5 // pred_check_branch
      %191 = sbr.rel (%p188) target = $region40
    $region39: #{clip_featurizer_forward.14} parent=5 // pred_region
      %s192 = ssub.s32 %s11, 1
      %p193 = scmp.lt.s32.totalorder %s16, 1
      %s194 = scalar_select %p193, %s16, 1
      %s195 = smul.addr %s194, 2
      %s196 = smul.addr %s195, 4
      %s197 = scalar_lea.vmem %s0, %s196
      %p198 = pneg %p37
      %p199 = pneg %p34
      %p200 = pneg %p58
      %p201 = pneg %p55
      %p202 = pneg %p79
      %p203 = pneg %p76
      %p204 = pneg %p100
      %p205 = pneg %p97
      %p206 = pneg %p121
      %p207 = pneg %p118
      %p208 = pneg %p147
      %p209 = pneg %p144
      %p210 = scmp.lt.s32.totalorder %s16, 1
      %s211 = scalar_select %p210, %s16, 1
      %s212 = smul.addr %s211, 3
      %s213 = smul.addr %s212, 4
      %s214 = scalar_lea.vmem %s5, %s213
      %p215 = scmp.lt.s32.totalorder %s16, 1
      %s216 = scalar_select %p215, %s16, 1
      %s217 = smul.addr %s216, 2
      %s218 = smul.addr %s217, 4
      %s219 = scalar_lea.vmem %s0, %s218
      %p220 = scmp.lt.s32.totalorder %s16, 1
      %s221 = scalar_select %p220, %s16, 1
      %s222 = smul.addr %s221, 3
      %s223 = smul.addr %s222, 4
      %s224 = scalar_lea.vmem %s5, %s223
      %v225 = vld [vmem:[%s1] sm:$0x1]
      %v226 = vunpack.c.l.bf16 %v225
      %v227 = vld [vmem:[%s2] sm:$0x1]
      %v228 = vunpack.c.l.bf16 %v227
      %v229 = vadd.f32 %v226, %v228
      %v230 = vld [vmem:[%s219] sm:$0xf]
      %v231 = vld [vmem:[%s219 + $0x4] sm:$0xf]
      %v232 = vunpack.c.l.bf16 %v230
      %v233 = vunpack.c.l.bf16 %v231
      %v234 = vld [vmem:[%s2] sm:$0xf]
      %v235 = vld [vmem:[%s2 + $0x4] sm:$0xf]
      %v236 = vld [vmem:[%s2 + $0x8] sm:$0x1]
      %v237 = vunpack.c.l.bf16 %v234
      %v238 = vunpack.c.l.bf16 %v235
      %v239 = vunpack.c.l.bf16 %v236
      %vm243 = vcmask 1046528
      %v244 = vrot.slane %v237, 1
      %v245 = vrot.slane %v238, 1
      %v246 = vsel %vm243, %v244, %v245
      %v247 = vrot.slane %v239, 1
      %v248 = vsel %vm243, %v245, %v247
      %v251 = vadd.f32 %v232, %v246
      %v252 = vadd.f32 %v233, %v248
      %vm255 = vcmask 1040384
      %v256 = vrot.slane %v251, 7
      %v257 = vrot.slane %v252, 7
      %v258 = vsel %vm255, %v256, %v257
      %v262 = vsel %vm255, %v229, %v256
      %263 = vadd.xlane.f32.xlu0 %v262
      %v264 = vpop.xlane.xlu0 %263
      %265 = vadd.xlane.f32.xlu0 %v258
      %v266 = vpop.xlane.xlu0 %265
      %v267 = vsel %vm255, %v257, 0.0
      %268 = vadd.xlane.f32.xlu0 %v267
      %v269 = vpop.xlane.xlu0 %268
      %v270 = vrcp.pop 128.0
      %v271 = vmul.f32 %v264, %v270
      %v272 = vmul.f32 %v266, %v270
      %v273 = vmul.f32 %v269, %v270
      %v274 = vsub.f32 %v262, %v271
      %v275 = vsub.f32 %v258, %v272
      %v276 = vsub.f32 %v257, %v273
      %v277 = vmul.f32 %v274, %v274
      %v278 = vmul.f32 %v275, %v275
      %v279 = vmul.f32 %v276, %v276
      %280 = vadd.xlane.f32.xlu0 %v277
      %v281 = vpop.xlane.xlu0 %280
      %282 = vadd.xlane.f32.xlu0 %v278
      %v283 = vpop.xlane.xlu0 %282
      %v284 = vsel %vm255, %v279, 0.0
      %285 = vadd.xlane.f32.xlu0 %v284
      %v286 = vpop.xlane.xlu0 %285
      %v287 = vmul.f32 %v281, %v270
      %v288 = vmul.f32 %v283, %v270
      %v289 = vmul.f32 %v286, %v270
      %v290 = vadd.f32 %v287, 1e-05
      %v291 = vadd.f32 %v288, 1e-05
      %v292 = vadd.f32 %v289, 1e-05
      %v293 = vrsqrt.pop %v290
      %v294 = vrsqrt.pop %v291
      %v295 = vrsqrt.pop %v292
      %v296 = vmul.f32 %v274, %v293
      %v297 = vmul.f32 %v275, %v294
      %v298 = vmul.f32 %v276, %v295
      %v299 = vld [vmem:[%s3] sm:$0x1]
      %v301 = vlaneseq
      %v302 = vshrl.u32 %v301, 7
      %v303 = vsub.s32 0, %v302
      %v304 = vrot.slane %v299, %v303
      %v306 = vmul.f32 %v296, %v304
      %v307 = vmul.f32 %v297, %v304
      %v308 = vmul.f32 %v298, %v304
      %v309 = vld [vmem:[%s4] sm:$0x1]
      %v311 = vlaneseq
      %v312 = vshrl.u32 %v311, 7
      %v313 = vsub.s32 0, %v312
      %v314 = vrot.slane %v309, %v313
      %v316 = vadd.f32 %v306, %v314
      %v317 = vadd.f32 %v307, %v314
      %v318 = vadd.f32 %v308, %v314
      %v319 = vpack.c.bf16 %v317, %v316
      %v320 = vpack.c.bf16 %v318, %v318
      %v323 = vunpack.c.l.b16 %v319
      %v324 = vunpack.c.h.b16 %v319
      %v325 = vunpack.c.l.b16 %v320
      %v326 = vpack.c.b16 %v323, %v323
      %v327 = vpack.c.b16 %v324, %v324
      %v328 = vpack.c.b16 %v325, %v325
      %332 = vst [vmem:[%s224] sm:$0xf] %v326
      %333 = vst [vmem:[%s224 + $0x4] sm:$0xf] %v327
      %vm334 = vcmask 1040384
      %vm335 = vsmask.f32 256
      %vm336 = vmand %vm334, %vm335
      %v337 = vld [vmem:[%s224 + $0x8] sm:$0x1]
      %v338 = vsel %vm336, %v328, %v337
      %339 = vst [vmem:[%s224 + $0x8] sm:$0x1] %v338
      %p340 = scmp.lt.s32.totalorder %s16, 1
      %s341 = scalar_select %p340, %s16, 1
      %s342 = smul.addr %s341, 3
      %s343 = smul.addr %s342, 4
      %s344 = scalar_lea.vmem %s5, %s343
      // Predicated region
      $region41: #{clip_featurizer_forward.14} parent=39 // pred_check
        %p345 = pneg %p144
      $region42: #{clip_featurizer_forward.14} parent=39 // pred_check_branch
        %347 = sbr.rel (%p345) target = $region44
      $region43: #{clip_featurizer_forward.14} parent=39 // pred_region
        _
      $region44: #{clip_featurizer_forward.14} parent=39 // pred_fallthru
        _
    $region40: #{clip_featurizer_forward.14} parent=5 // pred_fallthru
      _
    %p348 = scmp.le.s32.totalorder 2, %s11
    // Predicated region
    $region45: #{clip_featurizer_forward.14} parent=5 // pred_check
      %p349 = pneg %p348
    $region46: #{clip_featurizer_forward.14} parent=5 // pred_check_branch
      %351 = sbr.rel (%p349) target = $region48
    $region47: #{clip_featurizer_forward.14} parent=5 // pred_region
      %s352 = ssub.s32 %s11, 2
      // Predicated region
      $region49: #{clip_featurizer_forward.14} parent=47 // pred_check
        %p353 = pneg %p150
      $region50: #{clip_featurizer_forward.14} parent=47 // pred_check_branch
        %355 = sbr.rel (%p353) target = $region52
      $region51: #{clip_featurizer_forward.14} parent=47 // pred_region
        %p356 = scmp.lt.s32.totalorder %s17, 1
        %s357 = scalar_select %p356, %s17, 1
        %s358 = smul.addr %s357, 3
        %s359 = smul.addr %s358, 4
        %s360 = scalar_lea.vmem %s5, %s359
      $region52: #{clip_featurizer_forward.14} parent=47 // pred_fallthru
        _
    $region48: #{clip_featurizer_forward.14} parent=5 // pred_fallthru
      _
  $region6: #{clip_featurizer_forward.14} parent=0 // loop_footer
    %s15 = sadd.s32 1, %s11
  $region7: #{clip_featurizer_forward.14} parent=0 // loop_footer_branch
    %10 = sbr.rel target = $region3
  $region8: #{clip_featurizer_forward.14} parent=0 // loop_exit
    _

// kernel: clip_featurizer_forward.13
$region0: #{clip_featurizer_forward.13}
  #allocation0 [shape = 'u32[]', space=smem, size = 0x4, offset = 0x4, fixed_abs, tag = 'smem constant byte address 0x4 - core index']
  #allocation1 [shape = 'u32[144,128]{1,0:T(1,128)}', space=vmem, size = 0x12000, scoped, tag = 'internal scratch']
  %s0 = inlined_call_operand.vmem [shape: bf16[32,768], index: 0, kind: input, shape index: {}]
  %s1 = inlined_call_operand.vmem [shape: bf16[768,128], index: 1, kind: input, shape index: {}]
  %s2 = inlined_call_operand.vmem [shape: f32[1,128], index: 2, kind: input, shape index: {}]
  %s3 = inlined_call_operand.vmem [shape: bf16[32,128], index: 3, kind: output, shape index: {}]
  %s4 = sld [smem:[#allocation0]]
  $region22: #{clip_featurizer_forward.13} parent=0
    _
  %s6 = ssub.s32 1, %s4
  %s7 = scalar_select 0, %s6, %s4
  // Predicated region
  $region2: #{clip_featurizer_forward.13} parent=0 // pred_check
    _
  $region3: #{clip_featurizer_forward.13} parent=0 // pred_check_branch
    %9 = sbr.rel (0) target = $region5
  $region4: #{clip_featurizer_forward.13} parent=0 // pred_region
    _
  $region5: #{clip_featurizer_forward.13} parent=0 // pred_fallthru
    _
  // Predicated region
  $region6: #{clip_featurizer_forward.13} parent=0 // pred_check
    _
  $region7: #{clip_featurizer_forward.13} parent=0 // pred_check_branch
    %11 = sbr.rel (0) target = $region9
  $region8: #{clip_featurizer_forward.13} parent=0 // pred_region
    _
  $region9: #{clip_featurizer_forward.13} parent=0 // pred_fallthru
    _
  // Predicated region
  $region10: #{clip_featurizer_forward.13} parent=0 // pred_check
    _
  $region11: #{clip_featurizer_forward.13} parent=0 // pred_check_branch
    %13 = sbr.rel (0) target = $region13
  $region12: #{clip_featurizer_forward.13} parent=0 // pred_region
    _
  $region13: #{clip_featurizer_forward.13} parent=0 // pred_fallthru
    _
  %v15 = vld [vmem:[%s0] sm:$0xff]
  %v16 = vld [vmem:[%s0 + $0x8] sm:$0xff]
  %v17 = vld [vmem:[%s0 + $0x10] sm:$0xff]
  %v18 = vld [vmem:[%s0 + $0x18] sm:$0xff]
  %v19 = vld [vmem:[%s0 + $0x20] sm:$0xff]
  %v20 = vld [vmem:[%s0 + $0x28] sm:$0xff]
  %v21 = vld [vmem:[%s0 + $0x30] sm:$0xff]
  %v22 = vld [vmem:[%s0 + $0x38] sm:$0xff]
  %v23 = vld [vmem:[%s0 + $0x40] sm:$0xff]
  %v24 = vld [vmem:[%s0 + $0x48] sm:$0xff]
  %v25 = vld [vmem:[%s0 + $0x50] sm:$0xff]
  %v26 = vld [vmem:[%s0 + $0x58] sm:$0xff]
  %v27 = vld [vmem:[%s1] sm:$0xf]
  %v28 = vld [vmem:[%s1 + $0x4] sm:$0xf]
  %v29 = vld [vmem:[%s1 + $0x8] sm:$0xf]
  %v30 = vld [vmem:[%s1 + $0xc] sm:$0xf]
  %v31 = vld [vmem:[%s1 + $0x10] sm:$0xf]
  %v32 = vld [vmem:[%s1 + $0x14] sm:$0xf]
  %v33 = vld [vmem:[%s1 + $0x18] sm:$0xf]
  %v34 = vld [vmem:[%s1 + $0x1c] sm:$0xf]
  %v35 = vld [vmem:[%s1 + $0x20] sm:$0xf]
  %v36 = vld [vmem:[%s1 + $0x24] sm:$0xf]
  %v37 = vld [vmem:[%s1 + $0x28] sm:$0xf]
  %v38 = vld [vmem:[%s1 + $0x2c] sm:$0xf]
  %v39 = vld [vmem:[%s1 + $0x30] sm:$0xf]
  %v40 = vld [vmem:[%s1 + $0x34] sm:$0xf]
  %v41 = vld [vmem:[%s1 + $0x38] sm:$0xf]
  %v42 = vld [vmem:[%s1 + $0x3c] sm:$0xf]
  %v43 = vld [vmem:[%s1 + $0x40] sm:$0xf]
  %v44 = vld [vmem:[%s1 + $0x44] sm:$0xf]
  %v45 = vld [vmem:[%s1 + $0x48] sm:$0xf]
  %v46 = vld [vmem:[%s1 + $0x4c] sm:$0xf]
  %v47 = vld [vmem:[%s1 + $0x50] sm:$0xf]
  %v48 = vld [vmem:[%s1 + $0x54] sm:$0xf]
  %v49 = vld [vmem:[%s1 + $0x58] sm:$0xf]
  %v50 = vld [vmem:[%s1 + $0x5c] sm:$0xf]
  %v51 = vld [vmem:[%s1 + $0x60] sm:$0xf]
  %v52 = vld [vmem:[%s1 + $0x64] sm:$0xf]
  %v53 = vld [vmem:[%s1 + $0x68] sm:$0xf]
  %v54 = vld [vmem:[%s1 + $0x6c] sm:$0xf]
  %v55 = vld [vmem:[%s1 + $0x70] sm:$0xf]
  %v56 = vld [vmem:[%s1 + $0x74] sm:$0xf]
  %v57 = vld [vmem:[%s1 + $0x78] sm:$0xf]
  %v58 = vld [vmem:[%s1 + $0x7c] sm:$0xf]
  %v59 = vld [vmem:[%s1 + $0x80] sm:$0xf]
  %v60 = vld [vmem:[%s1 + $0x84] sm:$0xf]
  %v61 = vld [vmem:[%s1 + $0x88] sm:$0xf]
  %v62 = vld [vmem:[%s1 + $0x8c] sm:$0xf]
  %v63 = vld [vmem:[%s1 + $0x90] sm:$0xf]
  %v64 = vld [vmem:[%s1 + $0x94] sm:$0xf]
  %v65 = vld [vmem:[%s1 + $0x98] sm:$0xf]
  %v66 = vld [vmem:[%s1 + $0x9c] sm:$0xf]
  %v67 = vld [vmem:[%s1 + $0xa0] sm:$0xf]
  %v68 = vld [vmem:[%s1 + $0xa4] sm:$0xf]
  %v69 = vld [vmem:[%s1 + $0xa8] sm:$0xf]
  %v70 = vld [vmem:[%s1 + $0xac] sm:$0xf]
  %v71 = vld [vmem:[%s1 + $0xb0] sm:$0xf]
  %v72 = vld [vmem:[%s1 + $0xb4] sm:$0xf]
  %v73 = vld [vmem:[%s1 + $0xb8] sm:$0xf]
  %v74 = vld [vmem:[%s1 + $0xbc] sm:$0xf]
  %v75 = vld [vmem:[%s1 + $0xc0] sm:$0xf]
  %v76 = vld [vmem:[%s1 + $0xc4] sm:$0xf]
  %v77 = vld [vmem:[%s1 + $0xc8] sm:$0xf]
  %v78 = vld [vmem:[%s1 + $0xcc] sm:$0xf]
  %v79 = vld [vmem:[%s1 + $0xd0] sm:$0xf]
  %v80 = vld [vmem:[%s1 + $0xd4] sm:$0xf]
  %v81 = vld [vmem:[%s1 + $0xd8] sm:$0xf]
  %v82 = vld [vmem:[%s1 + $0xdc] sm:$0xf]
  %v83 = vld [vmem:[%s1 + $0xe0] sm:$0xf]
  %v84 = vld [vmem:[%s1 + $0xe4] sm:$0xf]
  %v85 = vld [vmem:[%s1 + $0xe8] sm:$0xf]
  %v86 = vld [vmem:[%s1 + $0xec] sm:$0xf]
  %v87 = vld [vmem:[%s1 + $0xf0] sm:$0xf]
  %v88 = vld [vmem:[%s1 + $0xf4] sm:$0xf]
  %v89 = vld [vmem:[%s1 + $0xf8] sm:$0xf]
  %v90 = vld [vmem:[%s1 + $0xfc] sm:$0xf]
  %v91 = vld [vmem:[%s1 + $0x100] sm:$0xf]
  %v92 = vld [vmem:[%s1 + $0x104] sm:$0xf]
  %v93 = vld [vmem:[%s1 + $0x108] sm:$0xf]
  %v94 = vld [vmem:[%s1 + $0x10c] sm:$0xf]
  %v95 = vld [vmem:[%s1 + $0x110] sm:$0xf]
  %v96 = vld [vmem:[%s1 + $0x114] sm:$0xf]
  %v97 = vld [vmem:[%s1 + $0x118] sm:$0xf]
  %v98 = vld [vmem:[%s1 + $0x11c] sm:$0xf]
  %v99 = vld [vmem:[%s1 + $0x120] sm:$0xf]
  %v100 = vld [vmem:[%s1 + $0x124] sm:$0xf]
  %v101 = vld [vmem:[%s1 + $0x128] sm:$0xf]
  %v102 = vld [vmem:[%s1 + $0x12c] sm:$0xf]
  %v103 = vld [vmem:[%s1 + $0x130] sm:$0xf]
  %v104 = vld [vmem:[%s1 + $0x134] sm:$0xf]
  %v105 = vld [vmem:[%s1 + $0x138] sm:$0xf]
  %v106 = vld [vmem:[%s1 + $0x13c] sm:$0xf]
  %v107 = vld [vmem:[%s1 + $0x140] sm:$0xf]
  %v108 = vld [vmem:[%s1 + $0x144] sm:$0xf]
  %v109 = vld [vmem:[%s1 + $0x148] sm:$0xf]
  %v110 = vld [vmem:[%s1 + $0x14c] sm:$0xf]
  %v111 = vld [vmem:[%s1 + $0x150] sm:$0xf]
  %v112 = vld [vmem:[%s1 + $0x154] sm:$0xf]
  %v113 = vld [vmem:[%s1 + $0x158] sm:$0xf]
  %v114 = vld [vmem:[%s1 + $0x15c] sm:$0xf]
  %v115 = vld [vmem:[%s1 + $0x160] sm:$0xf]
  %v116 = vld [vmem:[%s1 + $0x164] sm:$0xf]
  %v117 = vld [vmem:[%s1 + $0x168] sm:$0xf]
  %v118 = vld [vmem:[%s1 + $0x16c] sm:$0xf]
  %v119 = vld [vmem:[%s1 + $0x170] sm:$0xf]
  %v120 = vld [vmem:[%s1 + $0x174] sm:$0xf]
  %v121 = vld [vmem:[%s1 + $0x178] sm:$0xf]
  %v122 = vld [vmem:[%s1 + $0x17c] sm:$0xf]
  %v123 = vld [vmem:[%s2] sm:$0x1]
  %v125 = vlaneseq
  %v126 = vshrl.u32 %v125, 7
  %v127 = vsub.s32 0, %v126
  %v128 = vrot.slane %v123, %v127
  %v142 = vunpack.c.l.b16 %v15
  %v143 = vunpack.c.h.b16 %v15
  %v144 = vunpack.c.l.b16 %v16
  %v145 = vunpack.c.h.b16 %v16
  %v146 = vunpack.c.l.b16 %v17
  %v147 = vunpack.c.h.b16 %v17
  %v148 = vunpack.c.l.b16 %v18
  %v149 = vunpack.c.h.b16 %v18
  %v150 = vunpack.c.l.b16 %v19
  %v151 = vunpack.c.h.b16 %v19
  %v152 = vunpack.c.l.b16 %v20
  %v153 = vunpack.c.h.b16 %v20
  %v154 = vunpack.c.l.b16 %v21
  %v155 = vunpack.c.h.b16 %v21
  %v156 = vunpack.c.l.b16 %v22
  %v157 = vunpack.c.h.b16 %v22
  %v158 = vunpack.c.l.b16 %v23
  %v159 = vunpack.c.h.b16 %v23
  %v160 = vunpack.c.l.b16 %v24
  %v161 = vunpack.c.h.b16 %v24
  %v162 = vunpack.c.l.b16 %v25
  %v163 = vunpack.c.h.b16 %v25
  %v164 = vunpack.c.l.b16 %v26
  %v165 = vunpack.c.h.b16 %v26
  %v166 = vpack.c.b16 %v148, %v142
  %v167 = vpack.c.b16 %v149, %v143
  %v168 = vpack.c.b16 %v150, %v144
  %v169 = vpack.c.b16 %v151, %v145
  %v170 = vpack.c.b16 %v152, %v146
  %v171 = vpack.c.b16 %v153, %v147
  %v172 = vpack.c.b16 %v160, %v154
  %v173 = vpack.c.b16 %v161, %v155
  %v174 = vpack.c.b16 %v162, %v156
  %v175 = vpack.c.b16 %v163, %v157
  %v176 = vpack.c.b16 %v164, %v158
  %v177 = vpack.c.b16 %v165, %v159
  %v286 = vunpack.c.l.b16 %v27
  %v287 = vunpack.c.l.b16 %v28
  %v288 = vunpack.c.l.b16 %v29
  %v289 = vunpack.c.l.b16 %v30
  %v290 = vunpack.c.l.b16 %v31
  %v291 = vunpack.c.l.b16 %v32
  %v292 = vunpack.c.l.b16 %v33
  %v293 = vunpack.c.l.b16 %v34
  %v294 = vunpack.c.l.b16 %v35
  %v295 = vunpack.c.l.b16 %v36
  %v296 = vunpack.c.l.b16 %v37
  %v297 = vunpack.c.l.b16 %v38
  %v298 = vunpack.c.l.b16 %v39
  %v299 = vunpack.c.l.b16 %v40
  %v300 = vunpack.c.l.b16 %v41
  %v301 = vunpack.c.l.b16 %v42
  %v302 = vunpack.c.l.b16 %v43
  %v303 = vunpack.c.l.b16 %v44
  %v304 = vunpack.c.l.b16 %v45
  %v305 = vunpack.c.l.b16 %v46
  %v306 = vunpack.c.l.b16 %v47
  %v307 = vunpack.c.l.b16 %v48
  %v308 = vunpack.c.l.b16 %v49
  %v309 = vunpack.c.l.b16 %v50
  %v310 = vunpack.c.l.b16 %v51
  %v311 = vunpack.c.l.b16 %v52
  %v312 = vunpack.c.l.b16 %v53
  %v313 = vunpack.c.l.b16 %v54
  %v314 = vunpack.c.l.b16 %v55
  %v315 = vunpack.c.l.b16 %v56
  %v316 = vunpack.c.l.b16 %v57
  %v317 = vunpack.c.l.b16 %v58
  %v318 = vunpack.c.l.b16 %v59
  %v319 = vunpack.c.l.b16 %v60
  %v320 = vunpack.c.l.b16 %v61
  %v321 = vunpack.c.l.b16 %v62
  %v322 = vunpack.c.l.b16 %v63
  %v323 = vunpack.c.l.b16 %v64
  %v324 = vunpack.c.l.b16 %v65
  %v325 = vunpack.c.l.b16 %v66
  %v326 = vunpack.c.l.b16 %v67
  %v327 = vunpack.c.l.b16 %v68
  %v328 = vunpack.c.l.b16 %v69
  %v329 = vunpack.c.l.b16 %v70
  %v330 = vunpack.c.l.b16 %v71
  %v331 = vunpack.c.l.b16 %v72
  %v332 = vunpack.c.l.b16 %v73
  %v333 = vunpack.c.l.b16 %v74
  %v334 = vunpack.c.l.b16 %v75
  %v335 = vunpack.c.l.b16 %v76
  %v336 = vunpack.c.l.b16 %v77
  %v337 = vunpack.c.l.b16 %v78
  %v338 = vunpack.c.l.b16 %v79
  %v339 = vunpack.c.l.b16 %v80
  %v340 = vunpack.c.l.b16 %v81
  %v341 = vunpack.c.l.b16 %v82
  %v342 = vunpack.c.l.b16 %v83
  %v343 = vunpack.c.l.b16 %v84
  %v344 = vunpack.c.l.b16 %v85
  %v345 = vunpack.c.l.b16 %v86
  %v346 = vunpack.c.l.b16 %v87
  %v347 = vunpack.c.l.b16 %v88
  %v348 = vunpack.c.l.b16 %v89
  %v349 = vunpack.c.l.b16 %v90
  %v350 = vunpack.c.l.b16 %v91
  %v351 = vunpack.c.l.b16 %v92
  %v352 = vunpack.c.l.b16 %v93
  %v353 = vunpack.c.l.b16 %v94
  %v354 = vunpack.c.l.b16 %v95
  %v355 = vunpack.c.l.b16 %v96
  %v356 = vunpack.c.l.b16 %v97
  %v357 = vunpack.c.l.b16 %v98
  %v358 = vunpack.c.l.b16 %v99
  %v359 = vunpack.c.l.b16 %v100
  %v360 = vunpack.c.l.b16 %v101
  %v361 = vunpack.c.l.b16 %v102
  %v362 = vunpack.c.l.b16 %v103
  %v363 = vunpack.c.l.b16 %v104
  %v364 = vunpack.c.l.b16 %v105
  %v365 = vunpack.c.l.b16 %v106
  %v366 = vunpack.c.l.b16 %v107
  %v367 = vunpack.c.l.b16 %v108
  %v368 = vunpack.c.l.b16 %v109
  %v369 = vunpack.c.l.b16 %v110
  %v370 = vunpack.c.l.b16 %v111
  %v371 = vunpack.c.l.b16 %v112
  %v372 = vunpack.c.l.b16 %v113
  %v373 = vunpack.c.l.b16 %v114
  %v374 = vunpack.c.l.b16 %v115
  %v375 = vunpack.c.l.b16 %v116
  %v376 = vunpack.c.l.b16 %v117
  %v377 = vunpack.c.l.b16 %v118
  %v378 = vunpack.c.l.b16 %v119
  %v379 = vunpack.c.l.b16 %v120
  %v380 = vunpack.c.l.b16 %v121
  %v381 = vunpack.c.l.b16 %v122
  %v382 = vpack.c.b16 %v287, %v286
  %v383 = vpack.c.b16 %v289, %v288
  %v384 = vpack.c.b16 %v291, %v290
  %v385 = vpack.c.b16 %v293, %v292
  %v386 = vpack.c.b16 %v295, %v294
  %v387 = vpack.c.b16 %v297, %v296
  %v388 = vpack.c.b16 %v299, %v298
  %v389 = vpack.c.b16 %v301, %v300
  %v390 = vpack.c.b16 %v303, %v302
  %v391 = vpack.c.b16 %v305, %v304
  %v392 = vpack.c.b16 %v307, %v306
  %v393 = vpack.c.b16 %v309, %v308
  %v394 = vpack.c.b16 %v311, %v310
  %v395 = vpack.c.b16 %v313, %v312
  %v396 = vpack.c.b16 %v315, %v314
  %v397 = vpack.c.b16 %v317, %v316
  %v398 = vpack.c.b16 %v319, %v318
  %v399 = vpack.c.b16 %v321, %v320
  %v400 = vpack.c.b16 %v323, %v322
  %v401 = vpack.c.b16 %v325, %v324
  %v402 = vpack.c.b16 %v327, %v326
  %v403 = vpack.c.b16 %v329, %v328
  %v404 = vpack.c.b16 %v331, %v330
  %v405 = vpack.c.b16 %v333, %v332
  %v406 = vpack.c.b16 %v335, %v334
  %v407 = vpack.c.b16 %v337, %v336
  %v408 = vpack.c.b16 %v339, %v338
  %v409 = vpack.c.b16 %v341, %v340
  %v410 = vpack.c.b16 %v343, %v342
  %v411 = vpack.c.b16 %v345, %v344
  %v412 = vpack.c.b16 %v347, %v346
  %v413 = vpack.c.b16 %v349, %v348
  %v414 = vpack.c.b16 %v351, %v350
  %v415 = vpack.c.b16 %v353, %v352
  %v416 = vpack.c.b16 %v355, %v354
  %v417 = vpack.c.b16 %v357, %v356
  %v418 = vpack.c.b16 %v359, %v358
  %v419 = vpack.c.b16 %v361, %v360
  %v420 = vpack.c.b16 %v363, %v362
  %v421 = vpack.c.b16 %v365, %v364
  %v422 = vpack.c.b16 %v367, %v366
  %v423 = vpack.c.b16 %v369, %v368
  %v424 = vpack.c.b16 %v371, %v370
  %v425 = vpack.c.b16 %v373, %v372
  %v426 = vpack.c.b16 %v375, %v374
  %v427 = vpack.c.b16 %v377, %v376
  %v428 = vpack.c.b16 %v379, %v378
  %v429 = vpack.c.b16 %v381, %v380
  %478 = vmatprep.subr.bf16.mxu0 0
  %479 = vmatpush1.bf16.msra.mxu0 %v389
  %480 = vmatprep.subr.bf16.mxu0 0
  %481 = vmatpush1.bf16.msra.mxu0 %v388
  %482 = vmatprep.subr.bf16.mxu0 0
  %483 = vmatpush1.bf16.msra.mxu0 %v387
  %484 = vmatprep.subr.bf16.mxu0 0
  %485 = vmatpush1.bf16.msra.mxu0 %v386
  %486 = vmatprep.subr.bf16.mxu0 0
  %487 = vmatpush1.bf16.msra.mxu0 %v385
  %488 = vmatprep.subr.bf16.mxu0 0
  %489 = vmatpush1.bf16.msra.mxu0 %v384
  %490 = vmatprep.subr.bf16.mxu0 0
  %491 = vmatpush1.bf16.msra.mxu0 %v383
  %492 = vmatprep.subr.bf16.mxu0 0
  %493 = vmatpush1.bf16.msra.mxu0 %v382
  %494 = vmatprep.subr.bf16.mxu0 0
  %495 = vmatpush2.bf16.msra.mxu0 %v397
  %496 = vmatprep.subr.bf16.mxu0 0
  %497 = vmatpush2.bf16.msra.mxu0 %v396
  %498 = vmatprep.subr.bf16.mxu0 0
  %499 = vmatpush2.bf16.msra.mxu0 %v395
  %500 = vmatprep.subr.bf16.mxu0 0
  %501 = vmatpush2.bf16.msra.mxu0 %v394
  %502 = vmatprep.subr.bf16.mxu0 0
  %503 = vmatpush2.bf16.msra.mxu0 %v393
  %504 = vmatprep.subr.bf16.mxu0 0
  %505 = vmatpush2.bf16.msra.mxu0 %v392
  %506 = vmatprep.subr.bf16.mxu0 0
  %507 = vmatpush2.bf16.msra.mxu0 %v391
  %508 = vmatprep.subr.bf16.mxu0 0
  %509 = vmatpush2.bf16.msra.mxu0 %v390
  %510 = vmatprep.mubr.bf16.mxu0 %v167
  %511 = vmatmul.mubr.bf16.gmra.mxu0 %v166
  %v512 = vpop.f32.mrf.mxu0
  %v513 = vadd.f32 %v128, %v512
  %v514 = vpop.f32.mrf.mxu0
  %v515 = vpop.f32.mrf.mxu0
  %v516 = vadd.f32 %v128, %v515
  %v517 = vpop.f32.mrf.mxu0
  %518 = vmatprep.mubr.bf16.mxu0 %v173
  %519 = vmatmul.mubr.bf16.gmra.mxu0 %v172
  %v520 = vpop.f32.mrf.mxu0
  %v521 = vadd.f32 %v128, %v520
  %v522 = vpop.f32.mrf.mxu0
  %v523 = vpop.f32.mrf.mxu0
  %v524 = vadd.f32 %v128, %v523
  %v525 = vpop.f32.mrf.mxu0
  %526 = vdwg.mxu0
  %527 = vmatprep.subr.bf16.mxu0 0
  %528 = vmatpush1.bf16.msra.mxu0 %v405
  %529 = vmatprep.subr.bf16.mxu0 0
  %530 = vmatpush1.bf16.msra.mxu0 %v404
  %531 = vmatprep.subr.bf16.mxu0 0
  %532 = vmatpush1.bf16.msra.mxu0 %v403
  %533 = vmatprep.subr.bf16.mxu0 0
  %534 = vmatpush1.bf16.msra.mxu0 %v402
  %535 = vmatprep.subr.bf16.mxu0 0
  %536 = vmatpush1.bf16.msra.mxu0 %v401
  %537 = vmatprep.subr.bf16.mxu0 0
  %538 = vmatpush1.bf16.msra.mxu0 %v400
  %539 = vmatprep.subr.bf16.mxu0 0
  %540 = vmatpush1.bf16.msra.mxu0 %v399
  %541 = vmatprep.subr.bf16.mxu0 0
  %542 = vmatpush1.bf16.msra.mxu0 %v398
  %543 = vmatprep.subr.bf16.mxu0 0
  %544 = vmatpush2.bf16.msra.mxu0 %v413
  %545 = vmatprep.subr.bf16.mxu0 0
  %546 = vmatpush2.bf16.msra.mxu0 %v412
  %547 = vmatprep.subr.bf16.mxu0 0
  %548 = vmatpush2.bf16.msra.mxu0 %v411
  %549 = vmatprep.subr.bf16.mxu0 0
  %550 = vmatpush2.bf16.msra.mxu0 %v410
  %551 = vmatprep.subr.bf16.mxu0 0
  %552 = vmatpush2.bf16.msra.mxu0 %v409
  %553 = vmatprep.subr.bf16.mxu0 0
  %554 = vmatpush2.bf16.msra.mxu0 %v408
  %555 = vmatprep.subr.bf16.mxu0 0
  %556 = vmatpush2.bf16.msra.mxu0 %v407
  %557 = vmatprep.subr.bf16.mxu0 0
  %558 = vmatpush2.bf16.msra.mxu0 %v406
  %559 = vmatprep.mubr.bf16.mxu0 %v169
  %560 = vmatmul.mubr.bf16.gmra.mxu0 %v168
  %v561 = vpop.f32.mrf.mxu0
  %v562 = vadd.f32 %v513, %v561
  %v563 = vpop.f32.mrf.mxu0
  %v564 = vpop.f32.mrf.mxu0
  %v565 = vadd.f32 %v516, %v564
  %v566 = vpop.f32.mrf.mxu0
  %567 = vmatprep.mubr.bf16.mxu0 %v175
  %568 = vmatmul.mubr.bf16.gmra.mxu0 %v174
  %v569 = vpop.f32.mrf.mxu0
  %v570 = vadd.f32 %v521, %v569
  %v571 = vpop.f32.mrf.mxu0
  %v572 = vpop.f32.mrf.mxu0
  %v573 = vadd.f32 %v524, %v572
  %v574 = vpop.f32.mrf.mxu0
  %575 = vdwg.mxu0
  %576 = vmatprep.subr.bf16.mxu0 0
  %577 = vmatpush1.bf16.msra.mxu0 %v421
  %578 = vmatprep.subr.bf16.mxu0 0
  %579 = vmatpush1.bf16.msra.mxu0 %v420
  %580 = vmatprep.subr.bf16.mxu0 0
  %581 = vmatpush1.bf16.msra.mxu0 %v419
  %582 = vmatprep.subr.bf16.mxu0 0
  %583 = vmatpush1.bf16.msra.mxu0 %v418
  %584 = vmatprep.subr.bf16.mxu0 0
  %585 = vmatpush1.bf16.msra.mxu0 %v417
  %586 = vmatprep.subr.bf16.mxu0 0
  %587 = vmatpush1.bf16.msra.mxu0 %v416
  %588 = vmatprep.subr.bf16.mxu0 0
  %589 = vmatpush1.bf16.msra.mxu0 %v415
  %590 = vmatprep.subr.bf16.mxu0 0
  %591 = vmatpush1.bf16.msra.mxu0 %v414
  %592 = vmatprep.subr.bf16.mxu0 0
  %593 = vmatpush2.bf16.msra.mxu0 %v429
  %594 = vmatprep.subr.bf16.mxu0 0
  %595 = vmatpush2.bf16.msra.mxu0 %v428
  %596 = vmatprep.subr.bf16.mxu0 0
  %597 = vmatpush2.bf16.msra.mxu0 %v427
  %598 = vmatprep.subr.bf16.mxu0 0
  %599 = vmatpush2.bf16.msra.mxu0 %v426
  %600 = vmatprep.subr.bf16.mxu0 0
  %601 = vmatpush2.bf16.msra.mxu0 %v425
  %602 = vmatprep.subr.bf16.mxu0 0
  %603 = vmatpush2.bf16.msra.mxu0 %v424
  %604 = vmatprep.subr.bf16.mxu0 0
  %605 = vmatpush2.bf16.msra.mxu0 %v423
  %606 = vmatprep.subr.bf16.mxu0 0
  %607 = vmatpush2.bf16.msra.mxu0 %v422
  %608 = vmatprep.mubr.bf16.mxu0 %v171
  %609 = vmatmul.mubr.bf16.gmra.mxu0 %v170
  %v610 = vpop.f32.mrf.mxu0
  %v611 = vadd.f32 %v562, %v610
  %v612 = vpop.f32.mrf.mxu0
  %v613 = vpop.f32.mrf.mxu0
  %v614 = vadd.f32 %v565, %v613
  %v615 = vpop.f32.mrf.mxu0
  %616 = vmatprep.mubr.bf16.mxu0 %v177
  %617 = vmatmul.mubr.bf16.gmra.mxu0 %v176
  %v618 = vpop.f32.mrf.mxu0
  %v619 = vadd.f32 %v570, %v618
  %v620 = vpop.f32.mrf.mxu0
  %v621 = vpop.f32.mrf.mxu0
  %v622 = vadd.f32 %v573, %v621
  %v623 = vpop.f32.mrf.mxu0
  %624 = vdwg.mxu0
  %v625 = vpack.c.bf16 %v614, %v611
  %v626 = vpack.c.bf16 %v622, %v619
  %v629 = vunpack.c.l.b16 %v625
  %v630 = vunpack.c.h.b16 %v625
  %v631 = vunpack.c.l.b16 %v626
  %v632 = vunpack.c.h.b16 %v626
  %v633 = vpack.c.b16 %v629, %v629
  %v634 = vpack.c.b16 %v630, %v630
  %v635 = vpack.c.b16 %v631, %v631
  %v636 = vpack.c.b16 %v632, %v632
  %641 = vst [vmem:[%s3] sm:$0xf] %v633
  %642 = vst [vmem:[%s3 + $0x4] sm:$0xf] %v634
  %643 = vst [vmem:[%s3 + $0x8] sm:$0xf] %v635
  %644 = vst [vmem:[%s3 + $0xc] sm:$0xf] %v636
  // Predicated region
  $region14: #{clip_featurizer_forward.13} parent=0 // pred_check
    _
  $region15: #{clip_featurizer_forward.13} parent=0 // pred_check_branch
    %646 = sbr.rel (0) target = $region17
  $region16: #{clip_featurizer_forward.13} parent=0 // pred_region
    _
  $region17: #{clip_featurizer_forward.13} parent=0 // pred_fallthru
    _
  // Predicated region
  $region18: #{clip_featurizer_forward.13} parent=0 // pred_check
    _
  $region19: #{clip_featurizer_forward.13} parent=0 // pred_check_branch
    %648 = sbr.rel (0) target = $region21
  $region20: #{clip_featurizer_forward.13} parent=0 // pred_region
    _
  $region21: #{clip_featurizer_forward.13} parent=0 // pred_fallthru
    _

// kernel: clip_featurizer_forward.17
$region0: #{clip_featurizer_forward.17}
  #allocation0 [shape = 'u32[]', space=smem, size = 0x4, offset = 0x4, fixed_abs, tag = 'smem constant byte address 0x4 - core index']
  #allocation1 [shape = 'u32[144,128]{1,0:T(1,128)}', space=vmem, size = 0x12000, scoped, tag = 'internal scratch']
  %s0 = inlined_call_operand.vmem [shape: bf16[48,128], index: 0, kind: input, shape index: {}]
  %s1 = inlined_call_operand.vmem [shape: bf16[128,128], index: 1, kind: input, shape index: {}]
  %s2 = inlined_call_operand.vmem [shape: f32[1,128], index: 2, kind: input, shape index: {}]
  %s3 = inlined_call_operand.vmem [shape: bf16[48,128], index: 3, kind: input, shape index: {}]
  %s4 = inlined_call_operand.vmem [shape: bf16[48,128], index: 4, kind: output, shape index: {}]
  %s5 = sld [smem:[#allocation0]]
  $region26: #{clip_featurizer_forward.17} parent=0
    _
  %s7 = ssub.s32 1, %s5
  %s8 = scalar_select 0, %s7, %s5
  // Predicated region
  $region2: #{clip_featurizer_forward.17} parent=0 // pred_check
    _
  $region3: #{clip_featurizer_forward.17} parent=0 // pred_check_branch
    %10 = sbr.rel (0) target = $region5
  $region4: #{clip_featurizer_forward.17} parent=0 // pred_region
    _
  $region5: #{clip_featurizer_forward.17} parent=0 // pred_fallthru
    _
  // Predicated region
  $region6: #{clip_featurizer_forward.17} parent=0 // pred_check
    _
  $region7: #{clip_featurizer_forward.17} parent=0 // pred_check_branch
    %12 = sbr.rel (0) target = $region9
  $region8: #{clip_featurizer_forward.17} parent=0 // pred_region
    _
  $region9: #{clip_featurizer_forward.17} parent=0 // pred_fallthru
    _
  // Predicated region
  $region10: #{clip_featurizer_forward.17} parent=0 // pred_check
    _
  $region11: #{clip_featurizer_forward.17} parent=0 // pred_check_branch
    %14 = sbr.rel (0) target = $region13
  $region12: #{clip_featurizer_forward.17} parent=0 // pred_region
    _
  $region13: #{clip_featurizer_forward.17} parent=0 // pred_fallthru
    _
  // Predicated region
  $region14: #{clip_featurizer_forward.17} parent=0 // pred_check
    _
  $region15: #{clip_featurizer_forward.17} parent=0 // pred_check_branch
    %16 = sbr.rel (0) target = $region17
  $region16: #{clip_featurizer_forward.17} parent=0 // pred_region
    _
  $region17: #{clip_featurizer_forward.17} parent=0 // pred_fallthru
    _
  %v18 = vld [vmem:[%s0] sm:$0xf]
  %v19 = vld [vmem:[%s0 + $0x4] sm:$0xf]
  %v20 = vld [vmem:[%s0 + $0x8] sm:$0xf]
  %v21 = vld [vmem:[%s0 + $0xc] sm:$0xf]
  %v22 = vld [vmem:[%s0 + $0x10] sm:$0xf]
  %v23 = vld [vmem:[%s0 + $0x14] sm:$0xf]
  %v24 = vld [vmem:[%s1] sm:$0xf]
  %v25 = vld [vmem:[%s1 + $0x4] sm:$0xf]
  %v26 = vld [vmem:[%s1 + $0x8] sm:$0xf]
  %v27 = vld [vmem:[%s1 + $0xc] sm:$0xf]
  %v28 = vld [vmem:[%s1 + $0x10] sm:$0xf]
  %v29 = vld [vmem:[%s1 + $0x14] sm:$0xf]
  %v30 = vld [vmem:[%s1 + $0x18] sm:$0xf]
  %v31 = vld [vmem:[%s1 + $0x1c] sm:$0xf]
  %v32 = vld [vmem:[%s1 + $0x20] sm:$0xf]
  %v33 = vld [vmem:[%s1 + $0x24] sm:$0xf]
  %v34 = vld [vmem:[%s1 + $0x28] sm:$0xf]
  %v35 = vld [vmem:[%s1 + $0x2c] sm:$0xf]
  %v36 = vld [vmem:[%s1 + $0x30] sm:$0xf]
  %v37 = vld [vmem:[%s1 + $0x34] sm:$0xf]
  %v38 = vld [vmem:[%s1 + $0x38] sm:$0xf]
  %v39 = vld [vmem:[%s1 + $0x3c] sm:$0xf]
  %v40 = vld [vmem:[%s2] sm:$0x1]
  %v42 = vlaneseq
  %v43 = vshrl.u32 %v42, 7
  %v44 = vsub.s32 0, %v43
  %v45 = vrot.slane %v40, %v44
  %v53 = vunpack.c.l.b16 %v18
  %v54 = vunpack.c.l.b16 %v19
  %v55 = vunpack.c.l.b16 %v20
  %v56 = vunpack.c.l.b16 %v21
  %v57 = vunpack.c.l.b16 %v22
  %v58 = vunpack.c.l.b16 %v23
  %v59 = vpack.c.b16 %v54, %v53
  %v60 = vpack.c.b16 %v56, %v55
  %v61 = vpack.c.b16 %v58, %v57
  %v81 = vunpack.c.l.b16 %v24
  %v82 = vunpack.c.l.b16 %v25
  %v83 = vunpack.c.l.b16 %v26
  %v84 = vunpack.c.l.b16 %v27
  %v85 = vunpack.c.l.b16 %v28
  %v86 = vunpack.c.l.b16 %v29
  %v87 = vunpack.c.l.b16 %v30
  %v88 = vunpack.c.l.b16 %v31
  %v89 = vunpack.c.l.b16 %v32
  %v90 = vunpack.c.l.b16 %v33
  %v91 = vunpack.c.l.b16 %v34
  %v92 = vunpack.c.l.b16 %v35
  %v93 = vunpack.c.l.b16 %v36
  %v94 = vunpack.c.l.b16 %v37
  %v95 = vunpack.c.l.b16 %v38
  %v96 = vunpack.c.l.b16 %v39
  %v97 = vpack.c.b16 %v82, %v81
  %v98 = vpack.c.b16 %v84, %v83
  %v99 = vpack.c.b16 %v86, %v85
  %v100 = vpack.c.b16 %v88, %v87
  %v101 = vpack.c.b16 %v90, %v89
  %v102 = vpack.c.b16 %v92, %v91
  %v103 = vpack.c.b16 %v94, %v93
  %v104 = vpack.c.b16 %v96, %v95
  %113 = vmatprep.subr.bf16.mxu0 0
  %114 = vmatpush1.bf16.msra.mxu0 %v104
  %115 = vmatprep.subr.bf16.mxu0 0
  %116 = vmatpush1.bf16.msra.mxu0 %v103
  %117 = vmatprep.subr.bf16.mxu0 0
  %118 = vmatpush1.bf16.msra.mxu0 %v102
  %119 = vmatprep.subr.bf16.mxu0 0
  %120 = vmatpush1.bf16.msra.mxu0 %v101
  %121 = vmatprep.subr.bf16.mxu0 0
  %122 = vmatpush1.bf16.msra.mxu0 %v100
  %123 = vmatprep.subr.bf16.mxu0 0
  %124 = vmatpush1.bf16.msra.mxu0 %v99
  %125 = vmatprep.subr.bf16.mxu0 0
  %126 = vmatpush1.bf16.msra.mxu0 %v98
  %127 = vmatprep.subr.bf16.mxu0 0
  %128 = vmatpush1.bf16.msra.mxu0 %v97
  %129 = vmatprep.subr.bf16.mxu0 0
  %130 = vmatpush2.bf16.msra.mxu0 0
  %131 = vmatprep.subr.bf16.mxu0 0
  %132 = vmatpush2.bf16.msra.mxu0 0
  %133 = vmatprep.subr.bf16.mxu0 0
  %134 = vmatpush2.bf16.msra.mxu0 0
  %135 = vmatprep.subr.bf16.mxu0 0
  %136 = vmatpush2.bf16.msra.mxu0 0
  %137 = vmatprep.subr.bf16.mxu0 0
  %138 = vmatpush2.bf16.msra.mxu0 0
  %139 = vmatprep.subr.bf16.mxu0 0
  %140 = vmatpush2.bf16.msra.mxu0 0
  %141 = vmatprep.subr.bf16.mxu0 0
  %142 = vmatpush2.bf16.msra.mxu0 0
  %143 = vmatprep.subr.bf16.mxu0 0
  %144 = vmatpush2.bf16.msra.mxu0 0
  %145 = vmatprep.mubr.bf16.mxu0 0
  %146 = vmatmul.mubr.bf16.gmra.mxu0 %v59
  %v147 = vpop.f32.mrf.mxu0
  %v148 = vadd.f32 %v45, %v147
  %v149 = vpop.f32.mrf.mxu0
  %v150 = vpop.f32.mrf.mxu0
  %v151 = vadd.f32 %v45, %v150
  %v152 = vpop.f32.mrf.mxu0
  %153 = vmatprep.mubr.bf16.mxu0 0
  %154 = vmatmul.mubr.bf16.gmra.mxu0 %v60
  %v155 = vpop.f32.mrf.mxu0
  %v156 = vadd.f32 %v45, %v155
  %v157 = vpop.f32.mrf.mxu0
  %v158 = vpop.f32.mrf.mxu0
  %v159 = vadd.f32 %v45, %v158
  %v160 = vpop.f32.mrf.mxu0
  %161 = vmatprep.mubr.bf16.mxu0 0
  %162 = vmatmul.mubr.bf16.gmra.mxu0 %v61
  %v163 = vpop.f32.mrf.mxu0
  %v164 = vadd.f32 %v45, %v163
  %v165 = vpop.f32.mrf.mxu0
  %v166 = vpop.f32.mrf.mxu0
  %v167 = vadd.f32 %v45, %v166
  %v168 = vpop.f32.mrf.mxu0
  %169 = vdwg.mxu0
  %v170 = vld [vmem:[%s3] sm:$0xf]
  %v171 = vld [vmem:[%s3 + $0x4] sm:$0xf]
  %v172 = vld [vmem:[%s3 + $0x8] sm:$0xf]
  %v173 = vld [vmem:[%s3 + $0xc] sm:$0xf]
  %v174 = vld [vmem:[%s3 + $0x10] sm:$0xf]
  %v175 = vld [vmem:[%s3 + $0x14] sm:$0xf]
  %v176 = vunpack.c.l.bf16 %v170
  %v177 = vunpack.c.l.bf16 %v171
  %v178 = vunpack.c.l.bf16 %v172
  %v179 = vunpack.c.l.bf16 %v173
  %v180 = vunpack.c.l.bf16 %v174
  %v181 = vunpack.c.l.bf16 %v175
  %v182 = vadd.f32 %v148, %v176
  %v183 = vadd.f32 %v151, %v177
  %v184 = vadd.f32 %v156, %v178
  %v185 = vadd.f32 %v159, %v179
  %v186 = vadd.f32 %v164, %v180
  %v187 = vadd.f32 %v167, %v181
  %v188 = vpack.c.bf16 %v183, %v182
  %v189 = vpack.c.bf16 %v185, %v184
  %v190 = vpack.c.bf16 %v187, %v186
  %v194 = vunpack.c.l.b16 %v188
  %v195 = vunpack.c.h.b16 %v188
  %v196 = vunpack.c.l.b16 %v189
  %v197 = vunpack.c.h.b16 %v189
  %v198 = vunpack.c.l.b16 %v190
  %v199 = vunpack.c.h.b16 %v190
  %v200 = vpack.c.b16 %v194, %v194
  %v201 = vpack.c.b16 %v195, %v195
  %v202 = vpack.c.b16 %v196, %v196
  %v203 = vpack.c.b16 %v197, %v197
  %v204 = vpack.c.b16 %v198, %v198
  %v205 = vpack.c.b16 %v199, %v199
  %212 = vst [vmem:[%s4] sm:$0xf] %v200
  %213 = vst [vmem:[%s4 + $0x4] sm:$0xf] %v201
  %214 = vst [vmem:[%s4 + $0x8] sm:$0xf] %v202
  %215 = vst [vmem:[%s4 + $0xc] sm:$0xf] %v203
  %216 = vst [vmem:[%s4 + $0x10] sm:$0xf] %v204
  %217 = vst [vmem:[%s4 + $0x14] sm:$0xf] %v205
  // Predicated region
  $region18: #{clip_featurizer_forward.17} parent=0 // pred_check
    _
  $region19: #{clip_featurizer_forward.17} parent=0 // pred_check_branch
    %219 = sbr.rel (0) target = $region21
  $region20: #{clip_featurizer_forward.17} parent=0 // pred_region
    _
  $region21: #{clip_featurizer_forward.17} parent=0 // pred_fallthru
    _
  // Predicated region
  $region22: #{clip_featurizer_forward.17} parent=0 // pred_check
    _
  $region23: #{clip_featurizer_forward.17} parent=0 // pred_check_branch
    %221 = sbr.rel (0) target = $region25
  $region24: #{clip_featurizer_forward.17} parent=0 // pred_region
    _
  $region25: #{clip_featurizer_forward.17} parent=0 // pred_fallthru
    _

// kernel: clip_featurizer_forward.15
$region0: #{clip_featurizer_forward.15}
  #allocation0 [shape = 'u32[]', space=smem, size = 0x4, offset = 0x4, fixed_abs, tag = 'smem constant byte address 0x4 - core index']
  #allocation1 [shape = 'u32[144,128]{1,0:T(1,128)}', space=vmem, size = 0x12000, scoped, tag = 'internal scratch']
  #allocation2 [shape = 'bf16[48,128]{1,0:T(8,128)(2,1)}', space=vmem, size = 0x3000, scoped, tag = 'scratch operand']
  %s0 = inlined_call_operand.vmem [shape: bf16[48,128], index: 0, kind: input, shape index: {}]
  %s1 = inlined_call_operand.vmem [shape: f32[1,128], index: 1, kind: input, shape index: {}]
  %s2 = inlined_call_operand.vmem [shape: f32[1,128], index: 2, kind: input, shape index: {}]
  %s3 = inlined_call_operand.vmem [shape: bf16[128,384], index: 3, kind: input, shape index: {}]
  %s4 = inlined_call_operand.vmem [shape: f32[1,384], index: 4, kind: input, shape index: {}]
  %s5 = inlined_call_operand.vmem [shape: bf16[48,384], index: 5, kind: output, shape index: {}]
  %s6 = sld [smem:[#allocation0]]
  $region34: #{clip_featurizer_forward.15} parent=0
    _
  %s8 = ssub.s32 1, %s6
  %s9 = scalar_select 0, %s8, %s6
  // Predicated region
  $region2: #{clip_featurizer_forward.15} parent=0 // pred_check
    _
  $region3: #{clip_featurizer_forward.15} parent=0 // pred_check_branch
    %11 = sbr.rel (0) target = $region5
  $region4: #{clip_featurizer_forward.15} parent=0 // pred_region
    _
  $region5: #{clip_featurizer_forward.15} parent=0 // pred_fallthru
    _
  // Predicated region
  $region6: #{clip_featurizer_forward.15} parent=0 // pred_check
    _
  $region7: #{clip_featurizer_forward.15} parent=0 // pred_check_branch
    %13 = sbr.rel (0) target = $region9
  $region8: #{clip_featurizer_forward.15} parent=0 // pred_region
    _
  $region9: #{clip_featurizer_forward.15} parent=0 // pred_fallthru
    _
  // Predicated region
  $region10: #{clip_featurizer_forward.15} parent=0 // pred_check
    _
  $region11: #{clip_featurizer_forward.15} parent=0 // pred_check_branch
    %15 = sbr.rel (0) target = $region13
  $region12: #{clip_featurizer_forward.15} parent=0 // pred_region
    _
  $region13: #{clip_featurizer_forward.15} parent=0 // pred_fallthru
    _
  // Predicated region
  $region14: #{clip_featurizer_forward.15} parent=0 // pred_check
    _
  $region15: #{clip_featurizer_forward.15} parent=0 // pred_check_branch
    %17 = sbr.rel (0) target = $region17
  $region16: #{clip_featurizer_forward.15} parent=0 // pred_region
    _
  $region17: #{clip_featurizer_forward.15} parent=0 // pred_fallthru
    _
  // Predicated region
  $region18: #{clip_featurizer_forward.15} parent=0 // pred_check
    _
  $region19: #{clip_featurizer_forward.15} parent=0 // pred_check_branch
    %19 = sbr.rel (0) target = $region21
  $region20: #{clip_featurizer_forward.15} parent=0 // pred_region
    _
  $region21: #{clip_featurizer_forward.15} parent=0 // pred_fallthru
    _
  %p21 = scmp.eq.s32.totalorder 0, 0
  // Predicated region
  $region22: #{clip_featurizer_forward.15} parent=0 // pred_check
    %p22 = pneg %p21
  $region23: #{clip_featurizer_forward.15} parent=0 // pred_check_branch
    %24 = sbr.rel (%p22) target = $region25
  $region24: #{clip_featurizer_forward.15} parent=0 // pred_region
    %v25 = vld [vmem:[%s0] sm:$0xf]
    %v26 = vld [vmem:[%s0 + $0x4] sm:$0xf]
    %v27 = vld [vmem:[%s0 + $0x8] sm:$0xf]
    %v28 = vld [vmem:[%s0 + $0xc] sm:$0xf]
    %v29 = vld [vmem:[%s0 + $0x10] sm:$0xf]
    %v30 = vld [vmem:[%s0 + $0x14] sm:$0xf]
    %v31 = vunpack.c.l.bf16 %v25
    %v32 = vunpack.c.l.bf16 %v26
    %v33 = vunpack.c.l.bf16 %v27
    %v34 = vunpack.c.l.bf16 %v28
    %v35 = vunpack.c.l.bf16 %v29
    %v36 = vunpack.c.l.bf16 %v30
    %37 = vadd.xlane.f32.xlu0 %v31
    %v38 = vpop.xlane.xlu0 %37
    %39 = vadd.xlane.f32.xlu0 %v32
    %v40 = vpop.xlane.xlu0 %39
    %41 = vadd.xlane.f32.xlu0 %v33
    %v42 = vpop.xlane.xlu0 %41
    %43 = vadd.xlane.f32.xlu0 %v34
    %v44 = vpop.xlane.xlu0 %43
    %45 = vadd.xlane.f32.xlu0 %v35
    %v46 = vpop.xlane.xlu0 %45
    %47 = vadd.xlane.f32.xlu0 %v36
    %v48 = vpop.xlane.xlu0 %47
    %v49 = vrcp.pop 128.0
    %v50 = vmul.f32 %v38, %v49
    %v51 = vmul.f32 %v40, %v49
    %v52 = vmul.f32 %v42, %v49
    %v53 = vmul.f32 %v44, %v49
    %v54 = vmul.f32 %v46, %v49
    %v55 = vmul.f32 %v48, %v49
    %v56 = vsub.f32 %v31, %v50
    %v57 = vsub.f32 %v32, %v51
    %v58 = vsub.f32 %v33, %v52
    %v59 = vsub.f32 %v34, %v53
    %v60 = vsub.f32 %v35, %v54
    %v61 = vsub.f32 %v36, %v55
    %v62 = vmul.f32 %v56, %v56
    %v63 = vmul.f32 %v57, %v57
    %v64 = vmul.f32 %v58, %v58
    %v65 = vmul.f32 %v59, %v59
    %v66 = vmul.f32 %v60, %v60
    %v67 = vmul.f32 %v61, %v61
    %68 = vadd.xlane.f32.xlu0 %v62
    %v69 = vpop.xlane.xlu0 %68
    %70 = vadd.xlane.f32.xlu0 %v63
    %v71 = vpop.xlane.xlu0 %70
    %72 = vadd.xlane.f32.xlu0 %v64
    %v73 = vpop.xlane.xlu0 %72
    %74 = vadd.xlane.f32.xlu0 %v65
    %v75 = vpop.xlane.xlu0 %74
    %76 = vadd.xlane.f32.xlu0 %v66
    %v77 = vpop.xlane.xlu0 %76
    %78 = vadd.xlane.f32.xlu0 %v67
    %v79 = vpop.xlane.xlu0 %78
    %v80 = vmul.f32 %v69, %v49
    %v81 = vmul.f32 %v71, %v49
    %v82 = vmul.f32 %v73, %v49
    %v83 = vmul.f32 %v75, %v49
    %v84 = vmul.f32 %v77, %v49
    %v85 = vmul.f32 %v79, %v49
    %v86 = vadd.f32 %v80, 1e-05
    %v87 = vadd.f32 %v81, 1e-05
    %v88 = vadd.f32 %v82, 1e-05
    %v89 = vadd.f32 %v83, 1e-05
    %v90 = vadd.f32 %v84, 1e-05
    %v91 = vadd.f32 %v85, 1e-05
    %v92 = vrsqrt.pop %v86
    %v93 = vrsqrt.pop %v87
    %v94 = vrsqrt.pop %v88
    %v95 = vrsqrt.pop %v89
    %v96 = vrsqrt.pop %v90
    %v97 = vrsqrt.pop %v91
    %v98 = vmul.f32 %v56, %v92
    %v99 = vmul.f32 %v57, %v93
    %v100 = vmul.f32 %v58, %v94
    %v101 = vmul.f32 %v59, %v95
    %v102 = vmul.f32 %v60, %v96
    %v103 = vmul.f32 %v61, %v97
    %v104 = vld [vmem:[%s1] sm:$0x1]
    %v106 = vlaneseq
    %v107 = vshrl.u32 %v106, 7
    %v108 = vsub.s32 0, %v107
    %v109 = vrot.slane %v104, %v108
    %v111 = vmul.f32 %v98, %v109
    %v112 = vmul.f32 %v99, %v109
    %v113 = vmul.f32 %v100, %v109
    %v114 = vmul.f32 %v101, %v109
    %v115 = vmul.f32 %v102, %v109
    %v116 = vmul.f32 %v103, %v109
    %v117 = vld [vmem:[%s2] sm:$0x1]
    %v119 = vlaneseq
    %v120 = vshrl.u32 %v119, 7
    %v121 = vsub.s32 0, %v120
    %v122 = vrot.slane %v117, %v121
    %v124 = vadd.f32 %v111, %v122
    %v125 = vadd.f32 %v112, %v122
    %v126 = vadd.f32 %v113, %v122
    %v127 = vadd.f32 %v114, %v122
    %v128 = vadd.f32 %v115, %v122
    %v129 = vadd.f32 %v116, %v122
    %v130 = vpack.c.bf16 %v125, %v124
    %v131 = vpack.c.bf16 %v127, %v126
    %v132 = vpack.c.bf16 %v129, %v128
    %v136 = vunpack.c.l.b16 %v130
    %v137 = vunpack.c.h.b16 %v130
    %v138 = vunpack.c.l.b16 %v131
    %v139 = vunpack.c.h.b16 %v131
    %v140 = vunpack.c.l.b16 %v132
    %v141 = vunpack.c.h.b16 %v132
    %v142 = vpack.c.b16 %v136, %v136
    %v143 = vpack.c.b16 %v137, %v137
    %v144 = vpack.c.b16 %v138, %v138
    %v145 = vpack.c.b16 %v139, %v139
    %v146 = vpack.c.b16 %v140, %v140
    %v147 = vpack.c.b16 %v141, %v141
    %154 = vst [vmem:[#allocation2] sm:$0xf] %v142
    %155 = vst [vmem:[#allocation2 + $0x4] sm:$0xf] %v143
    %156 = vst [vmem:[#allocation2 + $0x8] sm:$0xf] %v144
    %157 = vst [vmem:[#allocation2 + $0xc] sm:$0xf] %v145
    %158 = vst [vmem:[#allocation2 + $0x10] sm:$0xf] %v146
    %159 = vst [vmem:[#allocation2 + $0x14] sm:$0xf] %v147
  $region25: #{clip_featurizer_forward.15} parent=0 // pred_fallthru
    _
  %v160 = vld [vmem:[#allocation2] sm:$0xf]
  %v161 = vld [vmem:[#allocation2 + $0x4] sm:$0xf]
  %v162 = vld [vmem:[#allocation2 + $0x8] sm:$0xf]
  %v163 = vld [vmem:[#allocation2 + $0xc] sm:$0xf]
  %v164 = vld [vmem:[#allocation2 + $0x10] sm:$0xf]
  %v165 = vld [vmem:[#allocation2 + $0x14] sm:$0xf]
  %v166 = vld [vmem:[%s3] sm:$0xff]
  %v167 = vld [vmem:[%s3 + $0x8] sm:$0xf]
  %v168 = vld [vmem:[%s3 + $0xc] sm:$0xff]
  %v169 = vld [vmem:[%s3 + $0x14] sm:$0xf]
  %v170 = vld [vmem:[%s3 + $0x18] sm:$0xff]
  %v171 = vld [vmem:[%s3 + $0x20] sm:$0xf]
  %v172 = vld [vmem:[%s3 + $0x24] sm:$0xff]
  %v173 = vld [vmem:[%s3 + $0x2c] sm:$0xf]
  %v174 = vld [vmem:[%s3 + $0x30] sm:$0xff]
  %v175 = vld [vmem:[%s3 + $0x38] sm:$0xf]
  %v176 = vld [vmem:[%s3 + $0x3c] sm:$0xff]
  %v177 = vld [vmem:[%s3 + $0x44] sm:$0xf]
  %v178 = vld [vmem:[%s3 + $0x48] sm:$0xff]
  %v179 = vld [vmem:[%s3 + $0x50] sm:$0xf]
  %v180 = vld [vmem:[%s3 + $0x54] sm:$0xff]
  %v181 = vld [vmem:[%s3 + $0x5c] sm:$0xf]
  %v182 = vld [vmem:[%s3 + $0x60] sm:$0xff]
  %v183 = vld [vmem:[%s3 + $0x68] sm:$0xf]
  %v184 = vld [vmem:[%s3 + $0x6c] sm:$0xff]
  %v185 = vld [vmem:[%s3 + $0x74] sm:$0xf]
  %v186 = vld [vmem:[%s3 + $0x78] sm:$0xff]
  %v187 = vld [vmem:[%s3 + $0x80] sm:$0xf]
  %v188 = vld [vmem:[%s3 + $0x84] sm:$0xff]
  %v189 = vld [vmem:[%s3 + $0x8c] sm:$0xf]
  %v190 = vld [vmem:[%s3 + $0x90] sm:$0xff]
  %v191 = vld [vmem:[%s3 + $0x98] sm:$0xf]
  %v192 = vld [vmem:[%s3 + $0x9c] sm:$0xff]
  %v193 = vld [vmem:[%s3 + $0xa4] sm:$0xf]
  %v194 = vld [vmem:[%s3 + $0xa8] sm:$0xff]
  %v195 = vld [vmem:[%s3 + $0xb0] sm:$0xf]
  %v196 = vld [vmem:[%s3 + $0xb4] sm:$0xff]
  %v197 = vld [vmem:[%s3 + $0xbc] sm:$0xf]
  %v198 = vld [vmem:[%s4] sm:$0x7]
  %v200 = vlaneseq
  %v201 = vshrl.u32 %v200, 7
  %v202 = vsub.s32 0, %v201
  %v203 = vrot.slane %v198, %v202
  %v204 = vlaneseq
  %v205 = vshrl.u32 %v204, 7
  %v206 = vsub.s32 1, %v205
  %v207 = vrot.slane %v198, %v206
  %v208 = vlaneseq
  %v209 = vshrl.u32 %v208, 7
  %v210 = vsub.s32 2, %v209
  %v211 = vrot.slane %v198, %v210
  %v221 = vunpack.c.l.b16 %v160
  %v222 = vunpack.c.l.b16 %v161
  %v223 = vunpack.c.l.b16 %v162
  %v224 = vunpack.c.l.b16 %v163
  %v225 = vunpack.c.l.b16 %v164
  %v226 = vunpack.c.l.b16 %v165
  %v227 = vpack.c.b16 %v222, %v221
  %v228 = vpack.c.b16 %v224, %v223
  %v229 = vpack.c.b16 %v226, %v225
  %v265 = vunpack.c.l.b16 %v166
  %v266 = vunpack.c.h.b16 %v166
  %v267 = vunpack.c.l.b16 %v167
  %v268 = vunpack.c.l.b16 %v168
  %v269 = vunpack.c.h.b16 %v168
  %v270 = vunpack.c.l.b16 %v169
  %v271 = vunpack.c.l.b16 %v170
  %v272 = vunpack.c.h.b16 %v170
  %v273 = vunpack.c.l.b16 %v171
  %v274 = vunpack.c.l.b16 %v172
  %v275 = vunpack.c.h.b16 %v172
  %v276 = vunpack.c.l.b16 %v173
  %v277 = vunpack.c.l.b16 %v174
  %v278 = vunpack.c.h.b16 %v174
  %v279 = vunpack.c.l.b16 %v175
  %v280 = vunpack.c.l.b16 %v176
  %v281 = vunpack.c.h.b16 %v176
  %v282 = vunpack.c.l.b16 %v177
  %v283 = vunpack.c.l.b16 %v178
  %v284 = vunpack.c.h.b16 %v178
  %v285 = vunpack.c.l.b16 %v179
  %v286 = vunpack.c.l.b16 %v180
  %v287 = vunpack.c.h.b16 %v180
  %v288 = vunpack.c.l.b16 %v181
  %v289 = vunpack.c.l.b16 %v182
  %v290 = vunpack.c.h.b16 %v182
  %v291 = vunpack.c.l.b16 %v183
  %v292 = vunpack.c.l.b16 %v184
  %v293 = vunpack.c.h.b16 %v184
  %v294 = vunpack.c.l.b16 %v185
  %v295 = vunpack.c.l.b16 %v186
  %v296 = vunpack.c.h.b16 %v186
  %v297 = vunpack.c.l.b16 %v187
  %v298 = vunpack.c.l.b16 %v188
  %v299 = vunpack.c.h.b16 %v188
  %v300 = vunpack.c.l.b16 %v189
  %v301 = vunpack.c.l.b16 %v190
  %v302 = vunpack.c.h.b16 %v190
  %v303 = vunpack.c.l.b16 %v191
  %v304 = vunpack.c.l.b16 %v192
  %v305 = vunpack.c.h.b16 %v192
  %v306 = vunpack.c.l.b16 %v193
  %v307 = vunpack.c.l.b16 %v194
  %v308 = vunpack.c.h.b16 %v194
  %v309 = vunpack.c.l.b16 %v195
  %v310 = vunpack.c.l.b16 %v196
  %v311 = vunpack.c.h.b16 %v196
  %v312 = vunpack.c.l.b16 %v197
  %v313 = vpack.c.b16 %v268, %v265
  %v314 = vpack.c.b16 %v269, %v266
  %v315 = vpack.c.b16 %v270, %v267
  %v316 = vpack.c.b16 %v274, %v271
  %v317 = vpack.c.b16 %v275, %v272
  %v318 = vpack.c.b16 %v276, %v273
  %v319 = vpack.c.b16 %v280, %v277
  %v320 = vpack.c.b16 %v281, %v278
  %v321 = vpack.c.b16 %v282, %v279
  %v322 = vpack.c.b16 %v286, %v283
  %v323 = vpack.c.b16 %v287, %v284
  %v324 = vpack.c.b16 %v288, %v285
  %v325 = vpack.c.b16 %v292, %v289
  %v326 = vpack.c.b16 %v293, %v290
  %v327 = vpack.c.b16 %v294, %v291
  %v328 = vpack.c.b16 %v298, %v295
  %v329 = vpack.c.b16 %v299, %v296
  %v330 = vpack.c.b16 %v300, %v297
  %v331 = vpack.c.b16 %v304, %v301
  %v332 = vpack.c.b16 %v305, %v302
  %v333 = vpack.c.b16 %v306, %v303
  %v334 = vpack.c.b16 %v310, %v307
  %v335 = vpack.c.b16 %v311, %v308
  %v336 = vpack.c.b16 %v312, %v309
  %361 = vmatprep.subr.bf16.mxu0 %v335
  %362 = vmatpush1.bf16.msra.mxu0 %v334
  %363 = vmatprep.subr.bf16.mxu0 %v332
  %364 = vmatpush1.bf16.msra.mxu0 %v331
  %365 = vmatprep.subr.bf16.mxu0 %v329
  %366 = vmatpush1.bf16.msra.mxu0 %v328
  %367 = vmatprep.subr.bf16.mxu0 %v326
  %368 = vmatpush1.bf16.msra.mxu0 %v325
  %369 = vmatprep.subr.bf16.mxu0 %v323
  %370 = vmatpush1.bf16.msra.mxu0 %v322
  %371 = vmatprep.subr.bf16.mxu0 %v320
  %372 = vmatpush1.bf16.msra.mxu0 %v319
  %373 = vmatprep.subr.bf16.mxu0 %v317
  %374 = vmatpush1.bf16.msra.mxu0 %v316
  %375 = vmatprep.subr.bf16.mxu0 %v314
  %376 = vmatpush1.bf16.msra.mxu0 %v313
  %377 = vmatprep.subr.bf16.mxu0 0
  %378 = vmatpush2.bf16.msra.mxu0 0
  %379 = vmatprep.subr.bf16.mxu0 0
  %380 = vmatpush2.bf16.msra.mxu0 0
  %381 = vmatprep.subr.bf16.mxu0 0
  %382 = vmatpush2.bf16.msra.mxu0 0
  %383 = vmatprep.subr.bf16.mxu0 0
  %384 = vmatpush2.bf16.msra.mxu0 0
  %385 = vmatprep.subr.bf16.mxu0 0
  %386 = vmatpush2.bf16.msra.mxu0 0
  %387 = vmatprep.subr.bf16.mxu0 0
  %388 = vmatpush2.bf16.msra.mxu0 0
  %389 = vmatprep.subr.bf16.mxu0 0
  %390 = vmatpush2.bf16.msra.mxu0 0
  %391 = vmatprep.subr.bf16.mxu0 0
  %392 = vmatpush2.bf16.msra.mxu0 0
  %393 = vmatprep.mubr.bf16.mxu0 0
  %394 = vmatmul.mubr.bf16.gmra.mxu0 %v227
  %v395 = vpop.f32.mrf.mxu0
  %v396 = vadd.f32 %v203, %v395
  %v397 = vpop.f32.mrf.mxu0
  %v398 = vadd.f32 %v207, %v397
  %v399 = vpop.f32.mrf.mxu0
  %v400 = vadd.f32 %v203, %v399
  %v401 = vpop.f32.mrf.mxu0
  %v402 = vadd.f32 %v207, %v401
  %403 = vmatprep.mubr.bf16.mxu0 0
  %404 = vmatmul.mubr.bf16.gmra.mxu0 %v228
  %v405 = vpop.f32.mrf.mxu0
  %v406 = vadd.f32 %v203, %v405
  %v407 = vpop.f32.mrf.mxu0
  %v408 = vadd.f32 %v207, %v407
  %v409 = vpop.f32.mrf.mxu0
  %v410 = vadd.f32 %v203, %v409
  %v411 = vpop.f32.mrf.mxu0
  %v412 = vadd.f32 %v207, %v411
  %413 = vmatprep.mubr.bf16.mxu0 0
  %414 = vmatmul.mubr.bf16.gmra.mxu0 %v229
  %v415 = vpop.f32.mrf.mxu0
  %v416 = vadd.f32 %v203, %v415
  %v417 = vpop.f32.mrf.mxu0
  %v418 = vadd.f32 %v207, %v417
  %v419 = vpop.f32.mrf.mxu0
  %v420 = vadd.f32 %v203, %v419
  %v421 = vpop.f32.mrf.mxu0
  %v422 = vadd.f32 %v207, %v421
  %423 = vdwg.mxu0
  %424 = vmatprep.subr.bf16.mxu0 0
  %425 = vmatpush1.bf16.msra.mxu0 %v336
  %426 = vmatprep.subr.bf16.mxu0 0
  %427 = vmatpush1.bf16.msra.mxu0 %v333
  %428 = vmatprep.subr.bf16.mxu0 0
  %429 = vmatpush1.bf16.msra.mxu0 %v330
  %430 = vmatprep.subr.bf16.mxu0 0
  %431 = vmatpush1.bf16.msra.mxu0 %v327
  %432 = vmatprep.subr.bf16.mxu0 0
  %433 = vmatpush1.bf16.msra.mxu0 %v324
  %434 = vmatprep.subr.bf16.mxu0 0
  %435 = vmatpush1.bf16.msra.mxu0 %v321
  %436 = vmatprep.subr.bf16.mxu0 0
  %437 = vmatpush1.bf16.msra.mxu0 %v318
  %438 = vmatprep.subr.bf16.mxu0 0
  %439 = vmatpush1.bf16.msra.mxu0 %v315
  %440 = vmatprep.subr.bf16.mxu0 0
  %441 = vmatpush2.bf16.msra.mxu0 0
  %442 = vmatprep.subr.bf16.mxu0 0
  %443 = vmatpush2.bf16.msra.mxu0 0
  %444 = vmatprep.subr.bf16.mxu0 0
  %445 = vmatpush2.bf16.msra.mxu0 0
  %446 = vmatprep.subr.bf16.mxu0 0
  %447 = vmatpush2.bf16.msra.mxu0 0
  %448 = vmatprep.subr.bf16.mxu0 0
  %449 = vmatpush2.bf16.msra.mxu0 0
  %450 = vmatprep.subr.bf16.mxu0 0
  %451 = vmatpush2.bf16.msra.mxu0 0
  %452 = vmatprep.subr.bf16.mxu0 0
  %453 = vmatpush2.bf16.msra.mxu0 0
  %454 = vmatprep.subr.bf16.mxu0 0
  %455 = vmatpush2.bf16.msra.mxu0 0
  %456 = vmatprep.mubr.bf16.mxu0 0
  %457 = vmatmul.mubr.bf16.gmra.mxu0 %v227
  %v458 = vpop.f32.mrf.mxu0
  %v459 = vadd.f32 %v211, %v458
  %v460 = vpop.f32.mrf.mxu0
  %v461 = vpop.f32.mrf.mxu0
  %v462 = vadd.f32 %v211, %v461
  %v463 = vpop.f32.mrf.mxu0
  %464 = vmatprep.mubr.bf16.mxu0 0
  %465 = vmatmul.mubr.bf16.gmra.mxu0 %v228
  %v466 = vpop.f32.mrf.mxu0
  %v467 = vadd.f32 %v211, %v466
  %v468 = vpop.f32.mrf.mxu0
  %v469 = vpop.f32.mrf.mxu0
  %v470 = vadd.f32 %v211, %v469
  %v471 = vpop.f32.mrf.mxu0
  %472 = vmatprep.mubr.bf16.mxu0 0
  %473 = vmatmul.mubr.bf16.gmra.mxu0 %v229
  %v474 = vpop.f32.mrf.mxu0
  %v475 = vadd.f32 %v211, %v474
  %v476 = vpop.f32.mrf.mxu0
  %v477 = vpop.f32.mrf.mxu0
  %v478 = vadd.f32 %v211, %v477
  %v479 = vpop.f32.mrf.mxu0
  %480 = vdwg.mxu0
  %v481 = vpack.c.bf16 %v400, %v396
  %v482 = vpack.c.bf16 %v402, %v398
  %v483 = vpack.c.bf16 %v462, %v459
  %v484 = vpack.c.bf16 %v410, %v406
  %v485 = vpack.c.bf16 %v412, %v408
  %v486 = vpack.c.bf16 %v470, %v467
  %v487 = vpack.c.bf16 %v420, %v416
  %v488 = vpack.c.bf16 %v422, %v418
  %v489 = vpack.c.bf16 %v478, %v475
  %v499 = vunpack.c.l.b16 %v481
  %v500 = vunpack.c.l.b16 %v482
  %v501 = vunpack.c.l.b16 %v483
  %v502 = vunpack.c.h.b16 %v481
  %v503 = vunpack.c.h.b16 %v482
  %v504 = vunpack.c.h.b16 %v483
  %v505 = vunpack.c.l.b16 %v484
  %v506 = vunpack.c.l.b16 %v485
  %v507 = vunpack.c.l.b16 %v486
  %v508 = vunpack.c.h.b16 %v484
  %v509 = vunpack.c.h.b16 %v485
  %v510 = vunpack.c.h.b16 %v486
  %v511 = vunpack.c.l.b16 %v487
  %v512 = vunpack.c.l.b16 %v488
  %v513 = vunpack.c.l.b16 %v489
  %v514 = vunpack.c.h.b16 %v487
  %v515 = vunpack.c.h.b16 %v488
  %v516 = vunpack.c.h.b16 %v489
  %v517 = vpack.c.b16 %v500, %v499
  %v518 = vpack.c.b16 %v501, %v501
  %v519 = vpack.c.b16 %v503, %v502
  %v520 = vpack.c.b16 %v504, %v504
  %v521 = vpack.c.b16 %v506, %v505
  %v522 = vpack.c.b16 %v507, %v507
  %v523 = vpack.c.b16 %v509, %v508
  %v524 = vpack.c.b16 %v510, %v510
  %v525 = vpack.c.b16 %v512, %v511
  %v526 = vpack.c.b16 %v513, %v513
  %v527 = vpack.c.b16 %v515, %v514
  %v528 = vpack.c.b16 %v516, %v516
  %541 = vst [vmem:[%s5] sm:$0xff] %v517
  %542 = vst [vmem:[%s5 + $0x8] sm:$0xf] %v518
  %543 = vst [vmem:[%s5 + $0xc] sm:$0xff] %v519
  %544 = vst [vmem:[%s5 + $0x14] sm:$0xf] %v520
  %545 = vst [vmem:[%s5 + $0x18] sm:$0xff] %v521
  %546 = vst [vmem:[%s5 + $0x20] sm:$0xf] %v522
  %547 = vst [vmem:[%s5 + $0x24] sm:$0xff] %v523
  %548 = vst [vmem:[%s5 + $0x2c] sm:$0xf] %v524
  %549 = vst [vmem:[%s5 + $0x30] sm:$0xff] %v525
  %550 = vst [vmem:[%s5 + $0x38] sm:$0xf] %v526
  %551 = vst [vmem:[%s5 + $0x3c] sm:$0xff] %v527
  %552 = vst [vmem:[%s5 + $0x44] sm:$0xf] %v528
  // Predicated region
  $region26: #{clip_featurizer_forward.15} parent=0 // pred_check
    _
  $region27: #{clip_featurizer_forward.15} parent=0 // pred_check_branch
    %554 = sbr.rel (0) target = $region29
  $region28: #{clip_featurizer_forward.15} parent=0 // pred_region
    _
  $region29: #{clip_featurizer_forward.15} parent=0 // pred_fallthru
    _
  // Predicated region
  $region30: #{clip_featurizer_forward.15} parent=0 // pred_check
    _
  $region31: #{clip_featurizer_forward.15} parent=0 // pred_check_branch
    %556 = sbr.rel (0) target = $region33
  $region32: #{clip_featurizer_forward.15} parent=0 // pred_region
    _
  $region33: #{clip_featurizer_forward.15} parent=0 // pred_fallthru
    _

// kernel: clip_featurizer_forward.16
$region0: #{clip_featurizer_forward.16}
  #allocation0 [shape = 'u32[]', space=smem, size = 0x4, offset = 0x4, fixed_abs, tag = 'smem constant byte address 0x4 - core index']
  #allocation1 [shape = 'u32[144,128]{1,0:T(1,128)}', space=vmem, size = 0x12000, scoped, tag = 'internal scratch']
  %s0 = inlined_call_operand.vmem [shape: bf16[2,17,384], index: 0, kind: input, shape index: {}]
  %s1 = inlined_call_operand.vmem [shape: bf16[2,17,128], index: 1, kind: output, shape index: {}]
  %s2 = sld [smem:[#allocation0]]
  $region37: #{clip_featurizer_forward.16} parent=0
    _
  %s4 = ssub.s32 1, %s2
  %s5 = scalar_select 0, %s4, %s2
  loop: start=0, step=1, limit=4
  $region2: #{clip_featurizer_forward.16} parent=0 // loop_pre_header
    _
  $region3: #{clip_featurizer_forward.16} parent=0 // loop_header
    %s7 = sphi 0, %s11
    %p8 = scmp.ge.s32.totalorder %s7, 4
    %s17 = sphi 0, %s19
    %s20 = sphi 0, %s17
    %s21 = sphi 0, %s20
    %s37 = sphi 0, %s21
    %s43 = sphi 0, %s45
    %s46 = sphi 0, %s43
    %s47 = sphi 0, %s46
    %s63 = sphi 0, %s47
  $region4: #{clip_featurizer_forward.16} parent=0 // loop_header_branch
    %10 = sbr.rel (%p8) target = $region8
  $region5: #{clip_featurizer_forward.16} parent=0 // loop_body
    %s12 = ssub.s32 %s7, 1
    %s13 = ssub.s32 %s7, 2
    %s14 = sadd.s32 %s7, 1
    %s15 = ssub.s32 %s7, %s14
    %p16 = scmp.eq.s32.totalorder %s15, 0
    %s18 = sadd.s32 %s17, 1
    %s19 = scalar_select %p16, %s17, %s18
    %p22 = pneg %p16
    %p23 = scmp.eq.s32.totalorder %s7, 1
    %p24 = por %p22, %p23
    %p25 = scmp.ne.s32.totalorder %s17, %s20
    %p26 = scmp.eq.s32.totalorder %s7, 0
    %p27 = por %p25, %p26
    %p28 = scmp.ne.s32.totalorder %s17, %s20
    %p29 = scmp.eq.s32.totalorder %s12, 1
    %p30 = por %p28, %p29
    %p31 = scmp.ne.s32.totalorder %s20, %s21
    %p32 = scmp.eq.s32.totalorder %s12, 0
    %p33 = por %p31, %p32
    %p34 = scmp.ne.s32.totalorder %s20, %s21
    %p35 = scmp.eq.s32.totalorder %s13, 1
    %p36 = por %p34, %p35
    %p38 = scmp.ne.s32.totalorder %s21, %s37
    %p39 = scmp.eq.s32.totalorder %s13, 0
    %p40 = por %p38, %p39
    %s41 = ssub.s32 %s7, %s14
    %p42 = scmp.eq.s32.totalorder %s41, 0
    %s44 = sadd.s32 %s43, 1
    %s45 = scalar_select %p42, %s43, %s44
    %p48 = pneg %p42
    %p49 = scmp.eq.s32.totalorder %s7, 1
    %p50 = por %p48, %p49
    %p51 = scmp.ne.s32.totalorder %s43, %s46
    %p52 = scmp.eq.s32.totalorder %s7, 0
    %p53 = por %p51, %p52
    %p54 = scmp.ne.s32.totalorder %s43, %s46
    %p55 = scmp.eq.s32.totalorder %s12, 1
    %p56 = por %p54, %p55
    %p57 = scmp.ne.s32.totalorder %s46, %s47
    %p58 = scmp.eq.s32.totalorder %s12, 0
    %p59 = por %p57, %p58
    %p60 = scmp.ne.s32.totalorder %s46, %s47
    %p61 = scmp.eq.s32.totalorder %s13, 1
    %p62 = por %p60, %p61
    %p64 = scmp.ne.s32.totalorder %s47, %s63
    %p65 = scmp.eq.s32.totalorder %s13, 0
    %p66 = por %p64, %p65
    %p67 = scmp.le.s32.totalorder 1, %s7
    %p68 = scmp.lt.s32.totalorder %s7, 3
    %p69 = pnand %p67, %p68
    %p70 = pneg %p69
    // Predicated region
    $region9: #{clip_featurizer_forward.16} parent=5 // pred_check
      _
    $region10: #{clip_featurizer_forward.16} parent=5 // pred_check_branch
      %72 = sbr.rel (%p69) target = $region12
    $region11: #{clip_featurizer_forward.16} parent=5 // pred_region
      %s73 = ssub.s32 %s7, 1
    $region12: #{clip_featurizer_forward.16} parent=5 // pred_fallthru
      _
    %p74 = scmp.lt.s32.totalorder %s7, 2
    // Predicated region
    $region13: #{clip_featurizer_forward.16} parent=5 // pred_check
      %p75 = pneg %p74
    $region14: #{clip_featurizer_forward.16} parent=5 // pred_check_branch
      %77 = sbr.rel (%p75) target = $region16
    $region15: #{clip_featurizer_forward.16} parent=5 // pred_region
      // Predicated region
      $region17: #{clip_featurizer_forward.16} parent=15 // pred_check
        %p78 = pneg %p27
      $region18: #{clip_featurizer_forward.16} parent=15 // pred_check_branch
        %80 = sbr.rel (%p78) target = $region20
      $region19: #{clip_featurizer_forward.16} parent=15 // pred_region
        %p81 = scmp.lt.s32.totalorder %s7, 1
        %s82 = scalar_select %p81, %s7, 1
        %s83 = smul.addr %s82, 9
        %s84 = smul.addr %s83, 4
        %s85 = scalar_lea.vmem %s0, %s84
      $region20: #{clip_featurizer_forward.16} parent=15 // pred_fallthru
        _
    $region16: #{clip_featurizer_forward.16} parent=5 // pred_fallthru
      _
    %p86 = scmp.le.s32.totalorder 1, %s7
    %p87 = scmp.lt.s32.totalorder %s7, 3
    %p88 = pnand %p86, %p87
    %p89 = pneg %p88
    // Predicated region
    $region21: #{clip_featurizer_forward.16} parent=5 // pred_check
      _
    $region22: #{clip_featurizer_forward.16} parent=5 // pred_check_branch
      %91 = sbr.rel (%p88) target = $region24
    $region23: #{clip_featurizer_forward.16} parent=5 // pred_region
      %s92 = ssub.s32 %s7, 1
      %p93 = scmp.lt.s32.totalorder %s12, 1
      %s94 = scalar_select %p93, %s12, 1
      %s95 = smul.addr %s94, 9
      %s96 = smul.addr %s95, 4
      %s97 = scalar_lea.vmem %s0, %s96
      %p98 = pneg %p33
      %p99 = pneg %p30
      %p100 = pneg %p59
      %p101 = pneg %p56
      %p102 = scmp.lt.s32.totalorder %s12, 1
      %s103 = scalar_select %p102, %s12, 1
      %s104 = smul.addr %s103, 3
      %s105 = smul.addr %s104, 4
      %s106 = scalar_lea.vmem %s1, %s105
      %p107 = scmp.lt.s32.totalorder %s12, 1
      %s108 = scalar_select %p107, %s12, 1
      %s109 = smul.addr %s108, 9
      %s110 = smul.addr %s109, 4
      %s111 = scalar_lea.vmem %s0, %s110
      %p112 = scmp.lt.s32.totalorder %s12, 1
      %s113 = scalar_select %p112, %s12, 1
      %s114 = smul.addr %s113, 3
      %s115 = smul.addr %s114, 4
      %s116 = scalar_lea.vmem %s1, %s115
      %v118 = vld [vmem:[%s111] sm:$0xf]
      %v119 = vld [vmem:[%s111 + $0xc] sm:$0xf]
      %v120 = vld [vmem:[%s111 + $0x18] sm:$0x1]
      %v121 = vld [vmem:[%s111 + $0x4] sm:$0xf]
      %v122 = vld [vmem:[%s111 + $0x10] sm:$0xf]
      %v123 = vld [vmem:[%s111 + $0x1c] sm:$0x1]
      %v124 = vld [vmem:[%s111 + $0x8] sm:$0xf]
      %v125 = vld [vmem:[%s111 + $0x14] sm:$0xf]
      %v126 = vld [vmem:[%s111 + $0x20] sm:$0x1]
      %v127 = vunpack.c.l.bf16 %v118
      %v128 = vunpack.c.l.bf16 %v119
      %v129 = vunpack.c.l.bf16 %v120
      %v130 = vmul.f32 %v127, 0.125
      %v131 = vmul.f32 %v128, 0.125
      %v132 = vmul.f32 %v129, 0.125
      %v133 = vpack.c.bf16 %v131, %v130
      %v134 = vpack.c.bf16 %v132, %v132
      %v138 = vunpack.c.l.b16 %v121
      %v139 = vunpack.c.l.b16 %v122
      %v140 = vunpack.c.l.b16 %v123
      %v141 = vpack.c.b16 %v139, %v138
      %v142 = vpack.c.b16 %v140, %v140
      %vm143 = vcmask 523264
      %v145 = vsel %vm143, %v133, 0
      %v148 = vsel %vm143, %v134, 0
      %v151 = vsel %vm143, %v141, 0
      %v154 = vsel %vm143, %v142, 0
      %156 = vmatprep.subr.bf16.mxu0 0
      %157 = vmatpush1.bf16.xpose.msra.mxu0 0
      %158 = vmatprep.subr.bf16.mxu0 0
      %159 = vmatpush1.bf16.xpose.msra.mxu0 0
      %160 = vmatprep.subr.bf16.mxu0 0
      %161 = vmatpush1.bf16.xpose.msra.mxu0 0
      %162 = vmatprep.subr.bf16.mxu0 0
      %163 = vmatpush1.bf16.xpose.msra.mxu0 0
      %164 = vmatprep.subr.bf16.mxu0 0
      %165 = vmatpush1.bf16.xpose.msra.mxu0 0
      %166 = vmatprep.subr.bf16.mxu0 0
      %167 = vmatpush1.bf16.xpose.msra.mxu0 0
      %168 = vmatprep.subr.bf16.mxu0 0
      %169 = vmatpush1.bf16.xpose.msra.mxu0 %v154
      %170 = vmatprep.subr.bf16.mxu0 0
      %171 = vmatpush1.bf16.xpose.msra.mxu0 %v151
      %172 = vmatprep.subr.bf16.mxu0 0
      %173 = vmatpush2.bf16.xpose.msra.mxu0 0
      %174 = vmatprep.subr.bf16.mxu0 0
      %175 = vmatpush2.bf16.xpose.msra.mxu0 0
      %176 = vmatprep.subr.bf16.mxu0 0
      %177 = vmatpush2.bf16.xpose.msra.mxu0 0
      %178 = vmatprep.subr.bf16.mxu0 0
      %179 = vmatpush2.bf16.xpose.msra.mxu0 0
      %180 = vmatprep.subr.bf16.mxu0 0
      %181 = vmatpush2.bf16.xpose.msra.mxu0 0
      %182 = vmatprep.subr.bf16.mxu0 0
      %183 = vmatpush2.bf16.xpose.msra.mxu0 0
      %184 = vmatprep.subr.bf16.mxu0 0
      %185 = vmatpush2.bf16.xpose.msra.mxu0 0
      %186 = vmatprep.subr.bf16.mxu0 0
      %187 = vmatpush2.bf16.xpose.msra.mxu0 0
      %188 = vmatprep.mubr.bf16.mxu0 0
      %189 = vmatmul.mubr.bf16.gmra.mxu0 %v145
      %v190 = vpop.f32.mrf.mxu0
      %v191 = vadd.f32 0.0, %v190
      %v192 = vpop.f32.mrf.mxu0
      %v193 = vpop.f32.mrf.mxu0
      %v194 = vadd.f32 0.0, %v193
      %v195 = vpop.f32.mrf.mxu0
      %196 = vmatprep.mubr.bf16.mxu0 0
      %197 = vmatmul.mubr.bf16.gmra.mxu0 %v148
      %v198 = vpop.f32.mrf.mxu0
      %v199 = vadd.f32 0.0, %v198
      %v200 = vpop.f32.mrf.mxu0
      %v201 = vpop.f32.mrf.mxu0
      %v202 = vpop.f32.mrf.mxu0
      %203 = vdwg.mxu0
      %vm204 = vcmask 138240
      %v205 = vsel %vm204, %v191, -inf
      %206 = vmax.xlane.f32.xlu0 %v205
      %v207 = vpop.xlane.xlu0 %206
      %v208 = vsel %vm204, %v194, -inf
      %209 = vmax.xlane.f32.xlu0 %v208
      %v210 = vpop.xlane.xlu0 %209
      %vm211 = vcmask 131072
      %v212 = vsel %vm211, %v199, -inf
      %213 = vmax.xlane.f32.xlu0 %v212
      %v214 = vpop.xlane.xlu0 %213
      %v215 = vsub.f32 %v191, %v207
      %v216 = vsub.f32 %v194, %v210
      %v217 = vsub.f32 %v199, %v214
      %v218 = vmul.f32 %v215, 1.442695
      %v219 = vpow.pop %v218
      %v220 = vmul.f32 %v216, 1.442695
      %v221 = vpow.pop %v220
      %v222 = vmul.f32 %v217, 1.442695
      %v223 = vpow.pop %v222
      %v224 = vsel %vm204, %v219, 0.0
      %225 = vadd.xlane.f32.xlu0 %v224
      %v226 = vpop.xlane.xlu0 %225
      %v227 = vsel %vm204, %v221, 0.0
      %228 = vadd.xlane.f32.xlu0 %v227
      %v229 = vpop.xlane.xlu0 %228
      %v230 = vsel %vm211, %v223, 0.0
      %231 = vadd.xlane.f32.xlu0 %v230
      %v232 = vpop.xlane.xlu0 %231
      %v233 = vrcp.pop %v226
      %v234 = vrcp.pop %v229
      %v235 = vrcp.pop %v232
      %v236 = vmul.f32 %v219, %v233
      %v237 = vmul.f32 %v221, %v234
      %v238 = vmul.f32 %v223, %v235
      %v239 = vpack.c.bf16 %v237, %v236
      %v240 = vpack.c.bf16 %v238, %v238
      %v244 = vunpack.c.l.b16 %v124
      %v245 = vunpack.c.l.b16 %v125
      %v246 = vunpack.c.l.b16 %v126
      %v247 = vpack.c.b16 %v245, %v244
      %v248 = vpack.c.b16 %v246, %v246
      %v251 = vsel %vm204, %v239, 0
      %v254 = vsel %vm204, %v240, 0
      %vm256 = vcmask 1040384
      %v257 = vsel 0, 4294967295, 65535
      %v258 = vsel %vm256, %v257, 0
      %v260 = vand.u32 %v248, %v258
      %262 = vmatprep.subr.bf16.mxu0 0
      %263 = vmatpush1.bf16.msra.mxu0 0
      %264 = vmatprep.subr.bf16.mxu0 0
      %265 = vmatpush1.bf16.msra.mxu0 0
      %266 = vmatprep.subr.bf16.mxu0 0
      %267 = vmatpush1.bf16.msra.mxu0 0
      %268 = vmatprep.subr.bf16.mxu0 0
      %269 = vmatpush1.bf16.msra.mxu0 0
      %270 = vmatprep.subr.bf16.mxu0 0
      %271 = vmatpush1.bf16.msra.mxu0 0
      %272 = vmatprep.subr.bf16.mxu0 0
      %273 = vmatpush1.bf16.msra.mxu0 0
      %274 = vmatprep.subr.bf16.mxu0 0
      %275 = vmatpush1.bf16.msra.mxu0 %v260
      %276 = vmatprep.subr.bf16.mxu0 0
      %277 = vmatpush1.bf16.msra.mxu0 %v247
      %278 = vmatprep.subr.bf16.mxu0 0
      %279 = vmatpush2.bf16.msra.mxu0 0
      %280 = vmatprep.subr.bf16.mxu0 0
      %281 = vmatpush2.bf16.msra.mxu0 0
      %282 = vmatprep.subr.bf16.mxu0 0
      %283 = vmatpush2.bf16.msra.mxu0 0
      %284 = vmatprep.subr.bf16.mxu0 0
      %285 = vmatpush2.bf16.msra.mxu0 0
      %286 = vmatprep.subr.bf16.mxu0 0
      %287 = vmatpush2.bf16.msra.mxu0 0
      %288 = vmatprep.subr.bf16.mxu0 0
      %289 = vmatpush2.bf16.msra.mxu0 0
      %290 = vmatprep.subr.bf16.mxu0 0
      %291 = vmatpush2.bf16.msra.mxu0 0
      %292 = vmatprep.subr.bf16.mxu0 0
      %293 = vmatpush2.bf16.msra.mxu0 0
      %294 = vmatprep.mubr.bf16.mxu0 0
      %295 = vmatmul.mubr.bf16.gmra.mxu0 %v251
      %v296 = vpop.f32.mrf.mxu0
      %v297 = vadd.f32 0.0, %v296
      %v298 = vpop.f32.mrf.mxu0
      %v299 = vpop.f32.mrf.mxu0
      %v300 = vadd.f32 0.0, %v299
      %v301 = vpop.f32.mrf.mxu0
      %302 = vmatprep.mubr.bf16.mxu0 0
      %303 = vmatmul.mubr.bf16.gmra.mxu0 %v254
      %v304 = vpop.f32.mrf.mxu0
      %v305 = vadd.f32 0.0, %v304
      %v306 = vpop.f32.mrf.mxu0
      %v307 = vpop.f32.mrf.mxu0
      %v308 = vpop.f32.mrf.mxu0
      %309 = vdwg.mxu0
      %312 = vrot.lane.b32.xlu0 %v133, 64
      %v313 = vpop.permute.xlu0 %312
      %314 = vrot.lane.b32.xlu0 %v134, 64
      %v315 = vpop.permute.xlu0 %314
      %316 = vrot.lane.b32.xlu0 %v141, 64
      %v317 = vpop.permute.xlu0 %316
      %318 = vrot.lane.b32.xlu0 %v142, 64
      %v319 = vpop.permute.xlu0 %318
      %v321 = vsel %vm143, %v313, 0
      %v324 = vsel %vm143, %v315, 0
      %v327 = vsel %vm143, %v317, 0
      %v330 = vsel %vm143, %v319, 0
      %332 = vmatprep.subr.bf16.mxu0 0
      %333 = vmatpush1.bf16.xpose.msra.mxu0 0
      %334 = vmatprep.subr.bf16.mxu0 0
      %335 = vmatpush1.bf16.xpose.msra.mxu0 0
      %336 = vmatprep.subr.bf16.mxu0 0
      %337 = vmatpush1.bf16.xpose.msra.mxu0 0
      %338 = vmatprep.subr.bf16.mxu0 0
      %339 = vmatpush1.bf16.xpose.msra.mxu0 0
      %340 = vmatprep.subr.bf16.mxu0 0
      %341 = vmatpush1.bf16.xpose.msra.mxu0 0
      %342 = vmatprep.subr.bf16.mxu0 0
      %343 = vmatpush1.bf16.xpose.msra.mxu0 0
      %344 = vmatprep.subr.bf16.mxu0 0
      %345 = vmatpush1.bf16.xpose.msra.mxu0 %v330
      %346 = vmatprep.subr.bf16.mxu0 0
      %347 = vmatpush1.bf16.xpose.msra.mxu0 %v327
      %348 = vmatprep.subr.bf16.mxu0 0
      %349 = vmatpush2.bf16.xpose.msra.mxu0 0
      %350 = vmatprep.subr.bf16.mxu0 0
      %351 = vmatpush2.bf16.xpose.msra.mxu0 0
      %352 = vmatprep.subr.bf16.mxu0 0
      %353 = vmatpush2.bf16.xpose.msra.mxu0 0
      %354 = vmatprep.subr.bf16.mxu0 0
      %355 = vmatpush2.bf16.xpose.msra.mxu0 0
      %356 = vmatprep.subr.bf16.mxu0 0
      %357 = vmatpush2.bf16.xpose.msra.mxu0 0
      %358 = vmatprep.subr.bf16.mxu0 0
      %359 = vmatpush2.bf16.xpose.msra.mxu0 0
      %360 = vmatprep.subr.bf16.mxu0 0
      %361 = vmatpush2.bf16.xpose.msra.mxu0 0
      %362 = vmatprep.subr.bf16.mxu0 0
      %363 = vmatpush2.bf16.xpose.msra.mxu0 0
      %364 = vmatprep.mubr.bf16.mxu0 0
      %365 = vmatmul.mubr.bf16.gmra.mxu0 %v321
      %v366 = vpop.f32.mrf.mxu0
      %v367 = vadd.f32 0.0, %v366
      %v368 = vpop.f32.mrf.mxu0
      %v369 = vpop.f32.mrf.mxu0
      %v370 = vadd.f32 0.0, %v369
      %v371 = vpop.f32.mrf.mxu0
      %372 = vmatprep.mubr.bf16.mxu0 0
      %373 = vmatmul.mubr.bf16.gmra.mxu0 %v324
      %v374 = vpop.f32.mrf.mxu0
      %v375 = vadd.f32 0.0, %v374
      %v376 = vpop.f32.mrf.mxu0
      %v377 = vpop.f32.mrf.mxu0
      %v378 = vpop.f32.mrf.mxu0
      %379 = vdwg.mxu0
      %v380 = vsel %vm204, %v367, -inf
      %381 = vmax.xlane.f32.xlu0 %v380
      %v382 = vpop.xlane.xlu0 %381
      %v383 = vsel %vm204, %v370, -inf
      %384 = vmax.xlane.f32.xlu0 %v383
      %v385 = vpop.xlane.xlu0 %384
      %v386 = vsel %vm211, %v375, -inf
      %387 = vmax.xlane.f32.xlu0 %v386
      %v388 = vpop.xlane.xlu0 %387
      %v389 = vsub.f32 %v367, %v382
      %v390 = vsub.f32 %v370, %v385
      %v391 = vsub.f32 %v375, %v388
      %v392 = vmul.f32 %v389, 1.442695
      %v393 = vpow.pop %v392
      %v394 = vmul.f32 %v390, 1.442695
      %v395 = vpow.pop %v394
      %v396 = vmul.f32 %v391, 1.442695
      %v397 = vpow.pop %v396
      %v398 = vsel %vm204, %v393, 0.0
      %399 = vadd.xlane.f32.xlu0 %v398
      %v400 = vpop.xlane.xlu0 %399
      %v401 = vsel %vm204, %v395, 0.0
      %402 = vadd.xlane.f32.xlu0 %v401
      %v403 = vpop.xlane.xlu0 %402
      %v404 = vsel %vm211, %v397, 0.0
      %405 = vadd.xlane.f32.xlu0 %v404
      %v406 = vpop.xlane.xlu0 %405
      %v407 = vrcp.pop %v400
      %v408 = vrcp.pop %v403
      %v409 = vrcp.pop %v406
      %v410 = vmul.f32 %v393, %v407
      %v411 = vmul.f32 %v395, %v408
      %v412 = vmul.f32 %v397, %v409
      %v413 = vpack.c.bf16 %v411, %v410
      %v414 = vpack.c.bf16 %v412, %v412
      %415 = vrot.lane.b32.xlu0 %v247, 64
      %v416 = vpop.permute.xlu0 %415
      %417 = vrot.lane.b32.xlu0 %v248, 64
      %v418 = vpop.permute.xlu0 %417
      %v421 = vsel %vm204, %v413, 0
      %v424 = vsel %vm204, %v414, 0
      %v427 = vand.u32 %v418, %v258
      %429 = vmatprep.subr.bf16.mxu0 0
      %430 = vmatpush1.bf16.msra.mxu0 0
      %431 = vmatprep.subr.bf16.mxu0 0
      %432 = vmatpush1.bf16.msra.mxu0 0
      %433 = vmatprep.subr.bf16.mxu0 0
      %434 = vmatpush1.bf16.msra.mxu0 0
      %435 = vmatprep.subr.bf16.mxu0 0
      %436 = vmatpush1.bf16.msra.mxu0 0
      %437 = vmatprep.subr.bf16.mxu0 0
      %438 = vmatpush1.bf16.msra.mxu0 0
      %439 = vmatprep.subr.bf16.mxu0 0
      %440 = vmatpush1.bf16.msra.mxu0 0
      %441 = vmatprep.subr.bf16.mxu0 0
      %442 = vmatpush1.bf16.msra.mxu0 %v427
      %443 = vmatprep.subr.bf16.mxu0 0
      %444 = vmatpush1.bf16.msra.mxu0 %v416
      %445 = vmatprep.subr.bf16.mxu0 0
      %446 = vmatpush2.bf16.msra.mxu0 0
      %447 = vmatprep.subr.bf16.mxu0 0
      %448 = vmatpush2.bf16.msra.mxu0 0
      %449 = vmatprep.subr.bf16.mxu0 0
      %450 = vmatpush2.bf16.msra.mxu0 0
      %451 = vmatprep.subr.bf16.mxu0 0
      %452 = vmatpush2.bf16.msra.mxu0 0
      %453 = vmatprep.subr.bf16.mxu0 0
      %454 = vmatpush2.bf16.msra.mxu0 0
      %455 = vmatprep.subr.bf16.mxu0 0
      %456 = vmatpush2.bf16.msra.mxu0 0
      %457 = vmatprep.subr.bf16.mxu0 0
      %458 = vmatpush2.bf16.msra.mxu0 0
      %459 = vmatprep.subr.bf16.mxu0 0
      %460 = vmatpush2.bf16.msra.mxu0 0
      %461 = vmatprep.mubr.bf16.mxu0 0
      %462 = vmatmul.mubr.bf16.gmra.mxu0 %v421
      %v463 = vpop.f32.mrf.mxu0
      %v464 = vadd.f32 0.0, %v463
      %v465 = vpop.f32.mrf.mxu0
      %v466 = vpop.f32.mrf.mxu0
      %v467 = vadd.f32 0.0, %v466
      %v468 = vpop.f32.mrf.mxu0
      %469 = vmatprep.mubr.bf16.mxu0 0
      %470 = vmatmul.mubr.bf16.gmra.mxu0 %v424
      %v471 = vpop.f32.mrf.mxu0
      %v472 = vadd.f32 0.0, %v471
      %v473 = vpop.f32.mrf.mxu0
      %v474 = vpop.f32.mrf.mxu0
      %v475 = vpop.f32.mrf.mxu0
      %476 = vdwg.mxu0
      %480 = vrot.lane.b32.xlu0 %v464, 64
      %v481 = vpop.permute.xlu0 %480
      %482 = vrot.lane.b32.xlu0 %v467, 64
      %v483 = vpop.permute.xlu0 %482
      %484 = vrot.lane.b32.xlu0 %v472, 64
      %v485 = vpop.permute.xlu0 %484
      %v489 = vsel %vm143, %v297, %v481
      %v490 = vsel %vm143, %v300, %v483
      %v491 = vsel %vm143, %v305, %v485
      %v492 = vpack.c.bf16 %v490, %v489
      %v493 = vpack.c.bf16 %v491, %v491
      %v496 = vunpack.c.l.b16 %v492
      %v497 = vunpack.c.h.b16 %v492
      %v498 = vunpack.c.l.b16 %v493
      %v499 = vpack.c.b16 %v496, %v496
      %v500 = vpack.c.b16 %v497, %v497
      %v501 = vpack.c.b16 %v498, %v498
      %505 = vst [vmem:[%s116] sm:$0xf] %v499
      %506 = vst [vmem:[%s116 + $0x4] sm:$0xf] %v500
      %vm507 = vcmask 1040384
      %vm508 = vsmask.f32 256
      %vm509 = vmand %vm507, %vm508
      %v510 = vld [vmem:[%s116 + $0x8] sm:$0x1]
      %v511 = vsel %vm509, %v501, %v510
      %512 = vst [vmem:[%s116 + $0x8] sm:$0x1] %v511
      %p513 = scmp.lt.s32.totalorder %s12, 1
      %s514 = scalar_select %p513, %s12, 1
      %s515 = smul.addr %s514, 3
      %s516 = smul.addr %s515, 4
      %s517 = scalar_lea.vmem %s1, %s516
      // Predicated region
      $region25: #{clip_featurizer_forward.16} parent=23 // pred_check
        %p518 = pneg %p56
      $region26: #{clip_featurizer_forward.16} parent=23 // pred_check_branch
        %520 = sbr.rel (%p518) target = $region28
      $region27: #{clip_featurizer_forward.16} parent=23 // pred_region
        _
      $region28: #{clip_featurizer_forward.16} parent=23 // pred_fallthru
        _
    $region24: #{clip_featurizer_forward.16} parent=5 // pred_fallthru
      _
    %p521 = scmp.le.s32.totalorder 2, %s7
    // Predicated region
    $region29: #{clip_featurizer_forward.16} parent=5 // pred_check
      %p522 = pneg %p521
    $region30: #{clip_featurizer_forward.16} parent=5 // pred_check_branch
      %524 = sbr.rel (%p522) target = $region32
    $region31: #{clip_featurizer_forward.16} parent=5 // pred_region
      %s525 = ssub.s32 %s7, 2
      // Predicated region
      $region33: #{clip_featurizer_forward.16} parent=31 // pred_check
        %p526 = pneg %p62
      $region34: #{clip_featurizer_forward.16} parent=31 // pred_check_branch
        %528 = sbr.rel (%p526) target = $region36
      $region35: #{clip_featurizer_forward.16} parent=31 // pred_region
        %p529 = scmp.lt.s32.totalorder %s13, 1
        %s530 = scalar_select %p529, %s13, 1
        %s531 = smul.addr %s530, 3
        %s532 = smul.addr %s531, 4
        %s533 = scalar_lea.vmem %s1, %s532
      $region36: #{clip_featurizer_forward.16} parent=31 // pred_fallthru
        _
    $region32: #{clip_featurizer_forward.16} parent=5 // pred_fallthru
      _
  $region6: #{clip_featurizer_forward.16} parent=0 // loop_footer
    %s11 = sadd.s32 1, %s7
  $region7: #{clip_featurizer_forward.16} parent=0 // loop_footer_branch
    %6 = sbr.rel target = $region3
  $region8: #{clip_featurizer_forward.16} parent=0 // loop_exit
    _

// kernel: clip_featurizer_forward.18
$region0: #{clip_featurizer_forward.18}
  #allocation0 [shape = 'u32[]', space=smem, size = 0x4, offset = 0x4, fixed_abs, tag = 'smem constant byte address 0x4 - core index']
  #allocation1 [shape = 'u32[144,128]{1,0:T(1,128)}', space=vmem, size = 0x12000, scoped, tag = 'internal scratch']
  #allocation2 [shape = 'bf16[48,128]{1,0:T(8,128)(2,1)}', space=vmem, size = 0x3000, scoped, tag = 'scratch operand']
  %s0 = inlined_call_operand.vmem [shape: bf16[48,128], index: 0, kind: input, shape index: {}]
  %s1 = inlined_call_operand.vmem [shape: f32[1,128], index: 1, kind: input, shape index: {}]
  %s2 = inlined_call_operand.vmem [shape: f32[1,128], index: 2, kind: input, shape index: {}]
  %s3 = inlined_call_operand.vmem [shape: bf16[128,512], index: 3, kind: input, shape index: {}]
  %s4 = inlined_call_operand.vmem [shape: f32[1,512], index: 4, kind: input, shape index: {}]
  %s5 = inlined_call_operand.vmem [shape: bf16[48,512], index: 5, kind: output, shape index: {}]
  %s6 = sld [smem:[#allocation0]]
  $region34: #{clip_featurizer_forward.18} parent=0
    _
  %s8 = ssub.s32 1, %s6
  %s9 = scalar_select 0, %s8, %s6
  // Predicated region
  $region2: #{clip_featurizer_forward.18} parent=0 // pred_check
    _
  $region3: #{clip_featurizer_forward.18} parent=0 // pred_check_branch
    %11 = sbr.rel (0) target = $region5
  $region4: #{clip_featurizer_forward.18} parent=0 // pred_region
    _
  $region5: #{clip_featurizer_forward.18} parent=0 // pred_fallthru
    _
  // Predicated region
  $region6: #{clip_featurizer_forward.18} parent=0 // pred_check
    _
  $region7: #{clip_featurizer_forward.18} parent=0 // pred_check_branch
    %13 = sbr.rel (0) target = $region9
  $region8: #{clip_featurizer_forward.18} parent=0 // pred_region
    _
  $region9: #{clip_featurizer_forward.18} parent=0 // pred_fallthru
    _
  // Predicated region
  $region10: #{clip_featurizer_forward.18} parent=0 // pred_check
    _
  $region11: #{clip_featurizer_forward.18} parent=0 // pred_check_branch
    %15 = sbr.rel (0) target = $region13
  $region12: #{clip_featurizer_forward.18} parent=0 // pred_region
    _
  $region13: #{clip_featurizer_forward.18} parent=0 // pred_fallthru
    _
  // Predicated region
  $region14: #{clip_featurizer_forward.18} parent=0 // pred_check
    _
  $region15: #{clip_featurizer_forward.18} parent=0 // pred_check_branch
    %17 = sbr.rel (0) target = $region17
  $region16: #{clip_featurizer_forward.18} parent=0 // pred_region
    _
  $region17: #{clip_featurizer_forward.18} parent=0 // pred_fallthru
    _
  // Predicated region
  $region18: #{clip_featurizer_forward.18} parent=0 // pred_check
    _
  $region19: #{clip_featurizer_forward.18} parent=0 // pred_check_branch
    %19 = sbr.rel (0) target = $region21
  $region20: #{clip_featurizer_forward.18} parent=0 // pred_region
    _
  $region21: #{clip_featurizer_forward.18} parent=0 // pred_fallthru
    _
  %p21 = scmp.eq.s32.totalorder 0, 0
  // Predicated region
  $region22: #{clip_featurizer_forward.18} parent=0 // pred_check
    %p22 = pneg %p21
  $region23: #{clip_featurizer_forward.18} parent=0 // pred_check_branch
    %24 = sbr.rel (%p22) target = $region25
  $region24: #{clip_featurizer_forward.18} parent=0 // pred_region
    %v25 = vld [vmem:[%s0] sm:$0xf]
    %v26 = vld [vmem:[%s0 + $0x4] sm:$0xf]
    %v27 = vld [vmem:[%s0 + $0x8] sm:$0xf]
    %v28 = vld [vmem:[%s0 + $0xc] sm:$0xf]
    %v29 = vld [vmem:[%s0 + $0x10] sm:$0xf]
    %v30 = vld [vmem:[%s0 + $0x14] sm:$0xf]
    %v31 = vunpack.c.l.bf16 %v25
    %v32 = vunpack.c.l.bf16 %v26
    %v33 = vunpack.c.l.bf16 %v27
    %v34 = vunpack.c.l.bf16 %v28
    %v35 = vunpack.c.l.bf16 %v29
    %v36 = vunpack.c.l.bf16 %v30
    %37 = vadd.xlane.f32.xlu0 %v31
    %v38 = vpop.xlane.xlu0 %37
    %39 = vadd.xlane.f32.xlu0 %v32
    %v40 = vpop.xlane.xlu0 %39
    %41 = vadd.xlane.f32.xlu0 %v33
    %v42 = vpop.xlane.xlu0 %41
    %43 = vadd.xlane.f32.xlu0 %v34
    %v44 = vpop.xlane.xlu0 %43
    %45 = vadd.xlane.f32.xlu0 %v35
    %v46 = vpop.xlane.xlu0 %45
    %47 = vadd.xlane.f32.xlu0 %v36
    %v48 = vpop.xlane.xlu0 %47
    %v49 = vrcp.pop 128.0
    %v50 = vmul.f32 %v38, %v49
    %v51 = vmul.f32 %v40, %v49
    %v52 = vmul.f32 %v42, %v49
    %v53 = vmul.f32 %v44, %v49
    %v54 = vmul.f32 %v46, %v49
    %v55 = vmul.f32 %v48, %v49
    %v56 = vsub.f32 %v31, %v50
    %v57 = vsub.f32 %v32, %v51
    %v58 = vsub.f32 %v33, %v52
    %v59 = vsub.f32 %v34, %v53
    %v60 = vsub.f32 %v35, %v54
    %v61 = vsub.f32 %v36, %v55
    %v62 = vmul.f32 %v56, %v56
    %v63 = vmul.f32 %v57, %v57
    %v64 = vmul.f32 %v58, %v58
    %v65 = vmul.f32 %v59, %v59
    %v66 = vmul.f32 %v60, %v60
    %v67 = vmul.f32 %v61, %v61
    %68 = vadd.xlane.f32.xlu0 %v62
    %v69 = vpop.xlane.xlu0 %68
    %70 = vadd.xlane.f32.xlu0 %v63
    %v71 = vpop.xlane.xlu0 %70
    %72 = vadd.xlane.f32.xlu0 %v64
    %v73 = vpop.xlane.xlu0 %72
    %74 = vadd.xlane.f32.xlu0 %v65
    %v75 = vpop.xlane.xlu0 %74
    %76 = vadd.xlane.f32.xlu0 %v66
    %v77 = vpop.xlane.xlu0 %76
    %78 = vadd.xlane.f32.xlu0 %v67
    %v79 = vpop.xlane.xlu0 %78
    %v80 = vmul.f32 %v69, %v49
    %v81 = vmul.f32 %v71, %v49
    %v82 = vmul.f32 %v73, %v49
    %v83 = vmul.f32 %v75, %v49
    %v84 = vmul.f32 %v77, %v49
    %v85 = vmul.f32 %v79, %v49
    %v86 = vadd.f32 %v80, 1e-05
    %v87 = vadd.f32 %v81, 1e-05
    %v88 = vadd.f32 %v82, 1e-05
    %v89 = vadd.f32 %v83, 1e-05
    %v90 = vadd.f32 %v84, 1e-05
    %v91 = vadd.f32 %v85, 1e-05
    %v92 = vrsqrt.pop %v86
    %v93 = vrsqrt.pop %v87
    %v94 = vrsqrt.pop %v88
    %v95 = vrsqrt.pop %v89
    %v96 = vrsqrt.pop %v90
    %v97 = vrsqrt.pop %v91
    %v98 = vmul.f32 %v56, %v92
    %v99 = vmul.f32 %v57, %v93
    %v100 = vmul.f32 %v58, %v94
    %v101 = vmul.f32 %v59, %v95
    %v102 = vmul.f32 %v60, %v96
    %v103 = vmul.f32 %v61, %v97
    %v104 = vld [vmem:[%s1] sm:$0x1]
    %v106 = vlaneseq
    %v107 = vshrl.u32 %v106, 7
    %v108 = vsub.s32 0, %v107
    %v109 = vrot.slane %v104, %v108
    %v111 = vmul.f32 %v98, %v109
    %v112 = vmul.f32 %v99, %v109
    %v113 = vmul.f32 %v100, %v109
    %v114 = vmul.f32 %v101, %v109
    %v115 = vmul.f32 %v102, %v109
    %v116 = vmul.f32 %v103, %v109
    %v117 = vld [vmem:[%s2] sm:$0x1]
    %v119 = vlaneseq
    %v120 = vshrl.u32 %v119, 7
    %v121 = vsub.s32 0, %v120
    %v122 = vrot.slane %v117, %v121
    %v124 = vadd.f32 %v111, %v122
    %v125 = vadd.f32 %v112, %v122
    %v126 = vadd.f32 %v113, %v122
    %v127 = vadd.f32 %v114, %v122
    %v128 = vadd.f32 %v115, %v122
    %v129 = vadd.f32 %v116, %v122
    %v130 = vpack.c.bf16 %v125, %v124
    %v131 = vpack.c.bf16 %v127, %v126
    %v132 = vpack.c.bf16 %v129, %v128
    %v136 = vunpack.c.l.b16 %v130
    %v137 = vunpack.c.h.b16 %v130
    %v138 = vunpack.c.l.b16 %v131
    %v139 = vunpack.c.h.b16 %v131
    %v140 = vunpack.c.l.b16 %v132
    %v141 = vunpack.c.h.b16 %v132
    %v142 = vpack.c.b16 %v136, %v136
    %v143 = vpack.c.b16 %v137, %v137
    %v144 = vpack.c.b16 %v138, %v138
    %v145 = vpack.c.b16 %v139, %v139
    %v146 = vpack.c.b16 %v140, %v140
    %v147 = vpack.c.b16 %v141, %v141
    %154 = vst [vmem:[#allocation2] sm:$0xf] %v142
    %155 = vst [vmem:[#allocation2 + $0x4] sm:$0xf] %v143
    %156 = vst [vmem:[#allocation2 + $0x8] sm:$0xf] %v144
    %157 = vst [vmem:[#allocation2 + $0xc] sm:$0xf] %v145
    %158 = vst [vmem:[#allocation2 + $0x10] sm:$0xf] %v146
    %159 = vst [vmem:[#allocation2 + $0x14] sm:$0xf] %v147
  $region25: #{clip_featurizer_forward.18} parent=0 // pred_fallthru
    _
  %v160 = vld [vmem:[#allocation2] sm:$0xf]
  %v161 = vld [vmem:[#allocation2 + $0x4] sm:$0xf]
  %v162 = vld [vmem:[#allocation2 + $0x8] sm:$0xf]
  %v163 = vld [vmem:[#allocation2 + $0xc] sm:$0xf]
  %v164 = vld [vmem:[#allocation2 + $0x10] sm:$0xf]
  %v165 = vld [vmem:[#allocation2 + $0x14] sm:$0xf]
  %v166 = vld [vmem:[%s3] sm:$0xff]
  %v167 = vld [vmem:[%s3 + $0x8] sm:$0xff]
  %v168 = vld [vmem:[%s3 + $0x10] sm:$0xff]
  %v169 = vld [vmem:[%s3 + $0x18] sm:$0xff]
  %v170 = vld [vmem:[%s3 + $0x20] sm:$0xff]
  %v171 = vld [vmem:[%s3 + $0x28] sm:$0xff]
  %v172 = vld [vmem:[%s3 + $0x30] sm:$0xff]
  %v173 = vld [vmem:[%s3 + $0x38] sm:$0xff]
  %v174 = vld [vmem:[%s3 + $0x40] sm:$0xff]
  %v175 = vld [vmem:[%s3 + $0x48] sm:$0xff]
  %v176 = vld [vmem:[%s3 + $0x50] sm:$0xff]
  %v177 = vld [vmem:[%s3 + $0x58] sm:$0xff]
  %v178 = vld [vmem:[%s3 + $0x60] sm:$0xff]
  %v179 = vld [vmem:[%s3 + $0x68] sm:$0xff]
  %v180 = vld [vmem:[%s3 + $0x70] sm:$0xff]
  %v181 = vld [vmem:[%s3 + $0x78] sm:$0xff]
  %v182 = vld [vmem:[%s3 + $0x80] sm:$0xff]
  %v183 = vld [vmem:[%s3 + $0x88] sm:$0xff]
  %v184 = vld [vmem:[%s3 + $0x90] sm:$0xff]
  %v185 = vld [vmem:[%s3 + $0x98] sm:$0xff]
  %v186 = vld [vmem:[%s3 + $0xa0] sm:$0xff]
  %v187 = vld [vmem:[%s3 + $0xa8] sm:$0xff]
  %v188 = vld [vmem:[%s3 + $0xb0] sm:$0xff]
  %v189 = vld [vmem:[%s3 + $0xb8] sm:$0xff]
  %v190 = vld [vmem:[%s3 + $0xc0] sm:$0xff]
  %v191 = vld [vmem:[%s3 + $0xc8] sm:$0xff]
  %v192 = vld [vmem:[%s3 + $0xd0] sm:$0xff]
  %v193 = vld [vmem:[%s3 + $0xd8] sm:$0xff]
  %v194 = vld [vmem:[%s3 + $0xe0] sm:$0xff]
  %v195 = vld [vmem:[%s3 + $0xe8] sm:$0xff]
  %v196 = vld [vmem:[%s3 + $0xf0] sm:$0xff]
  %v197 = vld [vmem:[%s3 + $0xf8] sm:$0xff]
  %v198 = vld [vmem:[%s4] sm:$0xf]
  %v200 = vlaneseq
  %v201 = vshrl.u32 %v200, 7
  %v202 = vsub.s32 0, %v201
  %v203 = vrot.slane %v198, %v202
  %v204 = vlaneseq
  %v205 = vshrl.u32 %v204, 7
  %v206 = vsub.s32 1, %v205
  %v207 = vrot.slane %v198, %v206
  %v208 = vlaneseq
  %v209 = vshrl.u32 %v208, 7
  %v210 = vsub.s32 2, %v209
  %v211 = vrot.slane %v198, %v210
  %v212 = vlaneseq
  %v213 = vshrl.u32 %v212, 7
  %v214 = vsub.s32 3, %v213
  %v215 = vrot.slane %v198, %v214
  %v226 = vunpack.c.l.b16 %v160
  %v227 = vunpack.c.l.b16 %v161
  %v228 = vunpack.c.l.b16 %v162
  %v229 = vunpack.c.l.b16 %v163
  %v230 = vunpack.c.l.b16 %v164
  %v231 = vunpack.c.l.b16 %v165
  %v232 = vpack.c.b16 %v227, %v226
  %v233 = vpack.c.b16 %v229, %v228
  %v234 = vpack.c.b16 %v231, %v230
  %v270 = vunpack.c.l.b16 %v166
  %v271 = vunpack.c.h.b16 %v166
  %v272 = vunpack.c.l.b16 %v167
  %v273 = vunpack.c.h.b16 %v167
  %v274 = vunpack.c.l.b16 %v168
  %v275 = vunpack.c.h.b16 %v168
  %v276 = vunpack.c.l.b16 %v169
  %v277 = vunpack.c.h.b16 %v169
  %v278 = vunpack.c.l.b16 %v170
  %v279 = vunpack.c.h.b16 %v170
  %v280 = vunpack.c.l.b16 %v171
  %v281 = vunpack.c.h.b16 %v171
  %v282 = vunpack.c.l.b16 %v172
  %v283 = vunpack.c.h.b16 %v172
  %v284 = vunpack.c.l.b16 %v173
  %v285 = vunpack.c.h.b16 %v173
  %v286 = vunpack.c.l.b16 %v174
  %v287 = vunpack.c.h.b16 %v174
  %v288 = vunpack.c.l.b16 %v175
  %v289 = vunpack.c.h.b16 %v175
  %v290 = vunpack.c.l.b16 %v176
  %v291 = vunpack.c.h.b16 %v176
  %v292 = vunpack.c.l.b16 %v177
  %v293 = vunpack.c.h.b16 %v177
  %v294 = vunpack.c.l.b16 %v178
  %v295 = vunpack.c.h.b16 %v178
  %v296 = vunpack.c.l.b16 %v179
  %v297 = vunpack.c.h.b16 %v179
  %v298 = vunpack.c.l.b16 %v180
  %v299 = vunpack.c.h.b16 %v180
  %v300 = vunpack.c.l.b16 %v181
  %v301 = vunpack.c.h.b16 %v181
  %v302 = vunpack.c.l.b16 %v182
  %v303 = vunpack.c.h.b16 %v182
  %v304 = vunpack.c.l.b16 %v183
  %v305 = vunpack.c.h.b16 %v183
  %v306 = vunpack.c.l.b16 %v184
  %v307 = vunpack.c.h.b16 %v184
  %v308 = vunpack.c.l.b16 %v185
  %v309 = vunpack.c.h.b16 %v185
  %v310 = vunpack.c.l.b16 %v186
  %v311 = vunpack.c.h.b16 %v186
  %v312 = vunpack.c.l.b16 %v187
  %v313 = vunpack.c.h.b16 %v187
  %v314 = vunpack.c.l.b16 %v188
  %v315 = vunpack.c.h.b16 %v188
  %v316 = vunpack.c.l.b16 %v189
  %v317 = vunpack.c.h.b16 %v189
  %v318 = vunpack.c.l.b16 %v190
  %v319 = vunpack.c.h.b16 %v190
  %v320 = vunpack.c.l.b16 %v191
  %v321 = vunpack.c.h.b16 %v191
  %v322 = vunpack.c.l.b16 %v192
  %v323 = vunpack.c.h.b16 %v192
  %v324 = vunpack.c.l.b16 %v193
  %v325 = vunpack.c.h.b16 %v193
  %v326 = vunpack.c.l.b16 %v194
  %v327 = vunpack.c.h.b16 %v194
  %v328 = vunpack.c.l.b16 %v195
  %v329 = vunpack.c.h.b16 %v195
  %v330 = vunpack.c.l.b16 %v196
  %v331 = vunpack.c.h.b16 %v196
  %v332 = vunpack.c.l.b16 %v197
  %v333 = vunpack.c.h.b16 %v197
  %v334 = vpack.c.b16 %v274, %v270
  %v335 = vpack.c.b16 %v275, %v271
  %v336 = vpack.c.b16 %v276, %v272
  %v337 = vpack.c.b16 %v277, %v273
  %v338 = vpack.c.b16 %v282, %v278
  %v339 = vpack.c.b16 %v283, %v279
  %v340 = vpack.c.b16 %v284, %v280
  %v341 = vpack.c.b16 %v285, %v281
  %v342 = vpack.c.b16 %v290, %v286
  %v343 = vpack.c.b16 %v291, %v287
  %v344 = vpack.c.b16 %v292, %v288
  %v345 = vpack.c.b16 %v293, %v289
  %v346 = vpack.c.b16 %v298, %v294
  %v347 = vpack.c.b16 %v299, %v295
  %v348 = vpack.c.b16 %v300, %v296
  %v349 = vpack.c.b16 %v301, %v297
  %v350 = vpack.c.b16 %v306, %v302
  %v351 = vpack.c.b16 %v307, %v303
  %v352 = vpack.c.b16 %v308, %v304
  %v353 = vpack.c.b16 %v309, %v305
  %v354 = vpack.c.b16 %v314, %v310
  %v355 = vpack.c.b16 %v315, %v311
  %v356 = vpack.c.b16 %v316, %v312
  %v357 = vpack.c.b16 %v317, %v313
  %v358 = vpack.c.b16 %v322, %v318
  %v359 = vpack.c.b16 %v323, %v319
  %v360 = vpack.c.b16 %v324, %v320
  %v361 = vpack.c.b16 %v325, %v321
  %v362 = vpack.c.b16 %v330, %v326
  %v363 = vpack.c.b16 %v331, %v327
  %v364 = vpack.c.b16 %v332, %v328
  %v365 = vpack.c.b16 %v333, %v329
  %398 = vmatprep.subr.bf16.mxu0 %v363
  %399 = vmatpush1.bf16.msra.mxu0 %v362
  %400 = vmatprep.subr.bf16.mxu0 %v359
  %401 = vmatpush1.bf16.msra.mxu0 %v358
  %402 = vmatprep.subr.bf16.mxu0 %v355
  %403 = vmatpush1.bf16.msra.mxu0 %v354
  %404 = vmatprep.subr.bf16.mxu0 %v351
  %405 = vmatpush1.bf16.msra.mxu0 %v350
  %406 = vmatprep.subr.bf16.mxu0 %v347
  %407 = vmatpush1.bf16.msra.mxu0 %v346
  %408 = vmatprep.subr.bf16.mxu0 %v343
  %409 = vmatpush1.bf16.msra.mxu0 %v342
  %410 = vmatprep.subr.bf16.mxu0 %v339
  %411 = vmatpush1.bf16.msra.mxu0 %v338
  %412 = vmatprep.subr.bf16.mxu0 %v335
  %413 = vmatpush1.bf16.msra.mxu0 %v334
  %414 = vmatprep.subr.bf16.mxu0 0
  %415 = vmatpush2.bf16.msra.mxu0 0
  %416 = vmatprep.subr.bf16.mxu0 0
  %417 = vmatpush2.bf16.msra.mxu0 0
  %418 = vmatprep.subr.bf16.mxu0 0
  %419 = vmatpush2.bf16.msra.mxu0 0
  %420 = vmatprep.subr.bf16.mxu0 0
  %421 = vmatpush2.bf16.msra.mxu0 0
  %422 = vmatprep.subr.bf16.mxu0 0
  %423 = vmatpush2.bf16.msra.mxu0 0
  %424 = vmatprep.subr.bf16.mxu0 0
  %425 = vmatpush2.bf16.msra.mxu0 0
  %426 = vmatprep.subr.bf16.mxu0 0
  %427 = vmatpush2.bf16.msra.mxu0 0
  %428 = vmatprep.subr.bf16.mxu0 0
  %429 = vmatpush2.bf16.msra.mxu0 0
  %430 = vmatprep.mubr.bf16.mxu0 0
  %431 = vmatmul.mubr.bf16.gmra.mxu0 %v232
  %v432 = vpop.f32.mrf.mxu0
  %v433 = vadd.f32 %v203, %v432
  %v434 = vpop.f32.mrf.mxu0
  %v435 = vadd.f32 %v207, %v434
  %v436 = vpop.f32.mrf.mxu0
  %v437 = vadd.f32 %v203, %v436
  %v438 = vpop.f32.mrf.mxu0
  %v439 = vadd.f32 %v207, %v438
  %440 = vmatprep.mubr.bf16.mxu0 0
  %441 = vmatmul.mubr.bf16.gmra.mxu0 %v233
  %v442 = vpop.f32.mrf.mxu0
  %v443 = vadd.f32 %v203, %v442
  %v444 = vpop.f32.mrf.mxu0
  %v445 = vadd.f32 %v207, %v444
  %v446 = vpop.f32.mrf.mxu0
  %v447 = vadd.f32 %v203, %v446
  %v448 = vpop.f32.mrf.mxu0
  %v449 = vadd.f32 %v207, %v448
  %450 = vmatprep.mubr.bf16.mxu0 0
  %451 = vmatmul.mubr.bf16.gmra.mxu0 %v234
  %v452 = vpop.f32.mrf.mxu0
  %v453 = vadd.f32 %v203, %v452
  %v454 = vpop.f32.mrf.mxu0
  %v455 = vadd.f32 %v207, %v454
  %v456 = vpop.f32.mrf.mxu0
  %v457 = vadd.f32 %v203, %v456
  %v458 = vpop.f32.mrf.mxu0
  %v459 = vadd.f32 %v207, %v458
  %460 = vdwg.mxu0
  %461 = vmatprep.subr.bf16.mxu0 %v365
  %462 = vmatpush1.bf16.msra.mxu0 %v364
  %463 = vmatprep.subr.bf16.mxu0 %v361
  %464 = vmatpush1.bf16.msra.mxu0 %v360
  %465 = vmatprep.subr.bf16.mxu0 %v357
  %466 = vmatpush1.bf16.msra.mxu0 %v356
  %467 = vmatprep.subr.bf16.mxu0 %v353
  %468 = vmatpush1.bf16.msra.mxu0 %v352
  %469 = vmatprep.subr.bf16.mxu0 %v349
  %470 = vmatpush1.bf16.msra.mxu0 %v348
  %471 = vmatprep.subr.bf16.mxu0 %v345
  %472 = vmatpush1.bf16.msra.mxu0 %v344
  %473 = vmatprep.subr.bf16.mxu0 %v341
  %474 = vmatpush1.bf16.msra.mxu0 %v340
  %475 = vmatprep.subr.bf16.mxu0 %v337
  %476 = vmatpush1.bf16.msra.mxu0 %v336
  %477 = vmatprep.subr.bf16.mxu0 0
  %478 = vmatpush2.bf16.msra.mxu0 0
  %479 = vmatprep.subr.bf16.mxu0 0
  %480 = vmatpush2.bf16.msra.mxu0 0
  %481 = vmatprep.subr.bf16.mxu0 0
  %482 = vmatpush2.bf16.msra.mxu0 0
  %483 = vmatprep.subr.bf16.mxu0 0
  %484 = vmatpush2.bf16.msra.mxu0 0
  %485 = vmatprep.subr.bf16.mxu0 0
  %486 = vmatpush2.bf16.msra.mxu0 0
  %487 = vmatprep.subr.bf16.mxu0 0
  %488 = vmatpush2.bf16.msra.mxu0 0
  %489 = vmatprep.subr.bf16.mxu0 0
  %490 = vmatpush2.bf16.msra.mxu0 0
  %491 = vmatprep.subr.bf16.mxu0 0
  %492 = vmatpush2.bf16.msra.mxu0 0
  %493 = vmatprep.mubr.bf16.mxu0 0
  %494 = vmatmul.mubr.bf16.gmra.mxu0 %v232
  %v495 = vpop.f32.mrf.mxu0
  %v496 = vadd.f32 %v211, %v495
  %v497 = vpop.f32.mrf.mxu0
  %v498 = vadd.f32 %v215, %v497
  %v499 = vpop.f32.mrf.mxu0
  %v500 = vadd.f32 %v211, %v499
  %v501 = vpop.f32.mrf.mxu0
  %v502 = vadd.f32 %v215, %v501
  %503 = vmatprep.mubr.bf16.mxu0 0
  %504 = vmatmul.mubr.bf16.gmra.mxu0 %v233
  %v505 = vpop.f32.mrf.mxu0
  %v506 = vadd.f32 %v211, %v505
  %v507 = vpop.f32.mrf.mxu0
  %v508 = vadd.f32 %v215, %v507
  %v509 = vpop.f32.mrf.mxu0
  %v510 = vadd.f32 %v211, %v509
  %v511 = vpop.f32.mrf.mxu0
  %v512 = vadd.f32 %v215, %v511
  %513 = vmatprep.mubr.bf16.mxu0 0
  %514 = vmatmul.mubr.bf16.gmra.mxu0 %v234
  %v515 = vpop.f32.mrf.mxu0
  %v516 = vadd.f32 %v211, %v515
  %v517 = vpop.f32.mrf.mxu0
  %v518 = vadd.f32 %v215, %v517
  %v519 = vpop.f32.mrf.mxu0
  %v520 = vadd.f32 %v211, %v519
  %v521 = vpop.f32.mrf.mxu0
  %v522 = vadd.f32 %v215, %v521
  %523 = vdwg.mxu0
  %v524 = vmul.f32 %v433, 1.702
  %v525 = vmul.f32 %v435, 1.702
  %v526 = vmul.f32 %v496, 1.702
  %v527 = vmul.f32 %v498, 1.702
  %v528 = vmul.f32 %v437, 1.702
  %v529 = vmul.f32 %v439, 1.702
  %v530 = vmul.f32 %v500, 1.702
  %v531 = vmul.f32 %v502, 1.702
  %v532 = vmul.f32 %v443, 1.702
  %v533 = vmul.f32 %v445, 1.702
  %v534 = vmul.f32 %v506, 1.702
  %v535 = vmul.f32 %v508, 1.702
  %v536 = vmul.f32 %v447, 1.702
  %v537 = vmul.f32 %v449, 1.702
  %v538 = vmul.f32 %v510, 1.702
  %v539 = vmul.f32 %v512, 1.702
  %v540 = vmul.f32 %v453, 1.702
  %v541 = vmul.f32 %v455, 1.702
  %v542 = vmul.f32 %v516, 1.702
  %v543 = vmul.f32 %v518, 1.702
  %v544 = vmul.f32 %v457, 1.702
  %v545 = vmul.f32 %v459, 1.702
  %v546 = vmul.f32 %v520, 1.702
  %v547 = vmul.f32 %v522, 1.702
  %v548 = vxor.u32 %v524, 2147483648
  %v549 = vxor.u32 %v525, 2147483648
  %v550 = vxor.u32 %v526, 2147483648
  %v551 = vxor.u32 %v527, 2147483648
  %v552 = vxor.u32 %v528, 2147483648
  %v553 = vxor.u32 %v529, 2147483648
  %v554 = vxor.u32 %v530, 2147483648
  %v555 = vxor.u32 %v531, 2147483648
  %v556 = vxor.u32 %v532, 2147483648
  %v557 = vxor.u32 %v533, 2147483648
  %v558 = vxor.u32 %v534, 2147483648
  %v559 = vxor.u32 %v535, 2147483648
  %v560 = vxor.u32 %v536, 2147483648
  %v561 = vxor.u32 %v537, 2147483648
  %v562 = vxor.u32 %v538, 2147483648
  %v563 = vxor.u32 %v539, 2147483648
  %v564 = vxor.u32 %v540, 2147483648
  %v565 = vxor.u32 %v541, 2147483648
  %v566 = vxor.u32 %v542, 2147483648
  %v567 = vxor.u32 %v543, 2147483648
  %v568 = vxor.u32 %v544, 2147483648
  %v569 = vxor.u32 %v545, 2147483648
  %v570 = vxor.u32 %v546, 2147483648
  %v571 = vxor.u32 %v547, 2147483648
  %v572 = vmul.f32 %v548, 1.442695
  %v573 = vpow.pop %v572
  %v574 = vmul.f32 %v549, 1.442695
  %v575 = vpow.pop %v574
  %v576 = vmul.f32 %v550, 1.442695
  %v577 = vpow.pop %v576
  %v578 = vmul.f32 %v551, 1.442695
  %v579 = vpow.pop %v578
  %v580 = vmul.f32 %v552, 1.442695
  %v581 = vpow.pop %v580
  %v582 = vmul.f32 %v553, 1.442695
  %v583 = vpow.pop %v582
  %v584 = vmul.f32 %v554, 1.442695
  %v585 = vpow.pop %v584
  %v586 = vmul.f32 %v555, 1.442695
  %v587 = vpow.pop %v586
  %v588 = vmul.f32 %v556, 1.442695
  %v589 = vpow.pop %v588
  %v590 = vmul.f32 %v557, 1.442695
  %v591 = vpow.pop %v590
  %v592 = vmul.f32 %v558, 1.442695
  %v593 = vpow.pop %v592
  %v594 = vmul.f32 %v559, 1.442695
  %v595 = vpow.pop %v594
  %v596 = vmul.f32 %v560, 1.442695
  %v597 = vpow.pop %v596
  %v598 = vmul.f32 %v561, 1.442695
  %v599 = vpow.pop %v598
  %v600 = vmul.f32 %v562, 1.442695
  %v601 = vpow.pop %v600
  %v602 = vmul.f32 %v563, 1.442695
  %v603 = vpow.pop %v602
  %v604 = vmul.f32 %v564, 1.442695
  %v605 = vpow.pop %v604
  %v606 = vmul.f32 %v565, 1.442695
  %v607 = vpow.pop %v606
  %v608 = vmul.f32 %v566, 1.442695
  %v609 = vpow.pop %v608
  %v610 = vmul.f32 %v567, 1.442695
  %v611 = vpow.pop %v610
  %v612 = vmul.f32 %v568, 1.442695
  %v613 = vpow.pop %v612
  %v614 = vmul.f32 %v569, 1.442695
  %v615 = vpow.pop %v614
  %v616 = vmul.f32 %v570, 1.442695
  %v617 = vpow.pop %v616
  %v618 = vmul.f32 %v571, 1.442695
  %v619 = vpow.pop %v618
  %v620 = vadd.f32 %v573, 1.0
  %v621 = vadd.f32 %v575, 1.0
  %v622 = vadd.f32 %v577, 1.0
  %v623 = vadd.f32 %v579, 1.0
  %v624 = vadd.f32 %v581, 1.0
  %v625 = vadd.f32 %v583, 1.0
  %v626 = vadd.f32 %v585, 1.0
  %v627 = vadd.f32 %v587, 1.0
  %v628 = vadd.f32 %v589, 1.0
  %v629 = vadd.f32 %v591, 1.0
  %v630 = vadd.f32 %v593, 1.0
  %v631 = vadd.f32 %v595, 1.0
  %v632 = vadd.f32 %v597, 1.0
  %v633 = vadd.f32 %v599, 1.0
  %v634 = vadd.f32 %v601, 1.0
  %v635 = vadd.f32 %v603, 1.0
  %v636 = vadd.f32 %v605, 1.0
  %v637 = vadd.f32 %v607, 1.0
  %v638 = vadd.f32 %v609, 1.0
  %v639 = vadd.f32 %v611, 1.0
  %v640 = vadd.f32 %v613, 1.0
  %v641 = vadd.f32 %v615, 1.0
  %v642 = vadd.f32 %v617, 1.0
  %v643 = vadd.f32 %v619, 1.0
  %v644 = vrcp.pop %v620
  %v645 = vmul.f32 1.0, %v644
  %v646 = vrcp.pop %v621
  %v647 = vmul.f32 1.0, %v646
  %v648 = vrcp.pop %v622
  %v649 = vmul.f32 1.0, %v648
  %v650 = vrcp.pop %v623
  %v651 = vmul.f32 1.0, %v650
  %v652 = vrcp.pop %v624
  %v653 = vmul.f32 1.0, %v652
  %v654 = vrcp.pop %v625
  %v655 = vmul.f32 1.0, %v654
  %v656 = vrcp.pop %v626
  %v657 = vmul.f32 1.0, %v656
  %v658 = vrcp.pop %v627
  %v659 = vmul.f32 1.0, %v658
  %v660 = vrcp.pop %v628
  %v661 = vmul.f32 1.0, %v660
  %v662 = vrcp.pop %v629
  %v663 = vmul.f32 1.0, %v662
  %v664 = vrcp.pop %v630
  %v665 = vmul.f32 1.0, %v664
  %v666 = vrcp.pop %v631
  %v667 = vmul.f32 1.0, %v666
  %v668 = vrcp.pop %v632
  %v669 = vmul.f32 1.0, %v668
  %v670 = vrcp.pop %v633
  %v671 = vmul.f32 1.0, %v670
  %v672 = vrcp.pop %v634
  %v673 = vmul.f32 1.0, %v672
  %v674 = vrcp.pop %v635
  %v675 = vmul.f32 1.0, %v674
  %v676 = vrcp.pop %v636
  %v677 = vmul.f32 1.0, %v676
  %v678 = vrcp.pop %v637
  %v679 = vmul.f32 1.0, %v678
  %v680 = vrcp.pop %v638
  %v681 = vmul.f32 1.0, %v680
  %v682 = vrcp.pop %v639
  %v683 = vmul.f32 1.0, %v682
  %v684 = vrcp.pop %v640
  %v685 = vmul.f32 1.0, %v684
  %v686 = vrcp.pop %v641
  %v687 = vmul.f32 1.0, %v686
  %v688 = vrcp.pop %v642
  %v689 = vmul.f32 1.0, %v688
  %v690 = vrcp.pop %v643
  %v691 = vmul.f32 1.0, %v690
  %v692 = vmul.f32 %v433, %v645
  %v693 = vmul.f32 %v435, %v647
  %v694 = vmul.f32 %v496, %v649
  %v695 = vmul.f32 %v498, %v651
  %v696 = vmul.f32 %v437, %v653
  %v697 = vmul.f32 %v439, %v655
  %v698 = vmul.f32 %v500, %v657
  %v699 = vmul.f32 %v502, %v659
  %v700 = vmul.f32 %v443, %v661
  %v701 = vmul.f32 %v445, %v663
  %v702 = vmul.f32 %v506, %v665
  %v703 = vmul.f32 %v508, %v667
  %v704 = vmul.f32 %v447, %v669
  %v705 = vmul.f32 %v449, %v671
  %v706 = vmul.f32 %v510, %v673
  %v707 = vmul.f32 %v512, %v675
  %v708 = vmul.f32 %v453, %v677
  %v709 = vmul.f32 %v455, %v679
  %v710 = vmul.f32 %v516, %v681
  %v711 = vmul.f32 %v518, %v683
  %v712 = vmul.f32 %v457, %v685
  %v713 = vmul.f32 %v459, %v687
  %v714 = vmul.f32 %v520, %v689
  %v715 = vmul.f32 %v522, %v691
  %v716 = vpack.c.bf16 %v696, %v692
  %v717 = vpack.c.bf16 %v697, %v693
  %v718 = vpack.c.bf16 %v698, %v694
  %v719 = vpack.c.bf16 %v699, %v695
  %v720 = vpack.c.bf16 %v704, %v700
  %v721 = vpack.c.bf16 %v705, %v701
  %v722 = vpack.c.bf16 %v706, %v702
  %v723 = vpack.c.bf16 %v707, %v703
  %v724 = vpack.c.bf16 %v712, %v708
  %v725 = vpack.c.bf16 %v713, %v709
  %v726 = vpack.c.bf16 %v714, %v710
  %v727 = vpack.c.bf16 %v715, %v711
  %v740 = vunpack.c.l.b16 %v716
  %v741 = vunpack.c.l.b16 %v717
  %v742 = vunpack.c.l.b16 %v718
  %v743 = vunpack.c.l.b16 %v719
  %v744 = vunpack.c.h.b16 %v716
  %v745 = vunpack.c.h.b16 %v717
  %v746 = vunpack.c.h.b16 %v718
  %v747 = vunpack.c.h.b16 %v719
  %v748 = vunpack.c.l.b16 %v720
  %v749 = vunpack.c.l.b16 %v721
  %v750 = vunpack.c.l.b16 %v722
  %v751 = vunpack.c.l.b16 %v723
  %v752 = vunpack.c.h.b16 %v720
  %v753 = vunpack.c.h.b16 %v721
  %v754 = vunpack.c.h.b16 %v722
  %v755 = vunpack.c.h.b16 %v723
  %v756 = vunpack.c.l.b16 %v724
  %v757 = vunpack.c.l.b16 %v725
  %v758 = vunpack.c.l.b16 %v726
  %v759 = vunpack.c.l.b16 %v727
  %v760 = vunpack.c.h.b16 %v724
  %v761 = vunpack.c.h.b16 %v725
  %v762 = vunpack.c.h.b16 %v726
  %v763 = vunpack.c.h.b16 %v727
  %v764 = vpack.c.b16 %v741, %v740
  %v765 = vpack.c.b16 %v743, %v742
  %v766 = vpack.c.b16 %v745, %v744
  %v767 = vpack.c.b16 %v747, %v746
  %v768 = vpack.c.b16 %v749, %v748
  %v769 = vpack.c.b16 %v751, %v750
  %v770 = vpack.c.b16 %v753, %v752
  %v771 = vpack.c.b16 %v755, %v754
  %v772 = vpack.c.b16 %v757, %v756
  %v773 = vpack.c.b16 %v759, %v758
  %v774 = vpack.c.b16 %v761, %v760
  %v775 = vpack.c.b16 %v763, %v762
  %788 = vst [vmem:[%s5] sm:$0xff] %v764
  %789 = vst [vmem:[%s5 + $0x8] sm:$0xff] %v765
  %790 = vst [vmem:[%s5 + $0x10] sm:$0xff] %v766
  %791 = vst [vmem:[%s5 + $0x18] sm:$0xff] %v767
  %792 = vst [vmem:[%s5 + $0x20] sm:$0xff] %v768
  %793 = vst [vmem:[%s5 + $0x28] sm:$0xff] %v769
  %794 = vst [vmem:[%s5 + $0x30] sm:$0xff] %v770
  %795 = vst [vmem:[%s5 + $0x38] sm:$0xff] %v771
  %796 = vst [vmem:[%s5 + $0x40] sm:$0xff] %v772
  %797 = vst [vmem:[%s5 + $0x48] sm:$0xff] %v773
  %798 = vst [vmem:[%s5 + $0x50] sm:$0xff] %v774
  %799 = vst [vmem:[%s5 + $0x58] sm:$0xff] %v775
  // Predicated region
  $region26: #{clip_featurizer_forward.18} parent=0 // pred_check
    _
  $region27: #{clip_featurizer_forward.18} parent=0 // pred_check_branch
    %801 = sbr.rel (0) target = $region29
  $region28: #{clip_featurizer_forward.18} parent=0 // pred_region
    _
  $region29: #{clip_featurizer_forward.18} parent=0 // pred_fallthru
    _
  // Predicated region
  $region30: #{clip_featurizer_forward.18} parent=0 // pred_check
    _
  $region31: #{clip_featurizer_forward.18} parent=0 // pred_check_branch
    %803 = sbr.rel (0) target = $region33
  $region32: #{clip_featurizer_forward.18} parent=0 // pred_region
    _
  $region33: #{clip_featurizer_forward.18} parent=0 // pred_fallthru
    _

// kernel: clip_featurizer_forward.25
$region0: #{clip_featurizer_forward.25}
  #allocation0 [shape = 'u32[]', space=smem, size = 0x4, offset = 0x4, fixed_abs, tag = 'smem constant byte address 0x4 - core index']
  #allocation1 [shape = 'u32[144,128]{1,0:T(1,128)}', space=vmem, size = 0x12000, scoped, tag = 'internal scratch']
  %s0 = inlined_call_operand.vmem [shape: bf16[48,128], index: 0, kind: input, shape index: {}]
  %s1 = inlined_call_operand.vmem [shape: f32[1,128], index: 1, kind: input, shape index: {}]
  %s2 = inlined_call_operand.vmem [shape: f32[1,128], index: 2, kind: input, shape index: {}]
  %s3 = inlined_call_operand.vmem [shape: f32[48,128], index: 3, kind: output, shape index: {}]
  %s4 = sld [smem:[#allocation0]]
  $region22: #{clip_featurizer_forward.25} parent=0
    _
  %s6 = ssub.s32 1, %s4
  %s7 = scalar_select 0, %s6, %s4
  // Predicated region
  $region2: #{clip_featurizer_forward.25} parent=0 // pred_check
    _
  $region3: #{clip_featurizer_forward.25} parent=0 // pred_check_branch
    %9 = sbr.rel (0) target = $region5
  $region4: #{clip_featurizer_forward.25} parent=0 // pred_region
    _
  $region5: #{clip_featurizer_forward.25} parent=0 // pred_fallthru
    _
  // Predicated region
  $region6: #{clip_featurizer_forward.25} parent=0 // pred_check
    _
  $region7: #{clip_featurizer_forward.25} parent=0 // pred_check_branch
    %11 = sbr.rel (0) target = $region9
  $region8: #{clip_featurizer_forward.25} parent=0 // pred_region
    _
  $region9: #{clip_featurizer_forward.25} parent=0 // pred_fallthru
    _
  // Predicated region
  $region10: #{clip_featurizer_forward.25} parent=0 // pred_check
    _
  $region11: #{clip_featurizer_forward.25} parent=0 // pred_check_branch
    %13 = sbr.rel (0) target = $region13
  $region12: #{clip_featurizer_forward.25} parent=0 // pred_region
    _
  $region13: #{clip_featurizer_forward.25} parent=0 // pred_fallthru
    _
  %v14 = vld [vmem:[%s0] sm:$0xf]
  %v15 = vld [vmem:[%s0 + $0x4] sm:$0xf]
  %v16 = vld [vmem:[%s0 + $0x8] sm:$0xf]
  %v17 = vld [vmem:[%s0 + $0xc] sm:$0xf]
  %v18 = vld [vmem:[%s0 + $0x10] sm:$0xf]
  %v19 = vld [vmem:[%s0 + $0x14] sm:$0xf]
  %v20 = vunpack.c.l.bf16 %v14
  %v21 = vunpack.c.l.bf16 %v15
  %v22 = vunpack.c.l.bf16 %v16
  %v23 = vunpack.c.l.bf16 %v17
  %v24 = vunpack.c.l.bf16 %v18
  %v25 = vunpack.c.l.bf16 %v19
  %26 = vadd.xlane.f32.xlu0 %v20
  %v27 = vpop.xlane.xlu0 %26
  %28 = vadd.xlane.f32.xlu0 %v21
  %v29 = vpop.xlane.xlu0 %28
  %30 = vadd.xlane.f32.xlu0 %v22
  %v31 = vpop.xlane.xlu0 %30
  %32 = vadd.xlane.f32.xlu0 %v23
  %v33 = vpop.xlane.xlu0 %32
  %34 = vadd.xlane.f32.xlu0 %v24
  %v35 = vpop.xlane.xlu0 %34
  %36 = vadd.xlane.f32.xlu0 %v25
  %v37 = vpop.xlane.xlu0 %36
  %v38 = vrcp.pop 128.0
  %v39 = vmul.f32 %v27, %v38
  %v40 = vmul.f32 %v29, %v38
  %v41 = vmul.f32 %v31, %v38
  %v42 = vmul.f32 %v33, %v38
  %v43 = vmul.f32 %v35, %v38
  %v44 = vmul.f32 %v37, %v38
  %v45 = vsub.f32 %v20, %v39
  %v46 = vsub.f32 %v21, %v40
  %v47 = vsub.f32 %v22, %v41
  %v48 = vsub.f32 %v23, %v42
  %v49 = vsub.f32 %v24, %v43
  %v50 = vsub.f32 %v25, %v44
  %v51 = vmul.f32 %v45, %v45
  %v52 = vmul.f32 %v46, %v46
  %v53 = vmul.f32 %v47, %v47
  %v54 = vmul.f32 %v48, %v48
  %v55 = vmul.f32 %v49, %v49
  %v56 = vmul.f32 %v50, %v50
  %57 = vadd.xlane.f32.xlu0 %v51
  %v58 = vpop.xlane.xlu0 %57
  %59 = vadd.xlane.f32.xlu0 %v52
  %v60 = vpop.xlane.xlu0 %59
  %61 = vadd.xlane.f32.xlu0 %v53
  %v62 = vpop.xlane.xlu0 %61
  %63 = vadd.xlane.f32.xlu0 %v54
  %v64 = vpop.xlane.xlu0 %63
  %65 = vadd.xlane.f32.xlu0 %v55
  %v66 = vpop.xlane.xlu0 %65
  %67 = vadd.xlane.f32.xlu0 %v56
  %v68 = vpop.xlane.xlu0 %67
  %v69 = vmul.f32 %v58, %v38
  %v70 = vmul.f32 %v60, %v38
  %v71 = vmul.f32 %v62, %v38
  %v72 = vmul.f32 %v64, %v38
  %v73 = vmul.f32 %v66, %v38
  %v74 = vmul.f32 %v68, %v38
  %v75 = vadd.f32 %v69, 1e-05
  %v76 = vadd.f32 %v70, 1e-05
  %v77 = vadd.f32 %v71, 1e-05
  %v78 = vadd.f32 %v72, 1e-05
  %v79 = vadd.f32 %v73, 1e-05
  %v80 = vadd.f32 %v74, 1e-05
  %v81 = vrsqrt.pop %v75
  %v82 = vrsqrt.pop %v76
  %v83 = vrsqrt.pop %v77
  %v84 = vrsqrt.pop %v78
  %v85 = vrsqrt.pop %v79
  %v86 = vrsqrt.pop %v80
  %v87 = vmul.f32 %v45, %v81
  %v88 = vmul.f32 %v46, %v82
  %v89 = vmul.f32 %v47, %v83
  %v90 = vmul.f32 %v48, %v84
  %v91 = vmul.f32 %v49, %v85
  %v92 = vmul.f32 %v50, %v86
  %v93 = vld [vmem:[%s1] sm:$0x1]
  %v95 = vlaneseq
  %v96 = vshrl.u32 %v95, 7
  %v97 = vsub.s32 0, %v96
  %v98 = vrot.slane %v93, %v97
  %v100 = vmul.f32 %v87, %v98
  %v101 = vmul.f32 %v88, %v98
  %v102 = vmul.f32 %v89, %v98
  %v103 = vmul.f32 %v90, %v98
  %v104 = vmul.f32 %v91, %v98
  %v105 = vmul.f32 %v92, %v98
  %v106 = vld [vmem:[%s2] sm:$0x1]
  %v108 = vlaneseq
  %v109 = vshrl.u32 %v108, 7
  %v110 = vsub.s32 0, %v109
  %v111 = vrot.slane %v106, %v110
  %v113 = vadd.f32 %v100, %v111
  %v114 = vadd.f32 %v101, %v111
  %v115 = vadd.f32 %v102, %v111
  %v116 = vadd.f32 %v103, %v111
  %v117 = vadd.f32 %v104, %v111
  %v118 = vadd.f32 %v105, %v111
  %119 = vst [vmem:[%s3] sm:$0xff] %v113
  %120 = vst [vmem:[%s3 + $0x8] sm:$0xff] %v114
  %121 = vst [vmem:[%s3 + $0x10] sm:$0xff] %v115
  %122 = vst [vmem:[%s3 + $0x18] sm:$0xff] %v116
  %123 = vst [vmem:[%s3 + $0x20] sm:$0xff] %v117
  %124 = vst [vmem:[%s3 + $0x28] sm:$0xff] %v118
  // Predicated region
  $region14: #{clip_featurizer_forward.25} parent=0 // pred_check
    _
  $region15: #{clip_featurizer_forward.25} parent=0 // pred_check_branch
    %126 = sbr.rel (0) target = $region17
  $region16: #{clip_featurizer_forward.25} parent=0 // pred_region
    _
  $region17: #{clip_featurizer_forward.25} parent=0 // pred_fallthru
    _
  // Predicated region
  $region18: #{clip_featurizer_forward.25} parent=0 // pred_check
    _
  $region19: #{clip_featurizer_forward.25} parent=0 // pred_check_branch
    %128 = sbr.rel (0) target = $region21
  $region20: #{clip_featurizer_forward.25} parent=0 // pred_region
    _
  $region21: #{clip_featurizer_forward.25} parent=0 // pred_fallthru
    _

// kernel: clip_featurizer_forward.19
$region0: #{clip_featurizer_forward.19}
  #allocation0 [shape = 'u32[]', space=smem, size = 0x4, offset = 0x4, fixed_abs, tag = 'smem constant byte address 0x4 - core index']
  #allocation1 [shape = 'u32[144,128]{1,0:T(1,128)}', space=vmem, size = 0x12000, scoped, tag = 'internal scratch']
  %s0 = inlined_call_operand.vmem [shape: bf16[48,512], index: 0, kind: input, shape index: {}]
  %s1 = inlined_call_operand.vmem [shape: bf16[512,128], index: 1, kind: input, shape index: {}]
  %s2 = inlined_call_operand.vmem [shape: f32[1,128], index: 2, kind: input, shape index: {}]
  %s3 = inlined_call_operand.vmem [shape: bf16[48,128], index: 3, kind: input, shape index: {}]
  %s4 = inlined_call_operand.vmem [shape: bf16[48,128], index: 4, kind: output, shape index: {}]
  %s5 = sld [smem:[#allocation0]]
  $region26: #{clip_featurizer_forward.19} parent=0
    _
  %s7 = ssub.s32 1, %s5
  %s8 = scalar_select 0, %s7, %s5
  // Predicated region
  $region2: #{clip_featurizer_forward.19} parent=0 // pred_check
    _
  $region3: #{clip_featurizer_forward.19} parent=0 // pred_check_branch
    %10 = sbr.rel (0) target = $region5
  $region4: #{clip_featurizer_forward.19} parent=0 // pred_region
    _
  $region5: #{clip_featurizer_forward.19} parent=0 // pred_fallthru
    _
  // Predicated region
  $region6: #{clip_featurizer_forward.19} parent=0 // pred_check
    _
  $region7: #{clip_featurizer_forward.19} parent=0 // pred_check_branch
    %12 = sbr.rel (0) target = $region9
  $region8: #{clip_featurizer_forward.19} parent=0 // pred_region
    _
  $region9: #{clip_featurizer_forward.19} parent=0 // pred_fallthru
    _
  // Predicated region
  $region10: #{clip_featurizer_forward.19} parent=0 // pred_check
    _
  $region11: #{clip_featurizer_forward.19} parent=0 // pred_check_branch
    %14 = sbr.rel (0) target = $region13
  $region12: #{clip_featurizer_forward.19} parent=0 // pred_region
    _
  $region13: #{clip_featurizer_forward.19} parent=0 // pred_fallthru
    _
  // Predicated region
  $region14: #{clip_featurizer_forward.19} parent=0 // pred_check
    _
  $region15: #{clip_featurizer_forward.19} parent=0 // pred_check_branch
    %16 = sbr.rel (0) target = $region17
  $region16: #{clip_featurizer_forward.19} parent=0 // pred_region
    _
  $region17: #{clip_featurizer_forward.19} parent=0 // pred_fallthru
    _
  %v18 = vld [vmem:[%s0] sm:$0xff]
  %v19 = vld [vmem:[%s0 + $0x8] sm:$0xff]
  %v20 = vld [vmem:[%s0 + $0x10] sm:$0xff]
  %v21 = vld [vmem:[%s0 + $0x18] sm:$0xff]
  %v22 = vld [vmem:[%s0 + $0x20] sm:$0xff]
  %v23 = vld [vmem:[%s0 + $0x28] sm:$0xff]
  %v24 = vld [vmem:[%s0 + $0x30] sm:$0xff]
  %v25 = vld [vmem:[%s0 + $0x38] sm:$0xff]
  %v26 = vld [vmem:[%s0 + $0x40] sm:$0xff]
  %v27 = vld [vmem:[%s0 + $0x48] sm:$0xff]
  %v28 = vld [vmem:[%s0 + $0x50] sm:$0xff]
  %v29 = vld [vmem:[%s0 + $0x58] sm:$0xff]
  %v30 = vld [vmem:[%s1] sm:$0xf]
  %v31 = vld [vmem:[%s1 + $0x4] sm:$0xf]
  %v32 = vld [vmem:[%s1 + $0x8] sm:$0xf]
  %v33 = vld [vmem:[%s1 + $0xc] sm:$0xf]
  %v34 = vld [vmem:[%s1 + $0x10] sm:$0xf]
  %v35 = vld [vmem:[%s1 + $0x14] sm:$0xf]
  %v36 = vld [vmem:[%s1 + $0x18] sm:$0xf]
  %v37 = vld [vmem:[%s1 + $0x1c] sm:$0xf]
  %v38 = vld [vmem:[%s1 + $0x20] sm:$0xf]
  %v39 = vld [vmem:[%s1 + $0x24] sm:$0xf]
  %v40 = vld [vmem:[%s1 + $0x28] sm:$0xf]
  %v41 = vld [vmem:[%s1 + $0x2c] sm:$0xf]
  %v42 = vld [vmem:[%s1 + $0x30] sm:$0xf]
  %v43 = vld [vmem:[%s1 + $0x34] sm:$0xf]
  %v44 = vld [vmem:[%s1 + $0x38] sm:$0xf]
  %v45 = vld [vmem:[%s1 + $0x3c] sm:$0xf]
  %v46 = vld [vmem:[%s1 + $0x40] sm:$0xf]
  %v47 = vld [vmem:[%s1 + $0x44] sm:$0xf]
  %v48 = vld [vmem:[%s1 + $0x48] sm:$0xf]
  %v49 = vld [vmem:[%s1 + $0x4c] sm:$0xf]
  %v50 = vld [vmem:[%s1 + $0x50] sm:$0xf]
  %v51 = vld [vmem:[%s1 + $0x54] sm:$0xf]
  %v52 = vld [vmem:[%s1 + $0x58] sm:$0xf]
  %v53 = vld [vmem:[%s1 + $0x5c] sm:$0xf]
  %v54 = vld [vmem:[%s1 + $0x60] sm:$0xf]
  %v55 = vld [vmem:[%s1 + $0x64] sm:$0xf]
  %v56 = vld [vmem:[%s1 + $0x68] sm:$0xf]
  %v57 = vld [vmem:[%s1 + $0x6c] sm:$0xf]
  %v58 = vld [vmem:[%s1 + $0x70] sm:$0xf]
  %v59 = vld [vmem:[%s1 + $0x74] sm:$0xf]
  %v60 = vld [vmem:[%s1 + $0x78] sm:$0xf]
  %v61 = vld [vmem:[%s1 + $0x7c] sm:$0xf]
  %v62 = vld [vmem:[%s1 + $0x80] sm:$0xf]
  %v63 = vld [vmem:[%s1 + $0x84] sm:$0xf]
  %v64 = vld [vmem:[%s1 + $0x88] sm:$0xf]
  %v65 = vld [vmem:[%s1 + $0x8c] sm:$0xf]
  %v66 = vld [vmem:[%s1 + $0x90] sm:$0xf]
  %v67 = vld [vmem:[%s1 + $0x94] sm:$0xf]
  %v68 = vld [vmem:[%s1 + $0x98] sm:$0xf]
  %v69 = vld [vmem:[%s1 + $0x9c] sm:$0xf]
  %v70 = vld [vmem:[%s1 + $0xa0] sm:$0xf]
  %v71 = vld [vmem:[%s1 + $0xa4] sm:$0xf]
  %v72 = vld [vmem:[%s1 + $0xa8] sm:$0xf]
  %v73 = vld [vmem:[%s1 + $0xac] sm:$0xf]
  %v74 = vld [vmem:[%s1 + $0xb0] sm:$0xf]
  %v75 = vld [vmem:[%s1 + $0xb4] sm:$0xf]
  %v76 = vld [vmem:[%s1 + $0xb8] sm:$0xf]
  %v77 = vld [vmem:[%s1 + $0xbc] sm:$0xf]
  %v78 = vld [vmem:[%s1 + $0xc0] sm:$0xf]
  %v79 = vld [vmem:[%s1 + $0xc4] sm:$0xf]
  %v80 = vld [vmem:[%s1 + $0xc8] sm:$0xf]
  %v81 = vld [vmem:[%s1 + $0xcc] sm:$0xf]
  %v82 = vld [vmem:[%s1 + $0xd0] sm:$0xf]
  %v83 = vld [vmem:[%s1 + $0xd4] sm:$0xf]
  %v84 = vld [vmem:[%s1 + $0xd8] sm:$0xf]
  %v85 = vld [vmem:[%s1 + $0xdc] sm:$0xf]
  %v86 = vld [vmem:[%s1 + $0xe0] sm:$0xf]
  %v87 = vld [vmem:[%s1 + $0xe4] sm:$0xf]
  %v88 = vld [vmem:[%s1 + $0xe8] sm:$0xf]
  %v89 = vld [vmem:[%s1 + $0xec] sm:$0xf]
  %v90 = vld [vmem:[%s1 + $0xf0] sm:$0xf]
  %v91 = vld [vmem:[%s1 + $0xf4] sm:$0xf]
  %v92 = vld [vmem:[%s1 + $0xf8] sm:$0xf]
  %v93 = vld [vmem:[%s1 + $0xfc] sm:$0xf]
  %v94 = vld [vmem:[%s2] sm:$0x1]
  %v96 = vlaneseq
  %v97 = vshrl.u32 %v96, 7
  %v98 = vsub.s32 0, %v97
  %v99 = vrot.slane %v94, %v98
  %v113 = vunpack.c.l.b16 %v18
  %v114 = vunpack.c.h.b16 %v18
  %v115 = vunpack.c.l.b16 %v19
  %v116 = vunpack.c.h.b16 %v19
  %v117 = vunpack.c.l.b16 %v20
  %v118 = vunpack.c.h.b16 %v20
  %v119 = vunpack.c.l.b16 %v21
  %v120 = vunpack.c.h.b16 %v21
  %v121 = vunpack.c.l.b16 %v22
  %v122 = vunpack.c.h.b16 %v22
  %v123 = vunpack.c.l.b16 %v23
  %v124 = vunpack.c.h.b16 %v23
  %v125 = vunpack.c.l.b16 %v24
  %v126 = vunpack.c.h.b16 %v24
  %v127 = vunpack.c.l.b16 %v25
  %v128 = vunpack.c.h.b16 %v25
  %v129 = vunpack.c.l.b16 %v26
  %v130 = vunpack.c.h.b16 %v26
  %v131 = vunpack.c.l.b16 %v27
  %v132 = vunpack.c.h.b16 %v27
  %v133 = vunpack.c.l.b16 %v28
  %v134 = vunpack.c.h.b16 %v28
  %v135 = vunpack.c.l.b16 %v29
  %v136 = vunpack.c.h.b16 %v29
  %v137 = vpack.c.b16 %v117, %v113
  %v138 = vpack.c.b16 %v118, %v114
  %v139 = vpack.c.b16 %v119, %v115
  %v140 = vpack.c.b16 %v120, %v116
  %v141 = vpack.c.b16 %v125, %v121
  %v142 = vpack.c.b16 %v126, %v122
  %v143 = vpack.c.b16 %v127, %v123
  %v144 = vpack.c.b16 %v128, %v124
  %v145 = vpack.c.b16 %v133, %v129
  %v146 = vpack.c.b16 %v134, %v130
  %v147 = vpack.c.b16 %v135, %v131
  %v148 = vpack.c.b16 %v136, %v132
  %v225 = vunpack.c.l.b16 %v30
  %v226 = vunpack.c.l.b16 %v31
  %v227 = vunpack.c.l.b16 %v32
  %v228 = vunpack.c.l.b16 %v33
  %v229 = vunpack.c.l.b16 %v34
  %v230 = vunpack.c.l.b16 %v35
  %v231 = vunpack.c.l.b16 %v36
  %v232 = vunpack.c.l.b16 %v37
  %v233 = vunpack.c.l.b16 %v38
  %v234 = vunpack.c.l.b16 %v39
  %v235 = vunpack.c.l.b16 %v40
  %v236 = vunpack.c.l.b16 %v41
  %v237 = vunpack.c.l.b16 %v42
  %v238 = vunpack.c.l.b16 %v43
  %v239 = vunpack.c.l.b16 %v44
  %v240 = vunpack.c.l.b16 %v45
  %v241 = vunpack.c.l.b16 %v46
  %v242 = vunpack.c.l.b16 %v47
  %v243 = vunpack.c.l.b16 %v48
  %v244 = vunpack.c.l.b16 %v49
  %v245 = vunpack.c.l.b16 %v50
  %v246 = vunpack.c.l.b16 %v51
  %v247 = vunpack.c.l.b16 %v52
  %v248 = vunpack.c.l.b16 %v53
  %v249 = vunpack.c.l.b16 %v54
  %v250 = vunpack.c.l.b16 %v55
  %v251 = vunpack.c.l.b16 %v56
  %v252 = vunpack.c.l.b16 %v57
  %v253 = vunpack.c.l.b16 %v58
  %v254 = vunpack.c.l.b16 %v59
  %v255 = vunpack.c.l.b16 %v60
  %v256 = vunpack.c.l.b16 %v61
  %v257 = vunpack.c.l.b16 %v62
  %v258 = vunpack.c.l.b16 %v63
  %v259 = vunpack.c.l.b16 %v64
  %v260 = vunpack.c.l.b16 %v65
  %v261 = vunpack.c.l.b16 %v66
  %v262 = vunpack.c.l.b16 %v67
  %v263 = vunpack.c.l.b16 %v68
  %v264 = vunpack.c.l.b16 %v69
  %v265 = vunpack.c.l.b16 %v70
  %v266 = vunpack.c.l.b16 %v71
  %v267 = vunpack.c.l.b16 %v72
  %v268 = vunpack.c.l.b16 %v73
  %v269 = vunpack.c.l.b16 %v74
  %v270 = vunpack.c.l.b16 %v75
  %v271 = vunpack.c.l.b16 %v76
  %v272 = vunpack.c.l.b16 %v77
  %v273 = vunpack.c.l.b16 %v78
  %v274 = vunpack.c.l.b16 %v79
  %v275 = vunpack.c.l.b16 %v80
  %v276 = vunpack.c.l.b16 %v81
  %v277 = vunpack.c.l.b16 %v82
  %v278 = vunpack.c.l.b16 %v83
  %v279 = vunpack.c.l.b16 %v84
  %v280 = vunpack.c.l.b16 %v85
  %v281 = vunpack.c.l.b16 %v86
  %v282 = vunpack.c.l.b16 %v87
  %v283 = vunpack.c.l.b16 %v88
  %v284 = vunpack.c.l.b16 %v89
  %v285 = vunpack.c.l.b16 %v90
  %v286 = vunpack.c.l.b16 %v91
  %v287 = vunpack.c.l.b16 %v92
  %v288 = vunpack.c.l.b16 %v93
  %v289 = vpack.c.b16 %v226, %v225
  %v290 = vpack.c.b16 %v228, %v227
  %v291 = vpack.c.b16 %v230, %v229
  %v292 = vpack.c.b16 %v232, %v231
  %v293 = vpack.c.b16 %v234, %v233
  %v294 = vpack.c.b16 %v236, %v235
  %v295 = vpack.c.b16 %v238, %v237
  %v296 = vpack.c.b16 %v240, %v239
  %v297 = vpack.c.b16 %v242, %v241
  %v298 = vpack.c.b16 %v244, %v243
  %v299 = vpack.c.b16 %v246, %v245
  %v300 = vpack.c.b16 %v248, %v247
  %v301 = vpack.c.b16 %v250, %v249
  %v302 = vpack.c.b16 %v252, %v251
  %v303 = vpack.c.b16 %v254, %v253
  %v304 = vpack.c.b16 %v256, %v255
  %v305 = vpack.c.b16 %v258, %v257
  %v306 = vpack.c.b16 %v260, %v259
  %v307 = vpack.c.b16 %v262, %v261
  %v308 = vpack.c.b16 %v264, %v263
  %v309 = vpack.c.b16 %v266, %v265
  %v310 = vpack.c.b16 %v268, %v267
  %v311 = vpack.c.b16 %v270, %v269
  %v312 = vpack.c.b16 %v272, %v271
  %v313 = vpack.c.b16 %v274, %v273
  %v314 = vpack.c.b16 %v276, %v275
  %v315 = vpack.c.b16 %v278, %v277
  %v316 = vpack.c.b16 %v280, %v279
  %v317 = vpack.c.b16 %v282, %v281
  %v318 = vpack.c.b16 %v284, %v283
  %v319 = vpack.c.b16 %v286, %v285
  %v320 = vpack.c.b16 %v288, %v287
  %353 = vmatprep.subr.bf16.mxu0 0
  %354 = vmatpush1.bf16.msra.mxu0 %v296
  %355 = vmatprep.subr.bf16.mxu0 0
  %356 = vmatpush1.bf16.msra.mxu0 %v295
  %357 = vmatprep.subr.bf16.mxu0 0
  %358 = vmatpush1.bf16.msra.mxu0 %v294
  %359 = vmatprep.subr.bf16.mxu0 0
  %360 = vmatpush1.bf16.msra.mxu0 %v293
  %361 = vmatprep.subr.bf16.mxu0 0
  %362 = vmatpush1.bf16.msra.mxu0 %v292
  %363 = vmatprep.subr.bf16.mxu0 0
  %364 = vmatpush1.bf16.msra.mxu0 %v291
  %365 = vmatprep.subr.bf16.mxu0 0
  %366 = vmatpush1.bf16.msra.mxu0 %v290
  %367 = vmatprep.subr.bf16.mxu0 0
  %368 = vmatpush1.bf16.msra.mxu0 %v289
  %369 = vmatprep.subr.bf16.mxu0 0
  %370 = vmatpush2.bf16.msra.mxu0 %v304
  %371 = vmatprep.subr.bf16.mxu0 0
  %372 = vmatpush2.bf16.msra.mxu0 %v303
  %373 = vmatprep.subr.bf16.mxu0 0
  %374 = vmatpush2.bf16.msra.mxu0 %v302
  %375 = vmatprep.subr.bf16.mxu0 0
  %376 = vmatpush2.bf16.msra.mxu0 %v301
  %377 = vmatprep.subr.bf16.mxu0 0
  %378 = vmatpush2.bf16.msra.mxu0 %v300
  %379 = vmatprep.subr.bf16.mxu0 0
  %380 = vmatpush2.bf16.msra.mxu0 %v299
  %381 = vmatprep.subr.bf16.mxu0 0
  %382 = vmatpush2.bf16.msra.mxu0 %v298
  %383 = vmatprep.subr.bf16.mxu0 0
  %384 = vmatpush2.bf16.msra.mxu0 %v297
  %385 = vmatprep.mubr.bf16.mxu0 %v138
  %386 = vmatmul.mubr.bf16.gmra.mxu0 %v137
  %v387 = vpop.f32.mrf.mxu0
  %v388 = vadd.f32 %v99, %v387
  %v389 = vpop.f32.mrf.mxu0
  %v390 = vpop.f32.mrf.mxu0
  %v391 = vadd.f32 %v99, %v390
  %v392 = vpop.f32.mrf.mxu0
  %393 = vmatprep.mubr.bf16.mxu0 %v142
  %394 = vmatmul.mubr.bf16.gmra.mxu0 %v141
  %v395 = vpop.f32.mrf.mxu0
  %v396 = vadd.f32 %v99, %v395
  %v397 = vpop.f32.mrf.mxu0
  %v398 = vpop.f32.mrf.mxu0
  %v399 = vadd.f32 %v99, %v398
  %v400 = vpop.f32.mrf.mxu0
  %401 = vmatprep.mubr.bf16.mxu0 %v146
  %402 = vmatmul.mubr.bf16.gmra.mxu0 %v145
  %v403 = vpop.f32.mrf.mxu0
  %v404 = vadd.f32 %v99, %v403
  %v405 = vpop.f32.mrf.mxu0
  %v406 = vpop.f32.mrf.mxu0
  %v407 = vadd.f32 %v99, %v406
  %v408 = vpop.f32.mrf.mxu0
  %409 = vdwg.mxu0
  %410 = vmatprep.subr.bf16.mxu0 0
  %411 = vmatpush1.bf16.msra.mxu0 %v312
  %412 = vmatprep.subr.bf16.mxu0 0
  %413 = vmatpush1.bf16.msra.mxu0 %v311
  %414 = vmatprep.subr.bf16.mxu0 0
  %415 = vmatpush1.bf16.msra.mxu0 %v310
  %416 = vmatprep.subr.bf16.mxu0 0
  %417 = vmatpush1.bf16.msra.mxu0 %v309
  %418 = vmatprep.subr.bf16.mxu0 0
  %419 = vmatpush1.bf16.msra.mxu0 %v308
  %420 = vmatprep.subr.bf16.mxu0 0
  %421 = vmatpush1.bf16.msra.mxu0 %v307
  %422 = vmatprep.subr.bf16.mxu0 0
  %423 = vmatpush1.bf16.msra.mxu0 %v306
  %424 = vmatprep.subr.bf16.mxu0 0
  %425 = vmatpush1.bf16.msra.mxu0 %v305
  %426 = vmatprep.subr.bf16.mxu0 0
  %427 = vmatpush2.bf16.msra.mxu0 %v320
  %428 = vmatprep.subr.bf16.mxu0 0
  %429 = vmatpush2.bf16.msra.mxu0 %v319
  %430 = vmatprep.subr.bf16.mxu0 0
  %431 = vmatpush2.bf16.msra.mxu0 %v318
  %432 = vmatprep.subr.bf16.mxu0 0
  %433 = vmatpush2.bf16.msra.mxu0 %v317
  %434 = vmatprep.subr.bf16.mxu0 0
  %435 = vmatpush2.bf16.msra.mxu0 %v316
  %436 = vmatprep.subr.bf16.mxu0 0
  %437 = vmatpush2.bf16.msra.mxu0 %v315
  %438 = vmatprep.subr.bf16.mxu0 0
  %439 = vmatpush2.bf16.msra.mxu0 %v314
  %440 = vmatprep.subr.bf16.mxu0 0
  %441 = vmatpush2.bf16.msra.mxu0 %v313
  %442 = vmatprep.mubr.bf16.mxu0 %v140
  %443 = vmatmul.mubr.bf16.gmra.mxu0 %v139
  %v444 = vpop.f32.mrf.mxu0
  %v445 = vadd.f32 %v388, %v444
  %v446 = vpop.f32.mrf.mxu0
  %v447 = vpop.f32.mrf.mxu0
  %v448 = vadd.f32 %v391, %v447
  %v449 = vpop.f32.mrf.mxu0
  %450 = vmatprep.mubr.bf16.mxu0 %v144
  %451 = vmatmul.mubr.bf16.gmra.mxu0 %v143
  %v452 = vpop.f32.mrf.mxu0
  %v453 = vadd.f32 %v396, %v452
  %v454 = vpop.f32.mrf.mxu0
  %v455 = vpop.f32.mrf.mxu0
  %v456 = vadd.f32 %v399, %v455
  %v457 = vpop.f32.mrf.mxu0
  %458 = vmatprep.mubr.bf16.mxu0 %v148
  %459 = vmatmul.mubr.bf16.gmra.mxu0 %v147
  %v460 = vpop.f32.mrf.mxu0
  %v461 = vadd.f32 %v404, %v460
  %v462 = vpop.f32.mrf.mxu0
  %v463 = vpop.f32.mrf.mxu0
  %v464 = vadd.f32 %v407, %v463
  %v465 = vpop.f32.mrf.mxu0
  %466 = vdwg.mxu0
  %v467 = vld [vmem:[%s3] sm:$0xf]
  %v468 = vld [vmem:[%s3 + $0x4] sm:$0xf]
  %v469 = vld [vmem:[%s3 + $0x8] sm:$0xf]
  %v470 = vld [vmem:[%s3 + $0xc] sm:$0xf]
  %v471 = vld [vmem:[%s3 + $0x10] sm:$0xf]
  %v472 = vld [vmem:[%s3 + $0x14] sm:$0xf]
  %v473 = vunpack.c.l.bf16 %v467
  %v474 = vunpack.c.l.bf16 %v468
  %v475 = vunpack.c.l.bf16 %v469
  %v476 = vunpack.c.l.bf16 %v470
  %v477 = vunpack.c.l.bf16 %v471
  %v478 = vunpack.c.l.bf16 %v472
  %v479 = vadd.f32 %v445, %v473
  %v480 = vadd.f32 %v448, %v474
  %v481 = vadd.f32 %v453, %v475
  %v482 = vadd.f32 %v456, %v476
  %v483 = vadd.f32 %v461, %v477
  %v484 = vadd.f32 %v464, %v478
  %v485 = vpack.c.bf16 %v480, %v479
  %v486 = vpack.c.bf16 %v482, %v481
  %v487 = vpack.c.bf16 %v484, %v483
  %v491 = vunpack.c.l.b16 %v485
  %v492 = vunpack.c.h.b16 %v485
  %v493 = vunpack.c.l.b16 %v486
  %v494 = vunpack.c.h.b16 %v486
  %v495 = vunpack.c.l.b16 %v487
  %v496 = vunpack.c.h.b16 %v487
  %v497 = vpack.c.b16 %v491, %v491
  %v498 = vpack.c.b16 %v492, %v492
  %v499 = vpack.c.b16 %v493, %v493
  %v500 = vpack.c.b16 %v494, %v494
  %v501 = vpack.c.b16 %v495, %v495
  %v502 = vpack.c.b16 %v496, %v496
  %509 = vst [vmem:[%s4] sm:$0xf] %v497
  %510 = vst [vmem:[%s4 + $0x4] sm:$0xf] %v498
  %511 = vst [vmem:[%s4 + $0x8] sm:$0xf] %v499
  %512 = vst [vmem:[%s4 + $0xc] sm:$0xf] %v500
  %513 = vst [vmem:[%s4 + $0x10] sm:$0xf] %v501
  %514 = vst [vmem:[%s4 + $0x14] sm:$0xf] %v502
  // Predicated region
  $region18: #{clip_featurizer_forward.19} parent=0 // pred_check
    _
  $region19: #{clip_featurizer_forward.19} parent=0 // pred_check_branch
    %516 = sbr.rel (0) target = $region21
  $region20: #{clip_featurizer_forward.19} parent=0 // pred_region
    _
  $region21: #{clip_featurizer_forward.19} parent=0 // pred_fallthru
    _
  // Predicated region
  $region22: #{clip_featurizer_forward.19} parent=0 // pred_check
    _
  $region23: #{clip_featurizer_forward.19} parent=0 // pred_check_branch
    %518 = sbr.rel (0) target = $region25
  $region24: #{clip_featurizer_forward.19} parent=0 // pred_region
    _
  $region25: #{clip_featurizer_forward.19} parent=0 // pred_fallthru
    _

</llo_original>
